<compile_context>
chip_gen: v7x
topology: tpu7x:2x2x1
jax: 0.10.0
libtpu: 0.0.40
codegen_flags: <defaults>
</compile_context>

<pallas_src>
import math
import functools

import jax
import jax.numpy as jnp
import numpy as np
from jax.experimental import pallas as pl
from jax.experimental.pallas import tpu as pltpu

# ----------------------------- model config ---------------------------------
D_MODEL = 32
NHEAD = 4
DIM_FF = 64
L_TGT = 8      # number of queries
S_MEM = 16     # number of memory tokens
BATCH = 2
LN_EPS = 1e-5


# ------------------------------ kernel body ----------------------------------
def decoder_layer_kernel(act_ref, w_ref, w1_ref, out_ref, *, nhead, n_tgt, n_mem):
    act = act_ref[...]          # (2*n_tgt + 2*n_mem, D)  per-batch activations
    w = w_ref[...]              # (8*D + FF + 16, D)       sublane-packed weights
    w1s = w1_ref[...]           # (D + 1, FF)              W1^T rows + b1 row

    d = act.shape[-1]
    ff = w1s.shape[-1]
    hd = d // nhead
    scale = 1.0 / math.sqrt(hd)

    # --- activation slab row slices (offsets are multiples of 8 -> free) ---
    tgt = act[0:n_tgt, :]
    qpos = act[n_tgt:2 * n_tgt, :]
    mem = act[2 * n_tgt:2 * n_tgt + n_mem, :]
    pos = act[2 * n_tgt + n_mem:2 * n_tgt + 2 * n_mem, :]

    # --- weight slab row slices ---
    def wblk(i):                     # i-th (D, D) transposed weight block
        return w[i * d:(i + 1) * d, :]

    w2t = w[8 * d:8 * d + ff, :]     # (FF, D)  W2^T
    pb = 8 * d + ff                  # bias/LayerNorm-param base row

    def pv(i):                       # single (1, D) parameter row
        return w[pb + i:pb + i + 1, :]

    w1t = w1s[0:d, :]                # (D, FF)  W1^T
    b1 = w1s[d:d + 1, :]             # (1, FF)

    def layer_norm(x, g, b):
        mu = jnp.mean(x, axis=-1, keepdims=True)
        xc = x - mu
        var = jnp.mean(xc * xc, axis=-1, keepdims=True)
        return xc * jax.lax.rsqrt(var + LN_EPS) * g + b

    def mha(q, k, v, wo, bo):
        # q: (Nq, D), k/v: (Nk, D), wo: (D, D) = out_proj.weight^T, bo: (1, D)
        qs = q * scale
        kT = k.T                     # single transpose per attention (not per head)
        partials = []
        for h in range(nhead):
            sl = slice(h * hd, (h + 1) * hd)
            sc = jnp.dot(qs[:, sl], kT[sl, :], preferred_element_type=jnp.float32)
            sc = sc - jnp.max(sc, axis=-1, keepdims=True)
            p = jnp.exp(sc)
            p = p * pl.reciprocal(jnp.sum(p, axis=-1, keepdims=True), approx=False)
            hh = jnp.dot(p, v[:, sl], preferred_element_type=jnp.float32)
            # independent per-head out-proj partials (no serial accumulator)
            partials.append(jnp.dot(hh, wo[sl, :], preferred_element_type=jnp.float32))
        # tree-sum of the independent partials
        while len(partials) > 1:
            partials = [partials[i] + partials[i + 1] if i + 1 < len(partials)
                        else partials[i]
                        for i in range(0, len(partials), 2)]
        return partials[0] + bo

    # ---- self-attention: q = k = tgt + query_pos, value = tgt ----
    qk_in = tgt + qpos
    q = jnp.dot(qk_in, wblk(0), preferred_element_type=jnp.float32) + pv(0)
    k = jnp.dot(qk_in, wblk(1), preferred_element_type=jnp.float32) + pv(1)
    v = jnp.dot(tgt, wblk(2), preferred_element_type=jnp.float32) + pv(2)
    sa = mha(q, k, v, wblk(3), pv(3))
    x = layer_norm(tgt + sa, pv(9), pv(10))

    # ---- cross-attention: q = x + query_pos, k = memory + pos, value = memory ----
    qc = jnp.dot(x + qpos, wblk(4), preferred_element_type=jnp.float32) + pv(4)
    kc = jnp.dot(mem + pos, wblk(5), preferred_element_type=jnp.float32) + pv(5)
    vc = jnp.dot(mem, wblk(6), preferred_element_type=jnp.float32) + pv(6)
    ca = mha(qc, kc, vc, wblk(7), pv(7))
    x = layer_norm(x + ca, pv(11), pv(12))

    # ---- FFN: linear2(relu(linear1(x))) ----
    h1 = jnp.maximum(jnp.dot(x, w1t, preferred_element_type=jnp.float32) + b1, 0.0)
    f = jnp.dot(h1, w2t, preferred_element_type=jnp.float32) + pv(8)
    x = layer_norm(x + f, pv(13), pv(14))

    out_ref[...] = x
    # Output block stays (L, 32)-wide (lane-sparse); one masked store per grid step
    # is cheaper than an in-kernel relayout at these shapes.


# ------------------------------ wrapper ---------------------------------------
def _pack_weight_slab(p):
    d = D_MODEL
    rows = [
        p["sa_in_w"][0:d].T,            # rows [0,   32)  SA Wq^T
        p["sa_in_w"][d:2 * d].T,        # rows [32,  64)  SA Wk^T
        p["sa_in_w"][2 * d:3 * d].T,    # rows [64,  96)  SA Wv^T
        p["sa_out_w"].T,                # rows [96, 128)  SA out_proj^T
        p["ca_in_w"][0:d].T,            # rows [128,160)  CA Wq^T
        p["ca_in_w"][d:2 * d].T,        # rows [160,192)  CA Wk^T
        p["ca_in_w"][2 * d:3 * d].T,    # rows [192,224)  CA Wv^T
        p["ca_out_w"].T,                # rows [224,256)  CA out_proj^T
        p["w2"].T,                      # rows [256,320)  W2^T
        p["sa_in_b"][:, 0:d],           # row 320  SA q bias
        p["sa_in_b"][:, d:2 * d],       # row 321  SA k bias
        p["sa_in_b"][:, 2 * d:3 * d],   # row 322  SA v bias
        p["sa_out_b"],                  # row 323  SA out bias
        p["ca_in_b"][:, 0:d],           # row 324  CA q bias
        p["ca_in_b"][:, d:2 * d],       # row 325  CA k bias
        p["ca_in_b"][:, 2 * d:3 * d],   # row 326  CA v bias
        p["ca_out_b"],                  # row 327  CA out bias
        p["b2"],                        # row 328  FFN b2
        p["g1"], p["be1"],              # rows 329,330  norm1
        p["g2"], p["be2"],              # rows 331,332  norm2
        p["g3"], p["be3"],              # rows 333,334  norm3
        jnp.zeros((1, d), jnp.float32),  # row 335  pad
    ]
    w_slab = jnp.concatenate(rows, axis=0)                     # (336, 32)
    w1_slab = jnp.concatenate([p["w1"].T, p["b1"]], axis=0)    # (33, 64)
    return w_slab, w1_slab


def decoder_layer_pallas(tgt, memory, query_pos, pos, params):
    """tgt/query_pos: (L, B, D); memory/pos: (S, B, D). Returns (L, B, D)."""
    L, B, D = tgt.shape
    S = memory.shape[0]
    n_act = 2 * L + 2 * S

    # per-batch activation slab: (B, 2L+2S, D) = [tgt; query_pos; memory; pos]
    act = jnp.concatenate(
        [
            jnp.transpose(tgt, (1, 0, 2)),
            jnp.transpose(query_pos, (1, 0, 2)),
            jnp.transpose(memory, (1, 0, 2)),
            jnp.transpose(pos, (1, 0, 2)),
        ],
        axis=1,
    )

    w_slab, w1_slab = _pack_weight_slab(params)

    # rough per-call cost hint (all batches)
    cost = pl.CostEstimate(flops=520_000, transcendentals=1_700, bytes_accessed=70_000)

    out = pl.pallas_call(
        functools.partial(decoder_layer_kernel, nhead=NHEAD, n_tgt=L, n_mem=S),
        grid=(B,),
        in_specs=[
            pl.BlockSpec((None, n_act, D), lambda b: (b, 0, 0)),   # per-batch slab
            pl.BlockSpec(w_slab.shape, lambda b: (0, 0)),          # resident weights
            pl.BlockSpec(w1_slab.shape, lambda b: (0, 0)),         # resident W1/b1
        ],
        out_specs=pl.BlockSpec((None, L, D), lambda b: (b, 0, 0)),
        out_shape=jax.ShapeDtypeStruct((B, L, D), jnp.float32),
        compiler_params=pltpu.CompilerParams(dimension_semantics=("parallel",)),
        cost_estimate=cost,
    )(act, w_slab, w1_slab)

    return jnp.transpose(out, (1, 0, 2))   # (L, B, D)


# --------------------------- reference (plain JAX) ----------------------------
def _ref_mha(q_in, k_in, v_in, in_w, in_b, out_w, out_b, nhead):
    d = q_in.shape[-1]
    hd = d // nhead
    q = q_in @ in_w[0:d].T + in_b[0, 0:d]
    k = k_in @ in_w[d:2 * d].T + in_b[0, d:2 * d]
    v = v_in @ in_w[2 * d:3 * d].T + in_b[0, 2 * d:3 * d]
    Lq, B, _ = q.shape
    Lk = k.shape[0]
    q = q.reshape(Lq, B, nhead, hd).transpose(1, 2, 0, 3) / math.sqrt(hd)
    k = k.reshape(Lk, B, nhead, hd).transpose(1, 2, 0, 3)
    v = v.reshape(Lk, B, nhead, hd).transpose(1, 2, 0, 3)
    s = jnp.einsum("bhqd,bhkd->bhqk", q, k)
    p = jax.nn.softmax(s, axis=-1)
    o = jnp.einsum("bhqk,bhkd->bhqd", p, v)
    o = o.transpose(2, 0, 1, 3).reshape(Lq, B, d)
    return o @ out_w.T + out_b[0]


def _ref_ln(x, g, b):
    mu = jnp.mean(x, -1, keepdims=True)
    var = jnp.mean((x - mu) ** 2, -1, keepdims=True)
    return (x - mu) / jnp.sqrt(var + LN_EPS) * g[0] + b[0]


def decoder_layer_ref(tgt, memory, query_pos, pos, p):
    qk = tgt + query_pos
    sa = _ref_mha(qk, qk, tgt, p["sa_in_w"], p["sa_in_b"], p["sa_out_w"], p["sa_out_b"], NHEAD)
    x = _ref_ln(tgt + sa, p["g1"], p["be1"])
    ca = _ref_mha(x + query_pos, memory + pos, memory,
                  p["ca_in_w"], p["ca_in_b"], p["ca_out_w"], p["ca_out_b"], NHEAD)
    x = _ref_ln(x + ca, p["g2"], p["be2"])
    h = jnp.maximum(x @ p["w1"].T + p["b1"][0], 0.0)
    ff = h @ p["w2"].T + p["b2"][0]
    return _ref_ln(x + ff, p["g3"], p["be3"])


# --------------------------------- main ---------------------------------------
def make_params(key):
    keys = jax.random.split(key, 12)
    init = lambda k, shape: (0.02 * jax.random.normal(k, shape)).astype(jnp.float32)
    return {
        "sa_in_w": init(keys[0], (3 * D_MODEL, D_MODEL)),
        "sa_in_b": init(keys[1], (1, 3 * D_MODEL)),
        "sa_out_w": init(keys[2], (D_MODEL, D_MODEL)),
        "sa_out_b": init(keys[3], (1, D_MODEL)),
        "ca_in_w": init(keys[4], (3 * D_MODEL, D_MODEL)),
        "ca_in_b": init(keys[5], (1, 3 * D_MODEL)),
        "ca_out_w": init(keys[6], (D_MODEL, D_MODEL)),
        "ca_out_b": init(keys[7], (1, D_MODEL)),
        "w1": init(keys[8], (DIM_FF, D_MODEL)),
        "b1": init(keys[9], (1, DIM_FF)),
        "w2": init(keys[10], (D_MODEL, DIM_FF)),
        "b2": init(keys[11], (1, D_MODEL)),
        "g1": jnp.ones((1, D_MODEL), jnp.float32),
        "be1": jnp.zeros((1, D_MODEL), jnp.float32),
        "g2": jnp.ones((1, D_MODEL), jnp.float32),
        "be2": jnp.zeros((1, D_MODEL), jnp.float32),
        "g3": jnp.ones((1, D_MODEL), jnp.float32),
        "be3": jnp.zeros((1, D_MODEL), jnp.float32),
    }


if __name__ == "__main__":
    key = jax.random.PRNGKey(0)
    k_tgt, k_mem, k_qp, k_pos, k_par = jax.random.split(key, 5)

    tgt = jax.random.normal(k_tgt, (L_TGT, BATCH, D_MODEL), jnp.float32)
    memory = jax.random.normal(k_mem, (S_MEM, BATCH, D_MODEL), jnp.float32)
    query_pos = jax.random.normal(k_qp, (L_TGT, BATCH, D_MODEL), jnp.float32)
    pos = jax.random.normal(k_pos, (S_MEM, BATCH, D_MODEL), jnp.float32)
    params = make_params(k_par)

    fwd = jax.jit(decoder_layer_pallas)
    out = fwd(tgt, memory, query_pos, pos, params)
    out = jax.block_until_ready(out)

    ref = decoder_layer_ref(tgt, memory, query_pos, pos, params)
    assert out.shape == (L_TGT, BATCH, D_MODEL)
    np.testing.assert_allclose(np.asarray(out), np.asarray(ref), rtol=1e-4, atol=1e-4)

    print("KERNEL_OK")
</pallas_src>

<mosaic_0001>
module attributes {stable_mosaic.version = 11 : i64} {
  func.func @decoder_layer_kernel(%arg0: i32, %arg1: memref<1x48x32xf32, #tpu.memory_space<vmem>>, %arg2: memref<336x32xf32, #tpu.memory_space<vmem>>, %arg3: memref<33x64xf32, #tpu.memory_space<vmem>>, %arg4: memref<1x8x32xf32, #tpu.memory_space<vmem>>) attributes {dimension_semantics = [#tpu.dimension_semantics<parallel>], iteration_bounds = array<i64: 2>, scalar_prefetch = 0 : i64, scratch_operands = 0 : i64, tpu.core_type = #tpu.core_type<tc>, window_params = [{transform_indices = @transform_0, window_bounds = array<i64: 1, 48, 32>}, {pipeline_mode = #tpu.pipeline_mode<synchronous>, transform_indices = @transform_1, window_bounds = array<i64: 336, 32>}, {pipeline_mode = #tpu.pipeline_mode<synchronous>, transform_indices = @transform_2, window_bounds = array<i64: 33, 64>}, {transform_indices = @transform_3, window_bounds = array<i64: 1, 8, 32>}]} {
    %c0 = arith.constant 0 : index
    %c0_0 = arith.constant 0 : index
    %c0_1 = arith.constant 0 : index
    %0 = vector.load %arg1[%c0, %c0_0, %c0_1] : memref<1x48x32xf32, #tpu.memory_space<vmem>>, vector<1x48x32xf32>
    %1 = vector.shape_cast %0 : vector<1x48x32xf32> to vector<48x32xf32>
    %c0_2 = arith.constant 0 : index
    %c0_3 = arith.constant 0 : index
    %2 = vector.load %arg2[%c0_2, %c0_3] : memref<336x32xf32, #tpu.memory_space<vmem>>, vector<336x32xf32>
    %c0_4 = arith.constant 0 : index
    %c0_5 = arith.constant 0 : index
    %3 = vector.load %arg3[%c0_4, %c0_5] : memref<33x64xf32, #tpu.memory_space<vmem>>, vector<33x64xf32>
    %4 = vector.extract_strided_slice %1 {offsets = [0, 0], sizes = [8, 32], strides = [1, 1]} : vector<48x32xf32> to vector<8x32xf32>
    %5 = vector.extract_strided_slice %1 {offsets = [8, 0], sizes = [8, 32], strides = [1, 1]} : vector<48x32xf32> to vector<8x32xf32>
    %6 = vector.extract_strided_slice %1 {offsets = [16, 0], sizes = [16, 32], strides = [1, 1]} : vector<48x32xf32> to vector<16x32xf32>
    %7 = vector.extract_strided_slice %1 {offsets = [32, 0], sizes = [16, 32], strides = [1, 1]} : vector<48x32xf32> to vector<16x32xf32>
    %8 = vector.extract_strided_slice %2 {offsets = [256, 0], sizes = [64, 32], strides = [1, 1]} : vector<336x32xf32> to vector<64x32xf32>
    %9 = vector.extract_strided_slice %3 {offsets = [0, 0], sizes = [32, 64], strides = [1, 1]} : vector<33x64xf32> to vector<32x64xf32>
    %10 = vector.extract_strided_slice %3 {offsets = [32, 0], sizes = [1, 64], strides = [1, 1]} : vector<33x64xf32> to vector<1x64xf32>
    %11 = arith.addf %4, %5 : vector<8x32xf32>
    %12 = vector.extract_strided_slice %2 {offsets = [0, 0], sizes = [32, 32], strides = [1, 1]} : vector<336x32xf32> to vector<32x32xf32>
    %cst = arith.constant dense<0.000000e+00> : vector<8x32xf32>
    %13 = tpu.matmul %11, %12, %cst {dimension_numbers = #tpu.dot_dimension_numbers<[1], [0], [0], [1], [0, 0, 1, 1], [], []>} : vector<8x32xf32>, vector<32x32xf32>, vector<8x32xf32> -> vector<8x32xf32>
    %14 = vector.extract_strided_slice %2 {offsets = [320, 0], sizes = [1, 32], strides = [1, 1]} : vector<336x32xf32> to vector<1x32xf32>
    %15 = vector.broadcast %14 : vector<1x32xf32> to vector<8x32xf32>
    %16 = arith.addf %13, %15 : vector<8x32xf32>
    %17 = vector.extract_strided_slice %2 {offsets = [32, 0], sizes = [32, 32], strides = [1, 1]} : vector<336x32xf32> to vector<32x32xf32>
    %cst_6 = arith.constant dense<0.000000e+00> : vector<8x32xf32>
    %18 = tpu.matmul %11, %17, %cst_6 {dimension_numbers = #tpu.dot_dimension_numbers<[1], [0], [0], [1], [0, 0, 1, 1], [], []>} : vector<8x32xf32>, vector<32x32xf32>, vector<8x32xf32> -> vector<8x32xf32>
    %19 = vector.extract_strided_slice %2 {offsets = [321, 0], sizes = [1, 32], strides = [1, 1]} : vector<336x32xf32> to vector<1x32xf32>
    %20 = vector.broadcast %19 : vector<1x32xf32> to vector<8x32xf32>
    %21 = arith.addf %18, %20 : vector<8x32xf32>
    %22 = vector.extract_strided_slice %2 {offsets = [64, 0], sizes = [32, 32], strides = [1, 1]} : vector<336x32xf32> to vector<32x32xf32>
    %cst_7 = arith.constant dense<0.000000e+00> : vector<8x32xf32>
    %23 = tpu.matmul %4, %22, %cst_7 {dimension_numbers = #tpu.dot_dimension_numbers<[1], [0], [0], [1], [0, 0, 1, 1], [], []>} : vector<8x32xf32>, vector<32x32xf32>, vector<8x32xf32> -> vector<8x32xf32>
    %24 = vector.extract_strided_slice %2 {offsets = [322, 0], sizes = [1, 32], strides = [1, 1]} : vector<336x32xf32> to vector<1x32xf32>
    %25 = vector.broadcast %24 : vector<1x32xf32> to vector<8x32xf32>
    %26 = arith.addf %23, %25 : vector<8x32xf32>
    %27 = vector.extract_strided_slice %2 {offsets = [96, 0], sizes = [32, 32], strides = [1, 1]} : vector<336x32xf32> to vector<32x32xf32>
    %28 = vector.extract_strided_slice %2 {offsets = [323, 0], sizes = [1, 32], strides = [1, 1]} : vector<336x32xf32> to vector<1x32xf32>
    %cst_8 = arith.constant 0.353553385 : f32
    %29 = vector.broadcast %cst_8 : f32 to vector<8x32xf32>
    %30 = arith.mulf %16, %29 : vector<8x32xf32>
    %31 = tpu.transpose %21, [1, 0] : vector<8x32xf32> -> vector<32x8xf32>
    %32 = vector.extract_strided_slice %30 {offsets = [0, 0], sizes = [8, 8], strides = [1, 1]} : vector<8x32xf32> to vector<8x8xf32>
    %33 = vector.extract_strided_slice %31 {offsets = [0, 0], sizes = [8, 8], strides = [1, 1]} : vector<32x8xf32> to vector<8x8xf32>
    %cst_9 = arith.constant dense<0.000000e+00> : vector<8x8xf32>
    %34 = tpu.matmul %32, %33, %cst_9 {dimension_numbers = #tpu.dot_dimension_numbers<[1], [0], [0], [1], [0, 0, 1, 1], [], []>} : vector<8x8xf32>, vector<8x8xf32>, vector<8x8xf32> -> vector<8x8xf32>
    %cst_10 = arith.constant dense<0xFF800000> : vector<8xf32>
    %35 = vector.multi_reduction <maximumf>, %34, %cst_10 [1] : vector<8x8xf32> to vector<8xf32>
    %36 = vector.shape_cast %35 : vector<8xf32> to vector<8x1xf32>
    %37 = vector.broadcast %36 : vector<8x1xf32> to vector<8x8xf32>
    %38 = arith.subf %34, %37 : vector<8x8xf32>
    %39 = math.exp %38 : vector<8x8xf32>
    %cst_11 = arith.constant dense<0.000000e+00> : vector<8xf32>
    %40 = vector.multi_reduction <add>, %39, %cst_11 [1] : vector<8x8xf32> to vector<8xf32>
    %41 = vector.shape_cast %40 : vector<8xf32> to vector<8x1xf32>
    %42 = tpu.reciprocal %41 : vector<8x1xf32> -> vector<8x1xf32>
    %43 = vector.broadcast %42 : vector<8x1xf32> to vector<8x8xf32>
    %44 = arith.mulf %39, %43 : vector<8x8xf32>
    %45 = vector.extract_strided_slice %26 {offsets = [0, 0], sizes = [8, 8], strides = [1, 1]} : vector<8x32xf32> to vector<8x8xf32>
    %cst_12 = arith.constant dense<0.000000e+00> : vector<8x8xf32>
    %46 = tpu.matmul %44, %45, %cst_12 {dimension_numbers = #tpu.dot_dimension_numbers<[1], [0], [0], [1], [0, 0, 1, 1], [], []>} : vector<8x8xf32>, vector<8x8xf32>, vector<8x8xf32> -> vector<8x8xf32>
    %47 = vector.extract_strided_slice %27 {offsets = [0, 0], sizes = [8, 32], strides = [1, 1]} : vector<32x32xf32> to vector<8x32xf32>
    %cst_13 = arith.constant dense<0.000000e+00> : vector<8x32xf32>
    %48 = tpu.matmul %46, %47, %cst_13 {dimension_numbers = #tpu.dot_dimension_numbers<[1], [0], [0], [1], [0, 0, 1, 1], [], []>} : vector<8x8xf32>, vector<8x32xf32>, vector<8x32xf32> -> vector<8x32xf32>
    %49 = vector.extract_strided_slice %30 {offsets = [0, 8], sizes = [8, 8], strides = [1, 1]} : vector<8x32xf32> to vector<8x8xf32>
    %50 = vector.extract_strided_slice %31 {offsets = [8, 0], sizes = [8, 8], strides = [1, 1]} : vector<32x8xf32> to vector<8x8xf32>
    %cst_14 = arith.constant dense<0.000000e+00> : vector<8x8xf32>
    %51 = tpu.matmul %49, %50, %cst_14 {dimension_numbers = #tpu.dot_dimension_numbers<[1], [0], [0], [1], [0, 0, 1, 1], [], []>} : vector<8x8xf32>, vector<8x8xf32>, vector<8x8xf32> -> vector<8x8xf32>
    %cst_15 = arith.constant dense<0xFF800000> : vector<8xf32>
    %52 = vector.multi_reduction <maximumf>, %51, %cst_15 [1] : vector<8x8xf32> to vector<8xf32>
    %53 = vector.shape_cast %52 : vector<8xf32> to vector<8x1xf32>
    %54 = vector.broadcast %53 : vector<8x1xf32> to vector<8x8xf32>
    %55 = arith.subf %51, %54 : vector<8x8xf32>
    %56 = math.exp %55 : vector<8x8xf32>
    %cst_16 = arith.constant dense<0.000000e+00> : vector<8xf32>
    %57 = vector.multi_reduction <add>, %56, %cst_16 [1] : vector<8x8xf32> to vector<8xf32>
    %58 = vector.shape_cast %57 : vector<8xf32> to vector<8x1xf32>
    %59 = tpu.reciprocal %58 : vector<8x1xf32> -> vector<8x1xf32>
    %60 = vector.broadcast %59 : vector<8x1xf32> to vector<8x8xf32>
    %61 = arith.mulf %56, %60 : vector<8x8xf32>
    %62 = vector.extract_strided_slice %26 {offsets = [0, 8], sizes = [8, 8], strides = [1, 1]} : vector<8x32xf32> to vector<8x8xf32>
    %cst_17 = arith.constant dense<0.000000e+00> : vector<8x8xf32>
    %63 = tpu.matmul %61, %62, %cst_17 {dimension_numbers = #tpu.dot_dimension_numbers<[1], [0], [0], [1], [0, 0, 1, 1], [], []>} : vector<8x8xf32>, vector<8x8xf32>, vector<8x8xf32> -> vector<8x8xf32>
    %64 = vector.extract_strided_slice %27 {offsets = [8, 0], sizes = [8, 32], strides = [1, 1]} : vector<32x32xf32> to vector<8x32xf32>
    %cst_18 = arith.constant dense<0.000000e+00> : vector<8x32xf32>
    %65 = tpu.matmul %63, %64, %cst_18 {dimension_numbers = #tpu.dot_dimension_numbers<[1], [0], [0], [1], [0, 0, 1, 1], [], []>} : vector<8x8xf32>, vector<8x32xf32>, vector<8x32xf32> -> vector<8x32xf32>
    %66 = vector.extract_strided_slice %30 {offsets = [0, 16], sizes = [8, 8], strides = [1, 1]} : vector<8x32xf32> to vector<8x8xf32>
    %67 = vector.extract_strided_slice %31 {offsets = [16, 0], sizes = [8, 8], strides = [1, 1]} : vector<32x8xf32> to vector<8x8xf32>
    %cst_19 = arith.constant dense<0.000000e+00> : vector<8x8xf32>
    %68 = tpu.matmul %66, %67, %cst_19 {dimension_numbers = #tpu.dot_dimension_numbers<[1], [0], [0], [1], [0, 0, 1, 1], [], []>} : vector<8x8xf32>, vector<8x8xf32>, vector<8x8xf32> -> vector<8x8xf32>
    %cst_20 = arith.constant dense<0xFF800000> : vector<8xf32>
    %69 = vector.multi_reduction <maximumf>, %68, %cst_20 [1] : vector<8x8xf32> to vector<8xf32>
    %70 = vector.shape_cast %69 : vector<8xf32> to vector<8x1xf32>
    %71 = vector.broadcast %70 : vector<8x1xf32> to vector<8x8xf32>
    %72 = arith.subf %68, %71 : vector<8x8xf32>
    %73 = math.exp %72 : vector<8x8xf32>
    %cst_21 = arith.constant dense<0.000000e+00> : vector<8xf32>
    %74 = vector.multi_reduction <add>, %73, %cst_21 [1] : vector<8x8xf32> to vector<8xf32>
    %75 = vector.shape_cast %74 : vector<8xf32> to vector<8x1xf32>
    %76 = tpu.reciprocal %75 : vector<8x1xf32> -> vector<8x1xf32>
    %77 = vector.broadcast %76 : vector<8x1xf32> to vector<8x8xf32>
    %78 = arith.mulf %73, %77 : vector<8x8xf32>
    %79 = vector.extract_strided_slice %26 {offsets = [0, 16], sizes = [8, 8], strides = [1, 1]} : vector<8x32xf32> to vector<8x8xf32>
    %cst_22 = arith.constant dense<0.000000e+00> : vector<8x8xf32>
    %80 = tpu.matmul %78, %79, %cst_22 {dimension_numbers = #tpu.dot_dimension_numbers<[1], [0], [0], [1], [0, 0, 1, 1], [], []>} : vector<8x8xf32>, vector<8x8xf32>, vector<8x8xf32> -> vector<8x8xf32>
    %81 = vector.extract_strided_slice %27 {offsets = [16, 0], sizes = [8, 32], strides = [1, 1]} : vector<32x32xf32> to vector<8x32xf32>
    %cst_23 = arith.constant dense<0.000000e+00> : vector<8x32xf32>
    %82 = tpu.matmul %80, %81, %cst_23 {dimension_numbers = #tpu.dot_dimension_numbers<[1], [0], [0], [1], [0, 0, 1, 1], [], []>} : vector<8x8xf32>, vector<8x32xf32>, vector<8x32xf32> -> vector<8x32xf32>
    %83 = vector.extract_strided_slice %30 {offsets = [0, 24], sizes = [8, 8], strides = [1, 1]} : vector<8x32xf32> to vector<8x8xf32>
    %84 = vector.extract_strided_slice %31 {offsets = [24, 0], sizes = [8, 8], strides = [1, 1]} : vector<32x8xf32> to vector<8x8xf32>
    %cst_24 = arith.constant dense<0.000000e+00> : vector<8x8xf32>
    %85 = tpu.matmul %83, %84, %cst_24 {dimension_numbers = #tpu.dot_dimension_numbers<[1], [0], [0], [1], [0, 0, 1, 1], [], []>} : vector<8x8xf32>, vector<8x8xf32>, vector<8x8xf32> -> vector<8x8xf32>
    %cst_25 = arith.constant dense<0xFF800000> : vector<8xf32>
    %86 = vector.multi_reduction <maximumf>, %85, %cst_25 [1] : vector<8x8xf32> to vector<8xf32>
    %87 = vector.shape_cast %86 : vector<8xf32> to vector<8x1xf32>
    %88 = vector.broadcast %87 : vector<8x1xf32> to vector<8x8xf32>
    %89 = arith.subf %85, %88 : vector<8x8xf32>
    %90 = math.exp %89 : vector<8x8xf32>
    %cst_26 = arith.constant dense<0.000000e+00> : vector<8xf32>
    %91 = vector.multi_reduction <add>, %90, %cst_26 [1] : vector<8x8xf32> to vector<8xf32>
    %92 = vector.shape_cast %91 : vector<8xf32> to vector<8x1xf32>
    %93 = tpu.reciprocal %92 : vector<8x1xf32> -> vector<8x1xf32>
    %94 = vector.broadcast %93 : vector<8x1xf32> to vector<8x8xf32>
    %95 = arith.mulf %90, %94 : vector<8x8xf32>
    %96 = vector.extract_strided_slice %26 {offsets = [0, 24], sizes = [8, 8], strides = [1, 1]} : vector<8x32xf32> to vector<8x8xf32>
    %cst_27 = arith.constant dense<0.000000e+00> : vector<8x8xf32>
    %97 = tpu.matmul %95, %96, %cst_27 {dimension_numbers = #tpu.dot_dimension_numbers<[1], [0], [0], [1], [0, 0, 1, 1], [], []>} : vector<8x8xf32>, vector<8x8xf32>, vector<8x8xf32> -> vector<8x8xf32>
    %98 = vector.extract_strided_slice %27 {offsets = [24, 0], sizes = [8, 32], strides = [1, 1]} : vector<32x32xf32> to vector<8x32xf32>
    %cst_28 = arith.constant dense<0.000000e+00> : vector<8x32xf32>
    %99 = tpu.matmul %97, %98, %cst_28 {dimension_numbers = #tpu.dot_dimension_numbers<[1], [0], [0], [1], [0, 0, 1, 1], [], []>} : vector<8x8xf32>, vector<8x32xf32>, vector<8x32xf32> -> vector<8x32xf32>
    %100 = arith.addf %48, %65 : vector<8x32xf32>
    %101 = arith.addf %82, %99 : vector<8x32xf32>
    %102 = arith.addf %100, %101 : vector<8x32xf32>
    %103 = vector.broadcast %28 : vector<1x32xf32> to vector<8x32xf32>
    %104 = arith.addf %102, %103 : vector<8x32xf32>
    %105 = arith.addf %4, %104 : vector<8x32xf32>
    %106 = vector.extract_strided_slice %2 {offsets = [329, 0], sizes = [1, 32], strides = [1, 1]} : vector<336x32xf32> to vector<1x32xf32>
    %107 = vector.extract_strided_slice %2 {offsets = [330, 0], sizes = [1, 32], strides = [1, 1]} : vector<336x32xf32> to vector<1x32xf32>
    %cst_29 = arith.constant dense<0.000000e+00> : vector<8xf32>
    %108 = vector.multi_reduction <add>, %105, %cst_29 [1] : vector<8x32xf32> to vector<8xf32>
    %109 = vector.shape_cast %108 : vector<8xf32> to vector<8x1xf32>
    %cst_30 = arith.constant 3.200000e+01 : f32
    %110 = vector.broadcast %cst_30 : f32 to vector<8x1xf32>
    %111 = arith.divf %109, %110 : vector<8x1xf32>
    %112 = vector.broadcast %111 : vector<8x1xf32> to vector<8x32xf32>
    %113 = arith.subf %105, %112 : vector<8x32xf32>
    %114 = arith.mulf %113, %113 : vector<8x32xf32>
    %cst_31 = arith.constant dense<0.000000e+00> : vector<8xf32>
    %115 = vector.multi_reduction <add>, %114, %cst_31 [1] : vector<8x32xf32> to vector<8xf32>
    %116 = vector.shape_cast %115 : vector<8xf32> to vector<8x1xf32>
    %cst_32 = arith.constant 3.200000e+01 : f32
    %117 = vector.broadcast %cst_32 : f32 to vector<8x1xf32>
    %118 = arith.divf %116, %117 : vector<8x1xf32>
    %cst_33 = arith.constant 9.99999974E-6 : f32
    %119 = vector.broadcast %cst_33 : f32 to vector<8x1xf32>
    %120 = arith.addf %118, %119 : vector<8x1xf32>
    %121 = math.rsqrt %120 : vector<8x1xf32>
    %122 = vector.broadcast %121 : vector<8x1xf32> to vector<8x32xf32>
    %123 = arith.mulf %113, %122 : vector<8x32xf32>
    %124 = vector.broadcast %106 : vector<1x32xf32> to vector<8x32xf32>
    %125 = arith.mulf %123, %124 : vector<8x32xf32>
    %126 = vector.broadcast %107 : vector<1x32xf32> to vector<8x32xf32>
    %127 = arith.addf %125, %126 : vector<8x32xf32>
    %128 = arith.addf %127, %5 : vector<8x32xf32>
    %129 = vector.extract_strided_slice %2 {offsets = [128, 0], sizes = [32, 32], strides = [1, 1]} : vector<336x32xf32> to vector<32x32xf32>
    %cst_34 = arith.constant dense<0.000000e+00> : vector<8x32xf32>
    %130 = tpu.matmul %128, %129, %cst_34 {dimension_numbers = #tpu.dot_dimension_numbers<[1], [0], [0], [1], [0, 0, 1, 1], [], []>} : vector<8x32xf32>, vector<32x32xf32>, vector<8x32xf32> -> vector<8x32xf32>
    %131 = vector.extract_strided_slice %2 {offsets = [324, 0], sizes = [1, 32], strides = [1, 1]} : vector<336x32xf32> to vector<1x32xf32>
    %132 = vector.broadcast %131 : vector<1x32xf32> to vector<8x32xf32>
    %133 = arith.addf %130, %132 : vector<8x32xf32>
    %134 = arith.addf %6, %7 : vector<16x32xf32>
    %135 = vector.extract_strided_slice %2 {offsets = [160, 0], sizes = [32, 32], strides = [1, 1]} : vector<336x32xf32> to vector<32x32xf32>
    %cst_35 = arith.constant dense<0.000000e+00> : vector<16x32xf32>
    %136 = tpu.matmul %134, %135, %cst_35 {dimension_numbers = #tpu.dot_dimension_numbers<[1], [0], [0], [1], [0, 0, 1, 1], [], []>} : vector<16x32xf32>, vector<32x32xf32>, vector<16x32xf32> -> vector<16x32xf32>
    %137 = vector.extract_strided_slice %2 {offsets = [325, 0], sizes = [1, 32], strides = [1, 1]} : vector<336x32xf32> to vector<1x32xf32>
    %138 = vector.broadcast %137 : vector<1x32xf32> to vector<16x32xf32>
    %139 = arith.addf %136, %138 : vector<16x32xf32>
    %140 = vector.extract_strided_slice %2 {offsets = [192, 0], sizes = [32, 32], strides = [1, 1]} : vector<336x32xf32> to vector<32x32xf32>
    %cst_36 = arith.constant dense<0.000000e+00> : vector<16x32xf32>
    %141 = tpu.matmul %6, %140, %cst_36 {dimension_numbers = #tpu.dot_dimension_numbers<[1], [0], [0], [1], [0, 0, 1, 1], [], []>} : vector<16x32xf32>, vector<32x32xf32>, vector<16x32xf32> -> vector<16x32xf32>
    %142 = vector.extract_strided_slice %2 {offsets = [326, 0], sizes = [1, 32], strides = [1, 1]} : vector<336x32xf32> to vector<1x32xf32>
    %143 = vector.broadcast %142 : vector<1x32xf32> to vector<16x32xf32>
    %144 = arith.addf %141, %143 : vector<16x32xf32>
    %145 = vector.extract_strided_slice %2 {offsets = [224, 0], sizes = [32, 32], strides = [1, 1]} : vector<336x32xf32> to vector<32x32xf32>
    %146 = vector.extract_strided_slice %2 {offsets = [327, 0], sizes = [1, 32], strides = [1, 1]} : vector<336x32xf32> to vector<1x32xf32>
    %cst_37 = arith.constant 0.353553385 : f32
    %147 = vector.broadcast %cst_37 : f32 to vector<8x32xf32>
    %148 = arith.mulf %133, %147 : vector<8x32xf32>
    %149 = tpu.transpose %139, [1, 0] : vector<16x32xf32> -> vector<32x16xf32>
    %150 = vector.extract_strided_slice %148 {offsets = [0, 0], sizes = [8, 8], strides = [1, 1]} : vector<8x32xf32> to vector<8x8xf32>
    %151 = vector.extract_strided_slice %149 {offsets = [0, 0], sizes = [8, 16], strides = [1, 1]} : vector<32x16xf32> to vector<8x16xf32>
    %cst_38 = arith.constant dense<0.000000e+00> : vector<8x16xf32>
    %152 = tpu.matmul %150, %151, %cst_38 {dimension_numbers = #tpu.dot_dimension_numbers<[1], [0], [0], [1], [0, 0, 1, 1], [], []>} : vector<8x8xf32>, vector<8x16xf32>, vector<8x16xf32> -> vector<8x16xf32>
    %cst_39 = arith.constant dense<0xFF800000> : vector<8xf32>
    %153 = vector.multi_reduction <maximumf>, %152, %cst_39 [1] : vector<8x16xf32> to vector<8xf32>
    %154 = vector.shape_cast %153 : vector<8xf32> to vector<8x1xf32>
    %155 = vector.broadcast %154 : vector<8x1xf32> to vector<8x16xf32>
    %156 = arith.subf %152, %155 : vector<8x16xf32>
    %157 = math.exp %156 : vector<8x16xf32>
    %cst_40 = arith.constant dense<0.000000e+00> : vector<8xf32>
    %158 = vector.multi_reduction <add>, %157, %cst_40 [1] : vector<8x16xf32> to vector<8xf32>
    %159 = vector.shape_cast %158 : vector<8xf32> to vector<8x1xf32>
    %160 = tpu.reciprocal %159 : vector<8x1xf32> -> vector<8x1xf32>
    %161 = vector.broadcast %160 : vector<8x1xf32> to vector<8x16xf32>
    %162 = arith.mulf %157, %161 : vector<8x16xf32>
    %163 = vector.extract_strided_slice %144 {offsets = [0, 0], sizes = [16, 8], strides = [1, 1]} : vector<16x32xf32> to vector<16x8xf32>
    %cst_41 = arith.constant dense<0.000000e+00> : vector<8x8xf32>
    %164 = tpu.matmul %162, %163, %cst_41 {dimension_numbers = #tpu.dot_dimension_numbers<[1], [0], [0], [1], [0, 0, 1, 1], [], []>} : vector<8x16xf32>, vector<16x8xf32>, vector<8x8xf32> -> vector<8x8xf32>
    %165 = vector.extract_strided_slice %145 {offsets = [0, 0], sizes = [8, 32], strides = [1, 1]} : vector<32x32xf32> to vector<8x32xf32>
    %cst_42 = arith.constant dense<0.000000e+00> : vector<8x32xf32>
    %166 = tpu.matmul %164, %165, %cst_42 {dimension_numbers = #tpu.dot_dimension_numbers<[1], [0], [0], [1], [0, 0, 1, 1], [], []>} : vector<8x8xf32>, vector<8x32xf32>, vector<8x32xf32> -> vector<8x32xf32>
    %167 = vector.extract_strided_slice %148 {offsets = [0, 8], sizes = [8, 8], strides = [1, 1]} : vector<8x32xf32> to vector<8x8xf32>
    %168 = vector.extract_strided_slice %149 {offsets = [8, 0], sizes = [8, 16], strides = [1, 1]} : vector<32x16xf32> to vector<8x16xf32>
    %cst_43 = arith.constant dense<0.000000e+00> : vector<8x16xf32>
    %169 = tpu.matmul %167, %168, %cst_43 {dimension_numbers = #tpu.dot_dimension_numbers<[1], [0], [0], [1], [0, 0, 1, 1], [], []>} : vector<8x8xf32>, vector<8x16xf32>, vector<8x16xf32> -> vector<8x16xf32>
    %cst_44 = arith.constant dense<0xFF800000> : vector<8xf32>
    %170 = vector.multi_reduction <maximumf>, %169, %cst_44 [1] : vector<8x16xf32> to vector<8xf32>
    %171 = vector.shape_cast %170 : vector<8xf32> to vector<8x1xf32>
    %172 = vector.broadcast %171 : vector<8x1xf32> to vector<8x16xf32>
    %173 = arith.subf %169, %172 : vector<8x16xf32>
    %174 = math.exp %173 : vector<8x16xf32>
    %cst_45 = arith.constant dense<0.000000e+00> : vector<8xf32>
    %175 = vector.multi_reduction <add>, %174, %cst_45 [1] : vector<8x16xf32> to vector<8xf32>
    %176 = vector.shape_cast %175 : vector<8xf32> to vector<8x1xf32>
    %177 = tpu.reciprocal %176 : vector<8x1xf32> -> vector<8x1xf32>
    %178 = vector.broadcast %177 : vector<8x1xf32> to vector<8x16xf32>
    %179 = arith.mulf %174, %178 : vector<8x16xf32>
    %180 = vector.extract_strided_slice %144 {offsets = [0, 8], sizes = [16, 8], strides = [1, 1]} : vector<16x32xf32> to vector<16x8xf32>
    %cst_46 = arith.constant dense<0.000000e+00> : vector<8x8xf32>
    %181 = tpu.matmul %179, %180, %cst_46 {dimension_numbers = #tpu.dot_dimension_numbers<[1], [0], [0], [1], [0, 0, 1, 1], [], []>} : vector<8x16xf32>, vector<16x8xf32>, vector<8x8xf32> -> vector<8x8xf32>
    %182 = vector.extract_strided_slice %145 {offsets = [8, 0], sizes = [8, 32], strides = [1, 1]} : vector<32x32xf32> to vector<8x32xf32>
    %cst_47 = arith.constant dense<0.000000e+00> : vector<8x32xf32>
    %183 = tpu.matmul %181, %182, %cst_47 {dimension_numbers = #tpu.dot_dimension_numbers<[1], [0], [0], [1], [0, 0, 1, 1], [], []>} : vector<8x8xf32>, vector<8x32xf32>, vector<8x32xf32> -> vector<8x32xf32>
    %184 = vector.extract_strided_slice %148 {offsets = [0, 16], sizes = [8, 8], strides = [1, 1]} : vector<8x32xf32> to vector<8x8xf32>
    %185 = vector.extract_strided_slice %149 {offsets = [16, 0], sizes = [8, 16], strides = [1, 1]} : vector<32x16xf32> to vector<8x16xf32>
    %cst_48 = arith.constant dense<0.000000e+00> : vector<8x16xf32>
    %186 = tpu.matmul %184, %185, %cst_48 {dimension_numbers = #tpu.dot_dimension_numbers<[1], [0], [0], [1], [0, 0, 1, 1], [], []>} : vector<8x8xf32>, vector<8x16xf32>, vector<8x16xf32> -> vector<8x16xf32>
    %cst_49 = arith.constant dense<0xFF800000> : vector<8xf32>
    %187 = vector.multi_reduction <maximumf>, %186, %cst_49 [1] : vector<8x16xf32> to vector<8xf32>
    %188 = vector.shape_cast %187 : vector<8xf32> to vector<8x1xf32>
    %189 = vector.broadcast %188 : vector<8x1xf32> to vector<8x16xf32>
    %190 = arith.subf %186, %189 : vector<8x16xf32>
    %191 = math.exp %190 : vector<8x16xf32>
    %cst_50 = arith.constant dense<0.000000e+00> : vector<8xf32>
    %192 = vector.multi_reduction <add>, %191, %cst_50 [1] : vector<8x16xf32> to vector<8xf32>
    %193 = vector.shape_cast %192 : vector<8xf32> to vector<8x1xf32>
    %194 = tpu.reciprocal %193 : vector<8x1xf32> -> vector<8x1xf32>
    %195 = vector.broadcast %194 : vector<8x1xf32> to vector<8x16xf32>
    %196 = arith.mulf %191, %195 : vector<8x16xf32>
    %197 = vector.extract_strided_slice %144 {offsets = [0, 16], sizes = [16, 8], strides = [1, 1]} : vector<16x32xf32> to vector<16x8xf32>
    %cst_51 = arith.constant dense<0.000000e+00> : vector<8x8xf32>
    %198 = tpu.matmul %196, %197, %cst_51 {dimension_numbers = #tpu.dot_dimension_numbers<[1], [0], [0], [1], [0, 0, 1, 1], [], []>} : vector<8x16xf32>, vector<16x8xf32>, vector<8x8xf32> -> vector<8x8xf32>
    %199 = vector.extract_strided_slice %145 {offsets = [16, 0], sizes = [8, 32], strides = [1, 1]} : vector<32x32xf32> to vector<8x32xf32>
    %cst_52 = arith.constant dense<0.000000e+00> : vector<8x32xf32>
    %200 = tpu.matmul %198, %199, %cst_52 {dimension_numbers = #tpu.dot_dimension_numbers<[1], [0], [0], [1], [0, 0, 1, 1], [], []>} : vector<8x8xf32>, vector<8x32xf32>, vector<8x32xf32> -> vector<8x32xf32>
    %201 = vector.extract_strided_slice %148 {offsets = [0, 24], sizes = [8, 8], strides = [1, 1]} : vector<8x32xf32> to vector<8x8xf32>
    %202 = vector.extract_strided_slice %149 {offsets = [24, 0], sizes = [8, 16], strides = [1, 1]} : vector<32x16xf32> to vector<8x16xf32>
    %cst_53 = arith.constant dense<0.000000e+00> : vector<8x16xf32>
    %203 = tpu.matmul %201, %202, %cst_53 {dimension_numbers = #tpu.dot_dimension_numbers<[1], [0], [0], [1], [0, 0, 1, 1], [], []>} : vector<8x8xf32>, vector<8x16xf32>, vector<8x16xf32> -> vector<8x16xf32>
    %cst_54 = arith.constant dense<0xFF800000> : vector<8xf32>
    %204 = vector.multi_reduction <maximumf>, %203, %cst_54 [1] : vector<8x16xf32> to vector<8xf32>
    %205 = vector.shape_cast %204 : vector<8xf32> to vector<8x1xf32>
    %206 = vector.broadcast %205 : vector<8x1xf32> to vector<8x16xf32>
    %207 = arith.subf %203, %206 : vector<8x16xf32>
    %208 = math.exp %207 : vector<8x16xf32>
    %cst_55 = arith.constant dense<0.000000e+00> : vector<8xf32>
    %209 = vector.multi_reduction <add>, %208, %cst_55 [1] : vector<8x16xf32> to vector<8xf32>
    %210 = vector.shape_cast %209 : vector<8xf32> to vector<8x1xf32>
    %211 = tpu.reciprocal %210 : vector<8x1xf32> -> vector<8x1xf32>
    %212 = vector.broadcast %211 : vector<8x1xf32> to vector<8x16xf32>
    %213 = arith.mulf %208, %212 : vector<8x16xf32>
    %214 = vector.extract_strided_slice %144 {offsets = [0, 24], sizes = [16, 8], strides = [1, 1]} : vector<16x32xf32> to vector<16x8xf32>
    %cst_56 = arith.constant dense<0.000000e+00> : vector<8x8xf32>
    %215 = tpu.matmul %213, %214, %cst_56 {dimension_numbers = #tpu.dot_dimension_numbers<[1], [0], [0], [1], [0, 0, 1, 1], [], []>} : vector<8x16xf32>, vector<16x8xf32>, vector<8x8xf32> -> vector<8x8xf32>
    %216 = vector.extract_strided_slice %145 {offsets = [24, 0], sizes = [8, 32], strides = [1, 1]} : vector<32x32xf32> to vector<8x32xf32>
    %cst_57 = arith.constant dense<0.000000e+00> : vector<8x32xf32>
    %217 = tpu.matmul %215, %216, %cst_57 {dimension_numbers = #tpu.dot_dimension_numbers<[1], [0], [0], [1], [0, 0, 1, 1], [], []>} : vector<8x8xf32>, vector<8x32xf32>, vector<8x32xf32> -> vector<8x32xf32>
    %218 = arith.addf %166, %183 : vector<8x32xf32>
    %219 = arith.addf %200, %217 : vector<8x32xf32>
    %220 = arith.addf %218, %219 : vector<8x32xf32>
    %221 = vector.broadcast %146 : vector<1x32xf32> to vector<8x32xf32>
    %222 = arith.addf %220, %221 : vector<8x32xf32>
    %223 = arith.addf %127, %222 : vector<8x32xf32>
    %224 = vector.extract_strided_slice %2 {offsets = [331, 0], sizes = [1, 32], strides = [1, 1]} : vector<336x32xf32> to vector<1x32xf32>
    %225 = vector.extract_strided_slice %2 {offsets = [332, 0], sizes = [1, 32], strides = [1, 1]} : vector<336x32xf32> to vector<1x32xf32>
    %cst_58 = arith.constant dense<0.000000e+00> : vector<8xf32>
    %226 = vector.multi_reduction <add>, %223, %cst_58 [1] : vector<8x32xf32> to vector<8xf32>
    %227 = vector.shape_cast %226 : vector<8xf32> to vector<8x1xf32>
    %cst_59 = arith.constant 3.200000e+01 : f32
    %228 = vector.broadcast %cst_59 : f32 to vector<8x1xf32>
    %229 = arith.divf %227, %228 : vector<8x1xf32>
    %230 = vector.broadcast %229 : vector<8x1xf32> to vector<8x32xf32>
    %231 = arith.subf %223, %230 : vector<8x32xf32>
    %232 = arith.mulf %231, %231 : vector<8x32xf32>
    %cst_60 = arith.constant dense<0.000000e+00> : vector<8xf32>
    %233 = vector.multi_reduction <add>, %232, %cst_60 [1] : vector<8x32xf32> to vector<8xf32>
    %234 = vector.shape_cast %233 : vector<8xf32> to vector<8x1xf32>
    %cst_61 = arith.constant 3.200000e+01 : f32
    %235 = vector.broadcast %cst_61 : f32 to vector<8x1xf32>
    %236 = arith.divf %234, %235 : vector<8x1xf32>
    %cst_62 = arith.constant 9.99999974E-6 : f32
    %237 = vector.broadcast %cst_62 : f32 to vector<8x1xf32>
    %238 = arith.addf %236, %237 : vector<8x1xf32>
    %239 = math.rsqrt %238 : vector<8x1xf32>
    %240 = vector.broadcast %239 : vector<8x1xf32> to vector<8x32xf32>
    %241 = arith.mulf %231, %240 : vector<8x32xf32>
    %242 = vector.broadcast %224 : vector<1x32xf32> to vector<8x32xf32>
    %243 = arith.mulf %241, %242 : vector<8x32xf32>
    %244 = vector.broadcast %225 : vector<1x32xf32> to vector<8x32xf32>
    %245 = arith.addf %243, %244 : vector<8x32xf32>
    %cst_63 = arith.constant dense<0.000000e+00> : vector<8x64xf32>
    %246 = tpu.matmul %245, %9, %cst_63 {dimension_numbers = #tpu.dot_dimension_numbers<[1], [0], [0], [1], [0, 0, 1, 1], [], []>} : vector<8x32xf32>, vector<32x64xf32>, vector<8x64xf32> -> vector<8x64xf32>
    %247 = vector.broadcast %10 : vector<1x64xf32> to vector<8x64xf32>
    %248 = arith.addf %246, %247 : vector<8x64xf32>
    %cst_64 = arith.constant 0.000000e+00 : f32
    %249 = vector.broadcast %cst_64 : f32 to vector<8x64xf32>
    %250 = arith.maximumf %248, %249 : vector<8x64xf32>
    %cst_65 = arith.constant dense<0.000000e+00> : vector<8x32xf32>
    %251 = tpu.matmul %250, %8, %cst_65 {dimension_numbers = #tpu.dot_dimension_numbers<[1], [0], [0], [1], [0, 0, 1, 1], [], []>} : vector<8x64xf32>, vector<64x32xf32>, vector<8x32xf32> -> vector<8x32xf32>
    %252 = vector.extract_strided_slice %2 {offsets = [328, 0], sizes = [1, 32], strides = [1, 1]} : vector<336x32xf32> to vector<1x32xf32>
    %253 = vector.broadcast %252 : vector<1x32xf32> to vector<8x32xf32>
    %254 = arith.addf %251, %253 : vector<8x32xf32>
    %255 = arith.addf %245, %254 : vector<8x32xf32>
    %256 = vector.extract_strided_slice %2 {offsets = [333, 0], sizes = [1, 32], strides = [1, 1]} : vector<336x32xf32> to vector<1x32xf32>
    %257 = vector.extract_strided_slice %2 {offsets = [334, 0], sizes = [1, 32], strides = [1, 1]} : vector<336x32xf32> to vector<1x32xf32>
    %cst_66 = arith.constant dense<0.000000e+00> : vector<8xf32>
    %258 = vector.multi_reduction <add>, %255, %cst_66 [1] : vector<8x32xf32> to vector<8xf32>
    %259 = vector.shape_cast %258 : vector<8xf32> to vector<8x1xf32>
    %cst_67 = arith.constant 3.200000e+01 : f32
    %260 = vector.broadcast %cst_67 : f32 to vector<8x1xf32>
    %261 = arith.divf %259, %260 : vector<8x1xf32>
    %262 = vector.broadcast %261 : vector<8x1xf32> to vector<8x32xf32>
    %263 = arith.subf %255, %262 : vector<8x32xf32>
    %264 = arith.mulf %263, %263 : vector<8x32xf32>
    %cst_68 = arith.constant dense<0.000000e+00> : vector<8xf32>
    %265 = vector.multi_reduction <add>, %264, %cst_68 [1] : vector<8x32xf32> to vector<8xf32>
    %266 = vector.shape_cast %265 : vector<8xf32> to vector<8x1xf32>
    %cst_69 = arith.constant 3.200000e+01 : f32
    %267 = vector.broadcast %cst_69 : f32 to vector<8x1xf32>
    %268 = arith.divf %266, %267 : vector<8x1xf32>
    %cst_70 = arith.constant 9.99999974E-6 : f32
    %269 = vector.broadcast %cst_70 : f32 to vector<8x1xf32>
    %270 = arith.addf %268, %269 : vector<8x1xf32>
    %271 = math.rsqrt %270 : vector<8x1xf32>
    %272 = vector.broadcast %271 : vector<8x1xf32> to vector<8x32xf32>
    %273 = arith.mulf %263, %272 : vector<8x32xf32>
    %274 = vector.broadcast %256 : vector<1x32xf32> to vector<8x32xf32>
    %275 = arith.mulf %273, %274 : vector<8x32xf32>
    %276 = vector.broadcast %257 : vector<1x32xf32> to vector<8x32xf32>
    %277 = arith.addf %275, %276 : vector<8x32xf32>
    %c0_71 = arith.constant 0 : index
    %c0_72 = arith.constant 0 : index
    %c0_73 = arith.constant 0 : index
    %278 = vector.load %arg4[%c0_71, %c0_72, %c0_73] : memref<1x8x32xf32, #tpu.memory_space<vmem>>, vector<1x8x32xf32>
    %279 = vector.shape_cast %278 : vector<1x8x32xf32> to vector<8x32xf32>
    %280 = vector.shape_cast %277 : vector<8x32xf32> to vector<1x8x32xf32>
    tpu.vector_store %arg4[%c0_71, %c0_72, %c0_73], %280 {strides = array<i32>} : memref<1x8x32xf32, #tpu.memory_space<vmem>>, vector<1x8x32xf32>,
    return
  }
  func.func @transform_0(%arg0: i32) -> (i32, i32, i32) {
    %c0_i32 = arith.constant 0 : i32
    %c0_i32_0 = arith.constant 0 : i32
    %c0_i32_1 = arith.constant 0 : i32
    return %arg0, %c0_i32, %c0_i32_0 : i32, i32, i32
  }
  func.func @transform_1(%arg0: i32) -> (i32, i32) {
    %c0_i32 = arith.constant 0 : i32
    %c0_i32_0 = arith.constant 0 : i32
    %c0_i32_1 = arith.constant 0 : i32
    return %c0_i32, %c0_i32_0 : i32, i32
  }
  func.func @transform_2(%arg0: i32) -> (i32, i32) {
    %c0_i32 = arith.constant 0 : i32
    %c0_i32_0 = arith.constant 0 : i32
    %c0_i32_1 = arith.constant 0 : i32
    return %c0_i32, %c0_i32_0 : i32, i32
  }
  func.func @transform_3(%arg0: i32) -> (i32, i32, i32) {
    %c0_i32 = arith.constant 0 : i32
    %c0_i32_0 = arith.constant 0 : i32
    %c0_i32_1 = arith.constant 0 : i32
    return %arg0, %c0_i32, %c0_i32_0 : i32, i32, i32
  }
}

</mosaic_0001>

<llo_original>
// kernel: decoder_layer_pallas.1
$region0: #{decoder_layer_pallas.1}
  #allocation0 [shape = 'u32[]', space=smem, size = 0x4, offset = 0x4, fixed_abs, tag = 'smem constant byte address 0x4 - core index']
  #allocation1 [shape = 'u32[144,128]{1,0:T(1,128)}', space=vmem, size = 0x12000, scoped, tag = 'internal scratch']
  %s0 = inlined_call_operand.vmem [shape: f32[2,48,32], index: 0, kind: input, shape index: {}]
  %s1 = inlined_call_operand.vmem [shape: f32[336,32], index: 1, kind: input, shape index: {}]
  %s2 = inlined_call_operand.vmem [shape: f32[33,64], index: 2, kind: input, shape index: {}]
  %s3 = inlined_call_operand.vmem [shape: f32[2,8,32], index: 3, kind: output, shape index: {}]
  %s4 = sld [smem:[#allocation0]]
  $region45: #{decoder_layer_pallas.1} parent=0
    _
  %s6 = ssub.s32 1, %s4
  %s7 = scalar_select 0, %s6, %s4
  loop: start=0, step=1, limit=4
  $region2: #{decoder_layer_pallas.1} parent=0 // loop_pre_header
    _
  $region3: #{decoder_layer_pallas.1} parent=0 // loop_header
    %s9 = sphi 0, %s13
    %p10 = scmp.ge.s32.totalorder %s9, 4
    %s19 = sphi 0, %s21
    %s22 = sphi 0, %s19
    %s23 = sphi 0, %s22
    %s39 = sphi 0, %s23
    %s43 = sphi 0, %s43
    %s45 = sphi 0, %s43
    %s46 = sphi 0, %s45
    %s60 = sphi 0, %s46
    %s64 = sphi 0, %s64
    %s66 = sphi 0, %s64
    %s67 = sphi 0, %s66
    %s81 = sphi 0, %s67
    %s87 = sphi 0, %s89
    %s90 = sphi 0, %s87
    %s91 = sphi 0, %s90
    %s107 = sphi 0, %s91
  $region4: #{decoder_layer_pallas.1} parent=0 // loop_header_branch
    %12 = sbr.rel (%p10) target = $region8
  $region5: #{decoder_layer_pallas.1} parent=0 // loop_body
    %s14 = ssub.s32 %s9, 1
    %s15 = ssub.s32 %s9, 2
    %s16 = sadd.s32 %s9, 1
    %s17 = ssub.s32 %s9, %s16
    %p18 = scmp.eq.s32.totalorder %s17, 0
    %s20 = sadd.s32 %s19, 1
    %s21 = scalar_select %p18, %s19, %s20
    %p24 = pneg %p18
    %p25 = scmp.eq.s32.totalorder %s9, 1
    %p26 = por %p24, %p25
    %p27 = scmp.ne.s32.totalorder %s19, %s22
    %p28 = scmp.eq.s32.totalorder %s9, 0
    %p29 = por %p27, %p28
    %p30 = scmp.ne.s32.totalorder %s19, %s22
    %p31 = scmp.eq.s32.totalorder %s14, 1
    %p32 = por %p30, %p31
    %p33 = scmp.ne.s32.totalorder %s22, %s23
    %p34 = scmp.eq.s32.totalorder %s14, 0
    %p35 = por %p33, %p34
    %p36 = scmp.ne.s32.totalorder %s22, %s23
    %p37 = scmp.eq.s32.totalorder %s15, 1
    %p38 = por %p36, %p37
    %p40 = scmp.ne.s32.totalorder %s23, %s39
    %p41 = scmp.eq.s32.totalorder %s15, 0
    %p42 = por %p40, %p41
    %s44 = sadd.s32 %s43, 1
    %p47 = scmp.eq.s32.totalorder %s9, 1
    %p48 = scmp.ne.s32.totalorder %s43, %s45
    %p49 = scmp.eq.s32.totalorder %s9, 0
    %p50 = por %p48, %p49
    %p51 = scmp.ne.s32.totalorder %s43, %s45
    %p52 = scmp.eq.s32.totalorder %s14, 1
    %p53 = por %p51, %p52
    %p54 = scmp.ne.s32.totalorder %s45, %s46
    %p55 = scmp.eq.s32.totalorder %s14, 0
    %p56 = por %p54, %p55
    %p57 = scmp.ne.s32.totalorder %s45, %s46
    %p58 = scmp.eq.s32.totalorder %s15, 1
    %p59 = por %p57, %p58
    %p61 = scmp.ne.s32.totalorder %s46, %s60
    %p62 = scmp.eq.s32.totalorder %s15, 0
    %p63 = por %p61, %p62
    %s65 = sadd.s32 %s64, 1
    %p68 = scmp.eq.s32.totalorder %s9, 1
    %p69 = scmp.ne.s32.totalorder %s64, %s66
    %p70 = scmp.eq.s32.totalorder %s9, 0
    %p71 = por %p69, %p70
    %p72 = scmp.ne.s32.totalorder %s64, %s66
    %p73 = scmp.eq.s32.totalorder %s14, 1
    %p74 = por %p72, %p73
    %p75 = scmp.ne.s32.totalorder %s66, %s67
    %p76 = scmp.eq.s32.totalorder %s14, 0
    %p77 = por %p75, %p76
    %p78 = scmp.ne.s32.totalorder %s66, %s67
    %p79 = scmp.eq.s32.totalorder %s15, 1
    %p80 = por %p78, %p79
    %p82 = scmp.ne.s32.totalorder %s67, %s81
    %p83 = scmp.eq.s32.totalorder %s15, 0
    %p84 = por %p82, %p83
    %s85 = ssub.s32 %s9, %s16
    %p86 = scmp.eq.s32.totalorder %s85, 0
    %s88 = sadd.s32 %s87, 1
    %s89 = scalar_select %p86, %s87, %s88
    %p92 = pneg %p86
    %p93 = scmp.eq.s32.totalorder %s9, 1
    %p94 = por %p92, %p93
    %p95 = scmp.ne.s32.totalorder %s87, %s90
    %p96 = scmp.eq.s32.totalorder %s9, 0
    %p97 = por %p95, %p96
    %p98 = scmp.ne.s32.totalorder %s87, %s90
    %p99 = scmp.eq.s32.totalorder %s14, 1
    %p100 = por %p98, %p99
    %p101 = scmp.ne.s32.totalorder %s90, %s91
    %p102 = scmp.eq.s32.totalorder %s14, 0
    %p103 = por %p101, %p102
    %p104 = scmp.ne.s32.totalorder %s90, %s91
    %p105 = scmp.eq.s32.totalorder %s15, 1
    %p106 = por %p104, %p105
    %p108 = scmp.ne.s32.totalorder %s91, %s107
    %p109 = scmp.eq.s32.totalorder %s15, 0
    %p110 = por %p108, %p109
    %p111 = scmp.le.s32.totalorder 1, %s9
    %p112 = scmp.lt.s32.totalorder %s9, 3
    %p113 = pnand %p111, %p112
    %p114 = pneg %p113
    // Predicated region
    $region9: #{decoder_layer_pallas.1} parent=5 // pred_check
      _
    $region10: #{decoder_layer_pallas.1} parent=5 // pred_check_branch
      %116 = sbr.rel (%p113) target = $region12
    $region11: #{decoder_layer_pallas.1} parent=5 // pred_region
      %s117 = ssub.s32 %s9, 1
      // Predicated region
      $region13: #{decoder_layer_pallas.1} parent=11 // pred_check
        %p118 = pneg %p56
      $region14: #{decoder_layer_pallas.1} parent=11 // pred_check_branch
        %120 = sbr.rel (%p118) target = $region16
      $region15: #{decoder_layer_pallas.1} parent=11 // pred_region
        _
      $region16: #{decoder_layer_pallas.1} parent=11 // pred_fallthru
        _
      // Predicated region
      $region17: #{decoder_layer_pallas.1} parent=11 // pred_check
        %p121 = pneg %p77
      $region18: #{decoder_layer_pallas.1} parent=11 // pred_check_branch
        %123 = sbr.rel (%p121) target = $region20
      $region19: #{decoder_layer_pallas.1} parent=11 // pred_region
        _
      $region20: #{decoder_layer_pallas.1} parent=11 // pred_fallthru
        _
    $region12: #{decoder_layer_pallas.1} parent=5 // pred_fallthru
      _
    %p124 = scmp.lt.s32.totalorder %s9, 2
    // Predicated region
    $region21: #{decoder_layer_pallas.1} parent=5 // pred_check
      %p125 = pneg %p124
    $region22: #{decoder_layer_pallas.1} parent=5 // pred_check_branch
      %127 = sbr.rel (%p125) target = $region24
    $region23: #{decoder_layer_pallas.1} parent=5 // pred_region
      // Predicated region
      $region25: #{decoder_layer_pallas.1} parent=23 // pred_check
        %p128 = pneg %p29
      $region26: #{decoder_layer_pallas.1} parent=23 // pred_check_branch
        %130 = sbr.rel (%p128) target = $region28
      $region27: #{decoder_layer_pallas.1} parent=23 // pred_region
        %p131 = scmp.lt.s32.totalorder %s9, 1
        %s132 = scalar_select %p131, %s9, 1
        %s133 = smul.addr %s132, 6
        %s134 = smul.addr %s133, 8
        %s135 = scalar_lea.vmem %s0, %s134
      $region28: #{decoder_layer_pallas.1} parent=23 // pred_fallthru
        _
    $region24: #{decoder_layer_pallas.1} parent=5 // pred_fallthru
      _
    %p136 = scmp.le.s32.totalorder 1, %s9
    %p137 = scmp.lt.s32.totalorder %s9, 3
    %p138 = pnand %p136, %p137
    %p139 = pneg %p138
    // Predicated region
    $region29: #{decoder_layer_pallas.1} parent=5 // pred_check
      _
    $region30: #{decoder_layer_pallas.1} parent=5 // pred_check_branch
      %141 = sbr.rel (%p138) target = $region32
    $region31: #{decoder_layer_pallas.1} parent=5 // pred_region
      %s142 = ssub.s32 %s9, 1
      %p143 = scmp.lt.s32.totalorder %s14, 1
      %s144 = scalar_select %p143, %s14, 1
      %s145 = smul.addr %s144, 6
      %s146 = smul.addr %s145, 8
      %s147 = scalar_lea.vmem %s0, %s146
      %p148 = pneg %p35
      %p149 = pneg %p32
      %p150 = pneg %p56
      %p151 = pneg %p53
      %p152 = pneg %p77
      %p153 = pneg %p74
      %p154 = pneg %p103
      %p155 = pneg %p100
      %p156 = scmp.lt.s32.totalorder %s14, 1
      %s157 = scalar_select %p156, %s14, 1
      %s158 = smul.addr %s157, 8
      %s159 = scalar_lea.vmem %s3, %s158
      %p160 = scmp.lt.s32.totalorder %s14, 1
      %s161 = scalar_select %p160, %s14, 1
      %s162 = smul.addr %s161, 6
      %s163 = smul.addr %s162, 8
      %s164 = scalar_lea.vmem %s0, %s163
      %p165 = scmp.lt.s32.totalorder %s14, 1
      %s166 = scalar_select %p165, %s14, 1
      %s167 = smul.addr %s166, 8
      %s168 = scalar_lea.vmem %s3, %s167
      %v169 = vld [vmem:[%s164] sm:$0xff]
      %v170 = vld [vmem:[%s164 + $0x8] sm:$0xff]
      %v171 = vld [vmem:[%s164 + $0x10] sm:$0xff]
      %v172 = vld [vmem:[%s164 + $0x18] sm:$0xff]
      %v173 = vld [vmem:[%s164 + $0x20] sm:$0xff]
      %v174 = vld [vmem:[%s164 + $0x28] sm:$0xff]
      %v175 = vld [vmem:[%s1] sm:$0xff]
      %v176 = vld [vmem:[%s1 + $0x8] sm:$0xff]
      %v177 = vld [vmem:[%s1 + $0x10] sm:$0xff]
      %v178 = vld [vmem:[%s1 + $0x18] sm:$0xff]
      %v179 = vld [vmem:[%s1 + $0x20] sm:$0xff]
      %v180 = vld [vmem:[%s1 + $0x28] sm:$0xff]
      %v181 = vld [vmem:[%s1 + $0x30] sm:$0xff]
      %v182 = vld [vmem:[%s1 + $0x38] sm:$0xff]
      %v183 = vld [vmem:[%s1 + $0x40] sm:$0xff]
      %v184 = vld [vmem:[%s1 + $0x48] sm:$0xff]
      %v185 = vld [vmem:[%s1 + $0x50] sm:$0xff]
      %v186 = vld [vmem:[%s1 + $0x58] sm:$0xff]
      %v187 = vld [vmem:[%s1 + $0x60] sm:$0xff]
      %v188 = vld [vmem:[%s1 + $0x68] sm:$0xff]
      %v189 = vld [vmem:[%s1 + $0x70] sm:$0xff]
      %v190 = vld [vmem:[%s1 + $0x78] sm:$0xff]
      %v191 = vld [vmem:[%s1 + $0x80] sm:$0xff]
      %v192 = vld [vmem:[%s1 + $0x88] sm:$0xff]
      %v193 = vld [vmem:[%s1 + $0x90] sm:$0xff]
      %v194 = vld [vmem:[%s1 + $0x98] sm:$0xff]
      %v195 = vld [vmem:[%s1 + $0xa0] sm:$0xff]
      %v196 = vld [vmem:[%s1 + $0xa8] sm:$0xff]
      %v197 = vld [vmem:[%s1 + $0xb0] sm:$0xff]
      %v198 = vld [vmem:[%s1 + $0xb8] sm:$0xff]
      %v199 = vld [vmem:[%s1 + $0xc0] sm:$0xff]
      %v200 = vld [vmem:[%s1 + $0xc8] sm:$0xff]
      %v201 = vld [vmem:[%s1 + $0xd0] sm:$0xff]
      %v202 = vld [vmem:[%s1 + $0xd8] sm:$0xff]
      %v203 = vld [vmem:[%s1 + $0xe0] sm:$0xff]
      %v204 = vld [vmem:[%s1 + $0xe8] sm:$0xff]
      %v205 = vld [vmem:[%s1 + $0xf0] sm:$0xff]
      %v206 = vld [vmem:[%s1 + $0xf8] sm:$0xff]
      %v207 = vld [vmem:[%s1 + $0x100] sm:$0xff]
      %v208 = vld [vmem:[%s1 + $0x108] sm:$0xff]
      %v209 = vld [vmem:[%s1 + $0x110] sm:$0xff]
      %v210 = vld [vmem:[%s1 + $0x118] sm:$0xff]
      %v211 = vld [vmem:[%s1 + $0x120] sm:$0xff]
      %v212 = vld [vmem:[%s1 + $0x128] sm:$0xff]
      %v213 = vld [vmem:[%s1 + $0x130] sm:$0xff]
      %v214 = vld [vmem:[%s1 + $0x138] sm:$0xff]
      %v215 = vld [vmem:[%s1 + $0x140] sm:$0xff]
      %v216 = vld [vmem:[%s1 + $0x148] sm:$0xff]
      %v217 = vld [vmem:[%s2] sm:$0xff]
      %v218 = vld [vmem:[%s2 + $0x8] sm:$0xff]
      %v219 = vld [vmem:[%s2 + $0x10] sm:$0xff]
      %v220 = vld [vmem:[%s2 + $0x18] sm:$0xff]
      %v221 = vld [vmem:[%s2 + $0x20] sm:$0x1]
      %v222 = vadd.f32 %v169, %v170
      %v223 = vlaneseq
      %v224 = vshrl.u32 %v223, 7
      %v225 = vsub.s32 0, %v224
      %v226 = vrot.slane %v215, %v225
      %vm227 = vcmask 261120
      %v229 = vsel %vm227, %v222, 0
      %231 = vmatprep.subr.mxu0 0.0
      %232 = vmatpush1.msra.mxu0 %v175
      %233 = vmatprep.subr.mxu0 0.0
      %234 = vmatpush1.msra.mxu0 %v176
      %235 = vmatprep.subr.mxu0 0.0
      %236 = vmatpush1.msra.mxu0 %v177
      %237 = vmatprep.subr.mxu0 0.0
      %238 = vmatpush1.msra.mxu0 %v178
      %239 = vmatprep.subr.mxu0 0.0
      %240 = vmatpush1.msra.mxu0 0.0
      %241 = vmatprep.subr.mxu0 0.0
      %242 = vmatpush1.msra.mxu0 0.0
      %243 = vmatprep.subr.mxu0 0.0
      %244 = vmatpush1.msra.mxu0 0.0
      %245 = vmatprep.subr.mxu0 0.0
      %246 = vmatpush1.msra.mxu0 0.0
      %247 = vmatprep.subr.mxu0 0.0
      %248 = vmatpush1.msra.mxu0 0.0
      %249 = vmatprep.subr.mxu0 0.0
      %250 = vmatpush1.msra.mxu0 0.0
      %251 = vmatprep.subr.mxu0 0.0
      %252 = vmatpush1.msra.mxu0 0.0
      %253 = vmatprep.subr.mxu0 0.0
      %254 = vmatpush1.msra.mxu0 0.0
      %255 = vmatprep.subr.mxu0 0.0
      %256 = vmatpush1.msra.mxu0 0.0
      %257 = vmatprep.subr.mxu0 0.0
      %258 = vmatpush1.msra.mxu0 0.0
      %259 = vmatprep.subr.mxu0 0.0
      %260 = vmatpush1.msra.mxu0 0.0
      %261 = vmatprep.subr.mxu0 0.0
      %262 = vmatpush1.msra.mxu0 0.0
      %263 = vmatprep.subr.mxu0 0.0
      %264 = vmatpush1.msra.mxu0 0.0
      %265 = vmatprep.subr.mxu0 0.0
      %266 = vmatpush1.msra.mxu0 0.0
      %267 = vmatprep.subr.mxu0 0.0
      %268 = vmatpush1.msra.mxu0 0.0
      %269 = vmatprep.subr.mxu0 0.0
      %270 = vmatpush1.msra.mxu0 0.0
      %271 = vmatprep.subr.mxu0 0.0
      %272 = vmatpush1.msra.mxu0 0.0
      %273 = vmatprep.subr.mxu0 0.0
      %274 = vmatpush1.msra.mxu0 0.0
      %275 = vmatprep.subr.mxu0 0.0
      %276 = vmatpush1.msra.mxu0 0.0
      %277 = vmatprep.subr.mxu0 0.0
      %278 = vmatpush1.msra.mxu0 0.0
      %279 = vmatprep.subr.mxu0 0.0
      %280 = vmatpush1.msra.mxu0 0.0
      %281 = vmatprep.subr.mxu0 0.0
      %282 = vmatpush1.msra.mxu0 0.0
      %283 = vmatprep.subr.mxu0 0.0
      %284 = vmatpush1.msra.mxu0 0.0
      %285 = vmatprep.subr.mxu0 0.0
      %286 = vmatpush1.msra.mxu0 0.0
      %287 = vmatprep.subr.mxu0 0.0
      %288 = vmatpush1.msra.mxu0 0.0
      %289 = vmatprep.subr.mxu0 0.0
      %290 = vmatpush1.msra.mxu0 0.0
      %291 = vmatprep.subr.mxu0 0.0
      %292 = vmatpush1.msra.mxu0 0.0
      %293 = vmatprep.subr.mxu0 0.0
      %294 = vmatpush1.msra.mxu0 0.0
      %295 = vmatprep.mubr.f32.mxu0 0.0
      %296 = vmatmul.mubr.f32.gmra.mrb[0].mxu0 %v229
      %v297 = vpop.f32.mrb[0].mxu0
      %v298 = vadd.f32 %v226, %v297
      %v299 = vpop.f32.mrb[0].mxu0
      %300 = vdwg.mxu0
      %v301 = vlaneseq
      %v302 = vshrl.u32 %v301, 7
      %v303 = vsub.s32 1, %v302
      %v304 = vrot.slane %v215, %v303
      %305 = vmatprep.subr.mxu0 0.0
      %306 = vmatpush1.msra.mxu0 %v179
      %307 = vmatprep.subr.mxu0 0.0
      %308 = vmatpush1.msra.mxu0 %v180
      %309 = vmatprep.subr.mxu0 0.0
      %310 = vmatpush1.msra.mxu0 %v181
      %311 = vmatprep.subr.mxu0 0.0
      %312 = vmatpush1.msra.mxu0 %v182
      %313 = vmatprep.subr.mxu0 0.0
      %314 = vmatpush1.msra.mxu0 0.0
      %315 = vmatprep.subr.mxu0 0.0
      %316 = vmatpush1.msra.mxu0 0.0
      %317 = vmatprep.subr.mxu0 0.0
      %318 = vmatpush1.msra.mxu0 0.0
      %319 = vmatprep.subr.mxu0 0.0
      %320 = vmatpush1.msra.mxu0 0.0
      %321 = vmatprep.subr.mxu0 0.0
      %322 = vmatpush1.msra.mxu0 0.0
      %323 = vmatprep.subr.mxu0 0.0
      %324 = vmatpush1.msra.mxu0 0.0
      %325 = vmatprep.subr.mxu0 0.0
      %326 = vmatpush1.msra.mxu0 0.0
      %327 = vmatprep.subr.mxu0 0.0
      %328 = vmatpush1.msra.mxu0 0.0
      %329 = vmatprep.subr.mxu0 0.0
      %330 = vmatpush1.msra.mxu0 0.0
      %331 = vmatprep.subr.mxu0 0.0
      %332 = vmatpush1.msra.mxu0 0.0
      %333 = vmatprep.subr.mxu0 0.0
      %334 = vmatpush1.msra.mxu0 0.0
      %335 = vmatprep.subr.mxu0 0.0
      %336 = vmatpush1.msra.mxu0 0.0
      %337 = vmatprep.subr.mxu0 0.0
      %338 = vmatpush1.msra.mxu0 0.0
      %339 = vmatprep.subr.mxu0 0.0
      %340 = vmatpush1.msra.mxu0 0.0
      %341 = vmatprep.subr.mxu0 0.0
      %342 = vmatpush1.msra.mxu0 0.0
      %343 = vmatprep.subr.mxu0 0.0
      %344 = vmatpush1.msra.mxu0 0.0
      %345 = vmatprep.subr.mxu0 0.0
      %346 = vmatpush1.msra.mxu0 0.0
      %347 = vmatprep.subr.mxu0 0.0
      %348 = vmatpush1.msra.mxu0 0.0
      %349 = vmatprep.subr.mxu0 0.0
      %350 = vmatpush1.msra.mxu0 0.0
      %351 = vmatprep.subr.mxu0 0.0
      %352 = vmatpush1.msra.mxu0 0.0
      %353 = vmatprep.subr.mxu0 0.0
      %354 = vmatpush1.msra.mxu0 0.0
      %355 = vmatprep.subr.mxu0 0.0
      %356 = vmatpush1.msra.mxu0 0.0
      %357 = vmatprep.subr.mxu0 0.0
      %358 = vmatpush1.msra.mxu0 0.0
      %359 = vmatprep.subr.mxu0 0.0
      %360 = vmatpush1.msra.mxu0 0.0
      %361 = vmatprep.subr.mxu0 0.0
      %362 = vmatpush1.msra.mxu0 0.0
      %363 = vmatprep.subr.mxu0 0.0
      %364 = vmatpush1.msra.mxu0 0.0
      %365 = vmatprep.subr.mxu0 0.0
      %366 = vmatpush1.msra.mxu0 0.0
      %367 = vmatprep.subr.mxu0 0.0
      %368 = vmatpush1.msra.mxu0 0.0
      %369 = vmatprep.mubr.f32.mxu0 0.0
      %370 = vmatmul.mubr.f32.gmra.mrb[0].mxu0 %v229
      %v371 = vpop.f32.mrb[0].mxu0
      %v372 = vadd.f32 %v304, %v371
      %v373 = vpop.f32.mrb[0].mxu0
      %374 = vdwg.mxu0
      %v375 = vlaneseq
      %v376 = vshrl.u32 %v375, 7
      %v377 = vsub.s32 2, %v376
      %v378 = vrot.slane %v215, %v377
      %v380 = vsel %vm227, %v169, 0
      %382 = vmatprep.subr.mxu0 0.0
      %383 = vmatpush1.msra.mxu0 %v183
      %384 = vmatprep.subr.mxu0 0.0
      %385 = vmatpush1.msra.mxu0 %v184
      %386 = vmatprep.subr.mxu0 0.0
      %387 = vmatpush1.msra.mxu0 %v185
      %388 = vmatprep.subr.mxu0 0.0
      %389 = vmatpush1.msra.mxu0 %v186
      %390 = vmatprep.subr.mxu0 0.0
      %391 = vmatpush1.msra.mxu0 0.0
      %392 = vmatprep.subr.mxu0 0.0
      %393 = vmatpush1.msra.mxu0 0.0
      %394 = vmatprep.subr.mxu0 0.0
      %395 = vmatpush1.msra.mxu0 0.0
      %396 = vmatprep.subr.mxu0 0.0
      %397 = vmatpush1.msra.mxu0 0.0
      %398 = vmatprep.subr.mxu0 0.0
      %399 = vmatpush1.msra.mxu0 0.0
      %400 = vmatprep.subr.mxu0 0.0
      %401 = vmatpush1.msra.mxu0 0.0
      %402 = vmatprep.subr.mxu0 0.0
      %403 = vmatpush1.msra.mxu0 0.0
      %404 = vmatprep.subr.mxu0 0.0
      %405 = vmatpush1.msra.mxu0 0.0
      %406 = vmatprep.subr.mxu0 0.0
      %407 = vmatpush1.msra.mxu0 0.0
      %408 = vmatprep.subr.mxu0 0.0
      %409 = vmatpush1.msra.mxu0 0.0
      %410 = vmatprep.subr.mxu0 0.0
      %411 = vmatpush1.msra.mxu0 0.0
      %412 = vmatprep.subr.mxu0 0.0
      %413 = vmatpush1.msra.mxu0 0.0
      %414 = vmatprep.subr.mxu0 0.0
      %415 = vmatpush1.msra.mxu0 0.0
      %416 = vmatprep.subr.mxu0 0.0
      %417 = vmatpush1.msra.mxu0 0.0
      %418 = vmatprep.subr.mxu0 0.0
      %419 = vmatpush1.msra.mxu0 0.0
      %420 = vmatprep.subr.mxu0 0.0
      %421 = vmatpush1.msra.mxu0 0.0
      %422 = vmatprep.subr.mxu0 0.0
      %423 = vmatpush1.msra.mxu0 0.0
      %424 = vmatprep.subr.mxu0 0.0
      %425 = vmatpush1.msra.mxu0 0.0
      %426 = vmatprep.subr.mxu0 0.0
      %427 = vmatpush1.msra.mxu0 0.0
      %428 = vmatprep.subr.mxu0 0.0
      %429 = vmatpush1.msra.mxu0 0.0
      %430 = vmatprep.subr.mxu0 0.0
      %431 = vmatpush1.msra.mxu0 0.0
      %432 = vmatprep.subr.mxu0 0.0
      %433 = vmatpush1.msra.mxu0 0.0
      %434 = vmatprep.subr.mxu0 0.0
      %435 = vmatpush1.msra.mxu0 0.0
      %436 = vmatprep.subr.mxu0 0.0
      %437 = vmatpush1.msra.mxu0 0.0
      %438 = vmatprep.subr.mxu0 0.0
      %439 = vmatpush1.msra.mxu0 0.0
      %440 = vmatprep.subr.mxu0 0.0
      %441 = vmatpush1.msra.mxu0 0.0
      %442 = vmatprep.subr.mxu0 0.0
      %443 = vmatpush1.msra.mxu0 0.0
      %444 = vmatprep.subr.mxu0 0.0
      %445 = vmatpush1.msra.mxu0 0.0
      %446 = vmatprep.mubr.f32.mxu0 0.0
      %447 = vmatmul.mubr.f32.gmra.mrb[0].mxu0 %v380
      %v448 = vpop.f32.mrb[0].mxu0
      %v449 = vadd.f32 %v378, %v448
      %v450 = vpop.f32.mrb[0].mxu0
      %451 = vdwg.mxu0
      %v452 = vmul.f32 %v298, 0.35355338
      %vm453 = vcmask 64512
      %v455 = vsel %vm453, %v452, 0
      %v458 = vsel %vm453, %v372, 0
      %460 = vmatprep.subr.mxu0 0.0
      %461 = vmatpush1.xpose.msra.mxu0 %v458
      %462 = vmatprep.subr.mxu0 0.0
      %463 = vmatpush1.xpose.msra.mxu0 0.0
      %464 = vmatprep.subr.mxu0 0.0
      %465 = vmatpush1.xpose.msra.mxu0 0.0
      %466 = vmatprep.subr.mxu0 0.0
      %467 = vmatpush1.xpose.msra.mxu0 0.0
      %468 = vmatprep.subr.mxu0 0.0
      %469 = vmatpush1.xpose.msra.mxu0 0.0
      %470 = vmatprep.subr.mxu0 0.0
      %471 = vmatpush1.xpose.msra.mxu0 0.0
      %472 = vmatprep.subr.mxu0 0.0
      %473 = vmatpush1.xpose.msra.mxu0 0.0
      %474 = vmatprep.subr.mxu0 0.0
      %475 = vmatpush1.xpose.msra.mxu0 0.0
      %476 = vmatprep.subr.mxu0 0.0
      %477 = vmatpush1.xpose.msra.mxu0 0.0
      %478 = vmatprep.subr.mxu0 0.0
      %479 = vmatpush1.xpose.msra.mxu0 0.0
      %480 = vmatprep.subr.mxu0 0.0
      %481 = vmatpush1.xpose.msra.mxu0 0.0
      %482 = vmatprep.subr.mxu0 0.0
      %483 = vmatpush1.xpose.msra.mxu0 0.0
      %484 = vmatprep.subr.mxu0 0.0
      %485 = vmatpush1.xpose.msra.mxu0 0.0
      %486 = vmatprep.subr.mxu0 0.0
      %487 = vmatpush1.xpose.msra.mxu0 0.0
      %488 = vmatprep.subr.mxu0 0.0
      %489 = vmatpush1.xpose.msra.mxu0 0.0
      %490 = vmatprep.subr.mxu0 0.0
      %491 = vmatpush1.xpose.msra.mxu0 0.0
      %492 = vmatprep.subr.mxu0 0.0
      %493 = vmatpush1.xpose.msra.mxu0 0.0
      %494 = vmatprep.subr.mxu0 0.0
      %495 = vmatpush1.xpose.msra.mxu0 0.0
      %496 = vmatprep.subr.mxu0 0.0
      %497 = vmatpush1.xpose.msra.mxu0 0.0
      %498 = vmatprep.subr.mxu0 0.0
      %499 = vmatpush1.xpose.msra.mxu0 0.0
      %500 = vmatprep.subr.mxu0 0.0
      %501 = vmatpush1.xpose.msra.mxu0 0.0
      %502 = vmatprep.subr.mxu0 0.0
      %503 = vmatpush1.xpose.msra.mxu0 0.0
      %504 = vmatprep.subr.mxu0 0.0
      %505 = vmatpush1.xpose.msra.mxu0 0.0
      %506 = vmatprep.subr.mxu0 0.0
      %507 = vmatpush1.xpose.msra.mxu0 0.0
      %508 = vmatprep.subr.mxu0 0.0
      %509 = vmatpush1.xpose.msra.mxu0 0.0
      %510 = vmatprep.subr.mxu0 0.0
      %511 = vmatpush1.xpose.msra.mxu0 0.0
      %512 = vmatprep.subr.mxu0 0.0
      %513 = vmatpush1.xpose.msra.mxu0 0.0
      %514 = vmatprep.subr.mxu0 0.0
      %515 = vmatpush1.xpose.msra.mxu0 0.0
      %516 = vmatprep.subr.mxu0 0.0
      %517 = vmatpush1.xpose.msra.mxu0 0.0
      %518 = vmatprep.subr.mxu0 0.0
      %519 = vmatpush1.xpose.msra.mxu0 0.0
      %520 = vmatprep.subr.mxu0 0.0
      %521 = vmatpush1.xpose.msra.mxu0 0.0
      %522 = vmatprep.subr.mxu0 0.0
      %523 = vmatpush1.xpose.msra.mxu0 0.0
      %524 = vmatprep.mubr.f32.mxu0 0.0
      %525 = vmatmul.mubr.f32.gmra.mrb[0].mxu0 %v455
      %v526 = vpop.f32.mrb[0].mxu0
      %v527 = vadd.f32 0.0, %v526
      %v528 = vpop.f32.mrb[0].mxu0
      %529 = vdwg.mxu0
      %v530 = vsel %vm453, %v527, -inf
      %531 = vmax.xlane.f32.xlu0 %v530
      %v532 = vpop.xlane.xlu0 %531
      %v533 = vsub.f32 %v527, %v532
      %v534 = vmul.f32 %v533, 1.442695
      %v535 = vpow.pop %v534
      %v536 = vsel %vm453, %v535, 0.0
      %537 = vadd.xlane.f32.xlu0 %v536
      %v538 = vpop.xlane.xlu0 %537
      %v539 = vrcp.pop %v538
      %v540 = vmul.f32 %v535, %v539
      %v542 = vsel %vm453, %v540, 0
      %544 = vmatprep.subr.mxu0 0.0
      %545 = vmatpush1.msra.mxu0 %v449
      %546 = vmatprep.subr.mxu0 0.0
      %547 = vmatpush1.msra.mxu0 0.0
      %548 = vmatprep.subr.mxu0 0.0
      %549 = vmatpush1.msra.mxu0 0.0
      %550 = vmatprep.subr.mxu0 0.0
      %551 = vmatpush1.msra.mxu0 0.0
      %552 = vmatprep.subr.mxu0 0.0
      %553 = vmatpush1.msra.mxu0 0.0
      %554 = vmatprep.subr.mxu0 0.0
      %555 = vmatpush1.msra.mxu0 0.0
      %556 = vmatprep.subr.mxu0 0.0
      %557 = vmatpush1.msra.mxu0 0.0
      %558 = vmatprep.subr.mxu0 0.0
      %559 = vmatpush1.msra.mxu0 0.0
      %560 = vmatprep.subr.mxu0 0.0
      %561 = vmatpush1.msra.mxu0 0.0
      %562 = vmatprep.subr.mxu0 0.0
      %563 = vmatpush1.msra.mxu0 0.0
      %564 = vmatprep.subr.mxu0 0.0
      %565 = vmatpush1.msra.mxu0 0.0
      %566 = vmatprep.subr.mxu0 0.0
      %567 = vmatpush1.msra.mxu0 0.0
      %568 = vmatprep.subr.mxu0 0.0
      %569 = vmatpush1.msra.mxu0 0.0
      %570 = vmatprep.subr.mxu0 0.0
      %571 = vmatpush1.msra.mxu0 0.0
      %572 = vmatprep.subr.mxu0 0.0
      %573 = vmatpush1.msra.mxu0 0.0
      %574 = vmatprep.subr.mxu0 0.0
      %575 = vmatpush1.msra.mxu0 0.0
      %576 = vmatprep.subr.mxu0 0.0
      %577 = vmatpush1.msra.mxu0 0.0
      %578 = vmatprep.subr.mxu0 0.0
      %579 = vmatpush1.msra.mxu0 0.0
      %580 = vmatprep.subr.mxu0 0.0
      %581 = vmatpush1.msra.mxu0 0.0
      %582 = vmatprep.subr.mxu0 0.0
      %583 = vmatpush1.msra.mxu0 0.0
      %584 = vmatprep.subr.mxu0 0.0
      %585 = vmatpush1.msra.mxu0 0.0
      %586 = vmatprep.subr.mxu0 0.0
      %587 = vmatpush1.msra.mxu0 0.0
      %588 = vmatprep.subr.mxu0 0.0
      %589 = vmatpush1.msra.mxu0 0.0
      %590 = vmatprep.subr.mxu0 0.0
      %591 = vmatpush1.msra.mxu0 0.0
      %592 = vmatprep.subr.mxu0 0.0
      %593 = vmatpush1.msra.mxu0 0.0
      %594 = vmatprep.subr.mxu0 0.0
      %595 = vmatpush1.msra.mxu0 0.0
      %596 = vmatprep.subr.mxu0 0.0
      %597 = vmatpush1.msra.mxu0 0.0
      %598 = vmatprep.subr.mxu0 0.0
      %599 = vmatpush1.msra.mxu0 0.0
      %600 = vmatprep.subr.mxu0 0.0
      %601 = vmatpush1.msra.mxu0 0.0
      %602 = vmatprep.subr.mxu0 0.0
      %603 = vmatpush1.msra.mxu0 0.0
      %604 = vmatprep.subr.mxu0 0.0
      %605 = vmatpush1.msra.mxu0 0.0
      %606 = vmatprep.subr.mxu0 0.0
      %607 = vmatpush1.msra.mxu0 0.0
      %608 = vmatprep.mubr.f32.mxu0 0.0
      %609 = vmatmul.mubr.f32.gmra.mrb[0].mxu0 %v542
      %v610 = vpop.f32.mrb[0].mxu0
      %v611 = vadd.f32 0.0, %v610
      %v612 = vpop.f32.mrb[0].mxu0
      %613 = vdwg.mxu0
      %614 = vrot.lane.b32.xlu0 %v452, 120
      %v615 = vpop.permute.xlu0 %614
      %616 = vrot.lane.b32.xlu0 %v372, 120
      %v617 = vpop.permute.xlu0 %616
      %v618 = vsel %vm453, %v615, 0
      %v620 = vsel %vm453, %v617, 0
      %622 = vmatprep.subr.mxu0 0.0
      %623 = vmatpush1.xpose.msra.mxu0 %v620
      %624 = vmatprep.subr.mxu0 0.0
      %625 = vmatpush1.xpose.msra.mxu0 0.0
      %626 = vmatprep.subr.mxu0 0.0
      %627 = vmatpush1.xpose.msra.mxu0 0.0
      %628 = vmatprep.subr.mxu0 0.0
      %629 = vmatpush1.xpose.msra.mxu0 0.0
      %630 = vmatprep.subr.mxu0 0.0
      %631 = vmatpush1.xpose.msra.mxu0 0.0
      %632 = vmatprep.subr.mxu0 0.0
      %633 = vmatpush1.xpose.msra.mxu0 0.0
      %634 = vmatprep.subr.mxu0 0.0
      %635 = vmatpush1.xpose.msra.mxu0 0.0
      %636 = vmatprep.subr.mxu0 0.0
      %637 = vmatpush1.xpose.msra.mxu0 0.0
      %638 = vmatprep.subr.mxu0 0.0
      %639 = vmatpush1.xpose.msra.mxu0 0.0
      %640 = vmatprep.subr.mxu0 0.0
      %641 = vmatpush1.xpose.msra.mxu0 0.0
      %642 = vmatprep.subr.mxu0 0.0
      %643 = vmatpush1.xpose.msra.mxu0 0.0
      %644 = vmatprep.subr.mxu0 0.0
      %645 = vmatpush1.xpose.msra.mxu0 0.0
      %646 = vmatprep.subr.mxu0 0.0
      %647 = vmatpush1.xpose.msra.mxu0 0.0
      %648 = vmatprep.subr.mxu0 0.0
      %649 = vmatpush1.xpose.msra.mxu0 0.0
      %650 = vmatprep.subr.mxu0 0.0
      %651 = vmatpush1.xpose.msra.mxu0 0.0
      %652 = vmatprep.subr.mxu0 0.0
      %653 = vmatpush1.xpose.msra.mxu0 0.0
      %654 = vmatprep.subr.mxu0 0.0
      %655 = vmatpush1.xpose.msra.mxu0 0.0
      %656 = vmatprep.subr.mxu0 0.0
      %657 = vmatpush1.xpose.msra.mxu0 0.0
      %658 = vmatprep.subr.mxu0 0.0
      %659 = vmatpush1.xpose.msra.mxu0 0.0
      %660 = vmatprep.subr.mxu0 0.0
      %661 = vmatpush1.xpose.msra.mxu0 0.0
      %662 = vmatprep.subr.mxu0 0.0
      %663 = vmatpush1.xpose.msra.mxu0 0.0
      %664 = vmatprep.subr.mxu0 0.0
      %665 = vmatpush1.xpose.msra.mxu0 0.0
      %666 = vmatprep.subr.mxu0 0.0
      %667 = vmatpush1.xpose.msra.mxu0 0.0
      %668 = vmatprep.subr.mxu0 0.0
      %669 = vmatpush1.xpose.msra.mxu0 0.0
      %670 = vmatprep.subr.mxu0 0.0
      %671 = vmatpush1.xpose.msra.mxu0 0.0
      %672 = vmatprep.subr.mxu0 0.0
      %673 = vmatpush1.xpose.msra.mxu0 0.0
      %674 = vmatprep.subr.mxu0 0.0
      %675 = vmatpush1.xpose.msra.mxu0 0.0
      %676 = vmatprep.subr.mxu0 0.0
      %677 = vmatpush1.xpose.msra.mxu0 0.0
      %678 = vmatprep.subr.mxu0 0.0
      %679 = vmatpush1.xpose.msra.mxu0 0.0
      %680 = vmatprep.subr.mxu0 0.0
      %681 = vmatpush1.xpose.msra.mxu0 0.0
      %682 = vmatprep.subr.mxu0 0.0
      %683 = vmatpush1.xpose.msra.mxu0 0.0
      %684 = vmatprep.subr.mxu0 0.0
      %685 = vmatpush1.xpose.msra.mxu0 0.0
      %686 = vmatprep.mubr.f32.mxu0 0.0
      %687 = vmatmul.mubr.f32.gmra.mrb[0].mxu0 %v618
      %v688 = vpop.f32.mrb[0].mxu0
      %v689 = vadd.f32 0.0, %v688
      %v690 = vpop.f32.mrb[0].mxu0
      %691 = vdwg.mxu0
      %v692 = vsel %vm453, %v689, -inf
      %693 = vmax.xlane.f32.xlu0 %v692
      %v694 = vpop.xlane.xlu0 %693
      %v695 = vsub.f32 %v689, %v694
      %v696 = vmul.f32 %v695, 1.442695
      %v697 = vpow.pop %v696
      %v698 = vsel %vm453, %v697, 0.0
      %699 = vadd.xlane.f32.xlu0 %v698
      %v700 = vpop.xlane.xlu0 %699
      %v701 = vrcp.pop %v700
      %v702 = vmul.f32 %v697, %v701
      %704 = vrot.lane.b32.xlu0 %v449, 120
      %v705 = vpop.permute.xlu0 %704
      %v708 = vsel %vm453, %v702, 0
      %710 = vmatprep.subr.mxu0 0.0
      %711 = vmatpush1.msra.mxu0 %v705
      %712 = vmatprep.subr.mxu0 0.0
      %713 = vmatpush1.msra.mxu0 0.0
      %714 = vmatprep.subr.mxu0 0.0
      %715 = vmatpush1.msra.mxu0 0.0
      %716 = vmatprep.subr.mxu0 0.0
      %717 = vmatpush1.msra.mxu0 0.0
      %718 = vmatprep.subr.mxu0 0.0
      %719 = vmatpush1.msra.mxu0 0.0
      %720 = vmatprep.subr.mxu0 0.0
      %721 = vmatpush1.msra.mxu0 0.0
      %722 = vmatprep.subr.mxu0 0.0
      %723 = vmatpush1.msra.mxu0 0.0
      %724 = vmatprep.subr.mxu0 0.0
      %725 = vmatpush1.msra.mxu0 0.0
      %726 = vmatprep.subr.mxu0 0.0
      %727 = vmatpush1.msra.mxu0 0.0
      %728 = vmatprep.subr.mxu0 0.0
      %729 = vmatpush1.msra.mxu0 0.0
      %730 = vmatprep.subr.mxu0 0.0
      %731 = vmatpush1.msra.mxu0 0.0
      %732 = vmatprep.subr.mxu0 0.0
      %733 = vmatpush1.msra.mxu0 0.0
      %734 = vmatprep.subr.mxu0 0.0
      %735 = vmatpush1.msra.mxu0 0.0
      %736 = vmatprep.subr.mxu0 0.0
      %737 = vmatpush1.msra.mxu0 0.0
      %738 = vmatprep.subr.mxu0 0.0
      %739 = vmatpush1.msra.mxu0 0.0
      %740 = vmatprep.subr.mxu0 0.0
      %741 = vmatpush1.msra.mxu0 0.0
      %742 = vmatprep.subr.mxu0 0.0
      %743 = vmatpush1.msra.mxu0 0.0
      %744 = vmatprep.subr.mxu0 0.0
      %745 = vmatpush1.msra.mxu0 0.0
      %746 = vmatprep.subr.mxu0 0.0
      %747 = vmatpush1.msra.mxu0 0.0
      %748 = vmatprep.subr.mxu0 0.0
      %749 = vmatpush1.msra.mxu0 0.0
      %750 = vmatprep.subr.mxu0 0.0
      %751 = vmatpush1.msra.mxu0 0.0
      %752 = vmatprep.subr.mxu0 0.0
      %753 = vmatpush1.msra.mxu0 0.0
      %754 = vmatprep.subr.mxu0 0.0
      %755 = vmatpush1.msra.mxu0 0.0
      %756 = vmatprep.subr.mxu0 0.0
      %757 = vmatpush1.msra.mxu0 0.0
      %758 = vmatprep.subr.mxu0 0.0
      %759 = vmatpush1.msra.mxu0 0.0
      %760 = vmatprep.subr.mxu0 0.0
      %761 = vmatpush1.msra.mxu0 0.0
      %762 = vmatprep.subr.mxu0 0.0
      %763 = vmatpush1.msra.mxu0 0.0
      %764 = vmatprep.subr.mxu0 0.0
      %765 = vmatpush1.msra.mxu0 0.0
      %766 = vmatprep.subr.mxu0 0.0
      %767 = vmatpush1.msra.mxu0 0.0
      %768 = vmatprep.subr.mxu0 0.0
      %769 = vmatpush1.msra.mxu0 0.0
      %770 = vmatprep.subr.mxu0 0.0
      %771 = vmatpush1.msra.mxu0 0.0
      %772 = vmatprep.subr.mxu0 0.0
      %773 = vmatpush1.msra.mxu0 0.0
      %774 = vmatprep.mubr.f32.mxu0 0.0
      %775 = vmatmul.mubr.f32.gmra.mrb[0].mxu0 %v708
      %v776 = vpop.f32.mrb[0].mxu0
      %v777 = vadd.f32 0.0, %v776
      %v778 = vpop.f32.mrb[0].mxu0
      %779 = vdwg.mxu0
      %v781 = vsel %vm453, %v777, 0
      %783 = vmatprep.subr.mxu0 0.0
      %784 = vmatpush1.msra.mxu0 %v188
      %785 = vmatprep.subr.mxu0 0.0
      %786 = vmatpush1.msra.mxu0 0.0
      %787 = vmatprep.subr.mxu0 0.0
      %788 = vmatpush1.msra.mxu0 0.0
      %789 = vmatprep.subr.mxu0 0.0
      %790 = vmatpush1.msra.mxu0 0.0
      %791 = vmatprep.subr.mxu0 0.0
      %792 = vmatpush1.msra.mxu0 0.0
      %793 = vmatprep.subr.mxu0 0.0
      %794 = vmatpush1.msra.mxu0 0.0
      %795 = vmatprep.subr.mxu0 0.0
      %796 = vmatpush1.msra.mxu0 0.0
      %797 = vmatprep.subr.mxu0 0.0
      %798 = vmatpush1.msra.mxu0 0.0
      %799 = vmatprep.subr.mxu0 0.0
      %800 = vmatpush1.msra.mxu0 0.0
      %801 = vmatprep.subr.mxu0 0.0
      %802 = vmatpush1.msra.mxu0 0.0
      %803 = vmatprep.subr.mxu0 0.0
      %804 = vmatpush1.msra.mxu0 0.0
      %805 = vmatprep.subr.mxu0 0.0
      %806 = vmatpush1.msra.mxu0 0.0
      %807 = vmatprep.subr.mxu0 0.0
      %808 = vmatpush1.msra.mxu0 0.0
      %809 = vmatprep.subr.mxu0 0.0
      %810 = vmatpush1.msra.mxu0 0.0
      %811 = vmatprep.subr.mxu0 0.0
      %812 = vmatpush1.msra.mxu0 0.0
      %813 = vmatprep.subr.mxu0 0.0
      %814 = vmatpush1.msra.mxu0 0.0
      %815 = vmatprep.subr.mxu0 0.0
      %816 = vmatpush1.msra.mxu0 0.0
      %817 = vmatprep.subr.mxu0 0.0
      %818 = vmatpush1.msra.mxu0 0.0
      %819 = vmatprep.subr.mxu0 0.0
      %820 = vmatpush1.msra.mxu0 0.0
      %821 = vmatprep.subr.mxu0 0.0
      %822 = vmatpush1.msra.mxu0 0.0
      %823 = vmatprep.subr.mxu0 0.0
      %824 = vmatpush1.msra.mxu0 0.0
      %825 = vmatprep.subr.mxu0 0.0
      %826 = vmatpush1.msra.mxu0 0.0
      %827 = vmatprep.subr.mxu0 0.0
      %828 = vmatpush1.msra.mxu0 0.0
      %829 = vmatprep.subr.mxu0 0.0
      %830 = vmatpush1.msra.mxu0 0.0
      %831 = vmatprep.subr.mxu0 0.0
      %832 = vmatpush1.msra.mxu0 0.0
      %833 = vmatprep.subr.mxu0 0.0
      %834 = vmatpush1.msra.mxu0 0.0
      %835 = vmatprep.subr.mxu0 0.0
      %836 = vmatpush1.msra.mxu0 0.0
      %837 = vmatprep.subr.mxu0 0.0
      %838 = vmatpush1.msra.mxu0 0.0
      %839 = vmatprep.subr.mxu0 0.0
      %840 = vmatpush1.msra.mxu0 0.0
      %841 = vmatprep.subr.mxu0 0.0
      %842 = vmatpush1.msra.mxu0 0.0
      %843 = vmatprep.subr.mxu0 0.0
      %844 = vmatpush1.msra.mxu0 0.0
      %845 = vmatprep.subr.mxu0 0.0
      %846 = vmatpush1.msra.mxu0 0.0
      %847 = vmatprep.mubr.f32.mxu0 0.0
      %848 = vmatmul.mubr.f32.gmra.mrb[0].mxu0 %v781
      %v849 = vpop.f32.mrb[0].mxu0
      %v850 = vadd.f32 0.0, %v849
      %v851 = vpop.f32.mrb[0].mxu0
      %852 = vdwg.mxu0
      %853 = vrot.lane.b32.xlu0 %v452, 112
      %v854 = vpop.permute.xlu0 %853
      %855 = vrot.lane.b32.xlu0 %v372, 112
      %v856 = vpop.permute.xlu0 %855
      %v857 = vsel %vm453, %v854, 0
      %v859 = vsel %vm453, %v856, 0
      %861 = vmatprep.subr.mxu0 0.0
      %862 = vmatpush1.xpose.msra.mxu0 %v859
      %863 = vmatprep.subr.mxu0 0.0
      %864 = vmatpush1.xpose.msra.mxu0 0.0
      %865 = vmatprep.subr.mxu0 0.0
      %866 = vmatpush1.xpose.msra.mxu0 0.0
      %867 = vmatprep.subr.mxu0 0.0
      %868 = vmatpush1.xpose.msra.mxu0 0.0
      %869 = vmatprep.subr.mxu0 0.0
      %870 = vmatpush1.xpose.msra.mxu0 0.0
      %871 = vmatprep.subr.mxu0 0.0
      %872 = vmatpush1.xpose.msra.mxu0 0.0
      %873 = vmatprep.subr.mxu0 0.0
      %874 = vmatpush1.xpose.msra.mxu0 0.0
      %875 = vmatprep.subr.mxu0 0.0
      %876 = vmatpush1.xpose.msra.mxu0 0.0
      %877 = vmatprep.subr.mxu0 0.0
      %878 = vmatpush1.xpose.msra.mxu0 0.0
      %879 = vmatprep.subr.mxu0 0.0
      %880 = vmatpush1.xpose.msra.mxu0 0.0
      %881 = vmatprep.subr.mxu0 0.0
      %882 = vmatpush1.xpose.msra.mxu0 0.0
      %883 = vmatprep.subr.mxu0 0.0
      %884 = vmatpush1.xpose.msra.mxu0 0.0
      %885 = vmatprep.subr.mxu0 0.0
      %886 = vmatpush1.xpose.msra.mxu0 0.0
      %887 = vmatprep.subr.mxu0 0.0
      %888 = vmatpush1.xpose.msra.mxu0 0.0
      %889 = vmatprep.subr.mxu0 0.0
      %890 = vmatpush1.xpose.msra.mxu0 0.0
      %891 = vmatprep.subr.mxu0 0.0
      %892 = vmatpush1.xpose.msra.mxu0 0.0
      %893 = vmatprep.subr.mxu0 0.0
      %894 = vmatpush1.xpose.msra.mxu0 0.0
      %895 = vmatprep.subr.mxu0 0.0
      %896 = vmatpush1.xpose.msra.mxu0 0.0
      %897 = vmatprep.subr.mxu0 0.0
      %898 = vmatpush1.xpose.msra.mxu0 0.0
      %899 = vmatprep.subr.mxu0 0.0
      %900 = vmatpush1.xpose.msra.mxu0 0.0
      %901 = vmatprep.subr.mxu0 0.0
      %902 = vmatpush1.xpose.msra.mxu0 0.0
      %903 = vmatprep.subr.mxu0 0.0
      %904 = vmatpush1.xpose.msra.mxu0 0.0
      %905 = vmatprep.subr.mxu0 0.0
      %906 = vmatpush1.xpose.msra.mxu0 0.0
      %907 = vmatprep.subr.mxu0 0.0
      %908 = vmatpush1.xpose.msra.mxu0 0.0
      %909 = vmatprep.subr.mxu0 0.0
      %910 = vmatpush1.xpose.msra.mxu0 0.0
      %911 = vmatprep.subr.mxu0 0.0
      %912 = vmatpush1.xpose.msra.mxu0 0.0
      %913 = vmatprep.subr.mxu0 0.0
      %914 = vmatpush1.xpose.msra.mxu0 0.0
      %915 = vmatprep.subr.mxu0 0.0
      %916 = vmatpush1.xpose.msra.mxu0 0.0
      %917 = vmatprep.subr.mxu0 0.0
      %918 = vmatpush1.xpose.msra.mxu0 0.0
      %919 = vmatprep.subr.mxu0 0.0
      %920 = vmatpush1.xpose.msra.mxu0 0.0
      %921 = vmatprep.subr.mxu0 0.0
      %922 = vmatpush1.xpose.msra.mxu0 0.0
      %923 = vmatprep.subr.mxu0 0.0
      %924 = vmatpush1.xpose.msra.mxu0 0.0
      %925 = vmatprep.mubr.f32.mxu0 0.0
      %926 = vmatmul.mubr.f32.gmra.mrb[0].mxu0 %v857
      %v927 = vpop.f32.mrb[0].mxu0
      %v928 = vadd.f32 0.0, %v927
      %v929 = vpop.f32.mrb[0].mxu0
      %930 = vdwg.mxu0
      %v931 = vsel %vm453, %v928, -inf
      %932 = vmax.xlane.f32.xlu0 %v931
      %v933 = vpop.xlane.xlu0 %932
      %v934 = vsub.f32 %v928, %v933
      %v935 = vmul.f32 %v934, 1.442695
      %v936 = vpow.pop %v935
      %v937 = vsel %vm453, %v936, 0.0
      %938 = vadd.xlane.f32.xlu0 %v937
      %v939 = vpop.xlane.xlu0 %938
      %v940 = vrcp.pop %v939
      %v941 = vmul.f32 %v936, %v940
      %942 = vrot.lane.b32.xlu0 %v449, 112
      %v943 = vpop.permute.xlu0 %942
      %v946 = vsel %vm453, %v941, 0
      %948 = vmatprep.subr.mxu0 0.0
      %949 = vmatpush1.msra.mxu0 %v943
      %950 = vmatprep.subr.mxu0 0.0
      %951 = vmatpush1.msra.mxu0 0.0
      %952 = vmatprep.subr.mxu0 0.0
      %953 = vmatpush1.msra.mxu0 0.0
      %954 = vmatprep.subr.mxu0 0.0
      %955 = vmatpush1.msra.mxu0 0.0
      %956 = vmatprep.subr.mxu0 0.0
      %957 = vmatpush1.msra.mxu0 0.0
      %958 = vmatprep.subr.mxu0 0.0
      %959 = vmatpush1.msra.mxu0 0.0
      %960 = vmatprep.subr.mxu0 0.0
      %961 = vmatpush1.msra.mxu0 0.0
      %962 = vmatprep.subr.mxu0 0.0
      %963 = vmatpush1.msra.mxu0 0.0
      %964 = vmatprep.subr.mxu0 0.0
      %965 = vmatpush1.msra.mxu0 0.0
      %966 = vmatprep.subr.mxu0 0.0
      %967 = vmatpush1.msra.mxu0 0.0
      %968 = vmatprep.subr.mxu0 0.0
      %969 = vmatpush1.msra.mxu0 0.0
      %970 = vmatprep.subr.mxu0 0.0
      %971 = vmatpush1.msra.mxu0 0.0
      %972 = vmatprep.subr.mxu0 0.0
      %973 = vmatpush1.msra.mxu0 0.0
      %974 = vmatprep.subr.mxu0 0.0
      %975 = vmatpush1.msra.mxu0 0.0
      %976 = vmatprep.subr.mxu0 0.0
      %977 = vmatpush1.msra.mxu0 0.0
      %978 = vmatprep.subr.mxu0 0.0
      %979 = vmatpush1.msra.mxu0 0.0
      %980 = vmatprep.subr.mxu0 0.0
      %981 = vmatpush1.msra.mxu0 0.0
      %982 = vmatprep.subr.mxu0 0.0
      %983 = vmatpush1.msra.mxu0 0.0
      %984 = vmatprep.subr.mxu0 0.0
      %985 = vmatpush1.msra.mxu0 0.0
      %986 = vmatprep.subr.mxu0 0.0
      %987 = vmatpush1.msra.mxu0 0.0
      %988 = vmatprep.subr.mxu0 0.0
      %989 = vmatpush1.msra.mxu0 0.0
      %990 = vmatprep.subr.mxu0 0.0
      %991 = vmatpush1.msra.mxu0 0.0
      %992 = vmatprep.subr.mxu0 0.0
      %993 = vmatpush1.msra.mxu0 0.0
      %994 = vmatprep.subr.mxu0 0.0
      %995 = vmatpush1.msra.mxu0 0.0
      %996 = vmatprep.subr.mxu0 0.0
      %997 = vmatpush1.msra.mxu0 0.0
      %998 = vmatprep.subr.mxu0 0.0
      %999 = vmatpush1.msra.mxu0 0.0
      %1000 = vmatprep.subr.mxu0 0.0
      %1001 = vmatpush1.msra.mxu0 0.0
      %1002 = vmatprep.subr.mxu0 0.0
      %1003 = vmatpush1.msra.mxu0 0.0
      %1004 = vmatprep.subr.mxu0 0.0
      %1005 = vmatpush1.msra.mxu0 0.0
      %1006 = vmatprep.subr.mxu0 0.0
      %1007 = vmatpush1.msra.mxu0 0.0
      %1008 = vmatprep.subr.mxu0 0.0
      %1009 = vmatpush1.msra.mxu0 0.0
      %1010 = vmatprep.subr.mxu0 0.0
      %1011 = vmatpush1.msra.mxu0 0.0
      %1012 = vmatprep.mubr.f32.mxu0 0.0
      %1013 = vmatmul.mubr.f32.gmra.mrb[0].mxu0 %v946
      %v1014 = vpop.f32.mrb[0].mxu0
      %v1015 = vadd.f32 0.0, %v1014
      %v1016 = vpop.f32.mrb[0].mxu0
      %1017 = vdwg.mxu0
      %1018 = vrot.lane.b32.xlu0 %v452, 104
      %v1019 = vpop.permute.xlu0 %1018
      %1020 = vrot.lane.b32.xlu0 %v372, 104
      %v1021 = vpop.permute.xlu0 %1020
      %v1022 = vsel %vm453, %v1019, 0
      %v1024 = vsel %vm453, %v1021, 0
      %1026 = vmatprep.subr.mxu0 0.0
      %1027 = vmatpush1.xpose.msra.mxu0 %v1024
      %1028 = vmatprep.subr.mxu0 0.0
      %1029 = vmatpush1.xpose.msra.mxu0 0.0
      %1030 = vmatprep.subr.mxu0 0.0
      %1031 = vmatpush1.xpose.msra.mxu0 0.0
      %1032 = vmatprep.subr.mxu0 0.0
      %1033 = vmatpush1.xpose.msra.mxu0 0.0
      %1034 = vmatprep.subr.mxu0 0.0
      %1035 = vmatpush1.xpose.msra.mxu0 0.0
      %1036 = vmatprep.subr.mxu0 0.0
      %1037 = vmatpush1.xpose.msra.mxu0 0.0
      %1038 = vmatprep.subr.mxu0 0.0
      %1039 = vmatpush1.xpose.msra.mxu0 0.0
      %1040 = vmatprep.subr.mxu0 0.0
      %1041 = vmatpush1.xpose.msra.mxu0 0.0
      %1042 = vmatprep.subr.mxu0 0.0
      %1043 = vmatpush1.xpose.msra.mxu0 0.0
      %1044 = vmatprep.subr.mxu0 0.0
      %1045 = vmatpush1.xpose.msra.mxu0 0.0
      %1046 = vmatprep.subr.mxu0 0.0
      %1047 = vmatpush1.xpose.msra.mxu0 0.0
      %1048 = vmatprep.subr.mxu0 0.0
      %1049 = vmatpush1.xpose.msra.mxu0 0.0
      %1050 = vmatprep.subr.mxu0 0.0
      %1051 = vmatpush1.xpose.msra.mxu0 0.0
      %1052 = vmatprep.subr.mxu0 0.0
      %1053 = vmatpush1.xpose.msra.mxu0 0.0
      %1054 = vmatprep.subr.mxu0 0.0
      %1055 = vmatpush1.xpose.msra.mxu0 0.0
      %1056 = vmatprep.subr.mxu0 0.0
      %1057 = vmatpush1.xpose.msra.mxu0 0.0
      %1058 = vmatprep.subr.mxu0 0.0
      %1059 = vmatpush1.xpose.msra.mxu0 0.0
      %1060 = vmatprep.subr.mxu0 0.0
      %1061 = vmatpush1.xpose.msra.mxu0 0.0
      %1062 = vmatprep.subr.mxu0 0.0
      %1063 = vmatpush1.xpose.msra.mxu0 0.0
      %1064 = vmatprep.subr.mxu0 0.0
      %1065 = vmatpush1.xpose.msra.mxu0 0.0
      %1066 = vmatprep.subr.mxu0 0.0
      %1067 = vmatpush1.xpose.msra.mxu0 0.0
      %1068 = vmatprep.subr.mxu0 0.0
      %1069 = vmatpush1.xpose.msra.mxu0 0.0
      %1070 = vmatprep.subr.mxu0 0.0
      %1071 = vmatpush1.xpose.msra.mxu0 0.0
      %1072 = vmatprep.subr.mxu0 0.0
      %1073 = vmatpush1.xpose.msra.mxu0 0.0
      %1074 = vmatprep.subr.mxu0 0.0
      %1075 = vmatpush1.xpose.msra.mxu0 0.0
      %1076 = vmatprep.subr.mxu0 0.0
      %1077 = vmatpush1.xpose.msra.mxu0 0.0
      %1078 = vmatprep.subr.mxu0 0.0
      %1079 = vmatpush1.xpose.msra.mxu0 0.0
      %1080 = vmatprep.subr.mxu0 0.0
      %1081 = vmatpush1.xpose.msra.mxu0 0.0
      %1082 = vmatprep.subr.mxu0 0.0
      %1083 = vmatpush1.xpose.msra.mxu0 0.0
      %1084 = vmatprep.subr.mxu0 0.0
      %1085 = vmatpush1.xpose.msra.mxu0 0.0
      %1086 = vmatprep.subr.mxu0 0.0
      %1087 = vmatpush1.xpose.msra.mxu0 0.0
      %1088 = vmatprep.subr.mxu0 0.0
      %1089 = vmatpush1.xpose.msra.mxu0 0.0
      %1090 = vmatprep.mubr.f32.mxu0 0.0
      %1091 = vmatmul.mubr.f32.gmra.mrb[0].mxu0 %v1022
      %v1092 = vpop.f32.mrb[0].mxu0
      %v1093 = vadd.f32 0.0, %v1092
      %v1094 = vpop.f32.mrb[0].mxu0
      %1095 = vdwg.mxu0
      %v1096 = vsel %vm453, %v1093, -inf
      %1097 = vmax.xlane.f32.xlu0 %v1096
      %v1098 = vpop.xlane.xlu0 %1097
      %v1099 = vsub.f32 %v1093, %v1098
      %v1100 = vmul.f32 %v1099, 1.442695
      %v1101 = vpow.pop %v1100
      %v1102 = vsel %vm453, %v1101, 0.0
      %1103 = vadd.xlane.f32.xlu0 %v1102
      %v1104 = vpop.xlane.xlu0 %1103
      %v1105 = vrcp.pop %v1104
      %v1106 = vmul.f32 %v1101, %v1105
      %1107 = vrot.lane.b32.xlu0 %v449, 104
      %v1108 = vpop.permute.xlu0 %1107
      %v1111 = vsel %vm453, %v1106, 0
      %1113 = vmatprep.subr.mxu0 0.0
      %1114 = vmatpush1.msra.mxu0 %v1108
      %1115 = vmatprep.subr.mxu0 0.0
      %1116 = vmatpush1.msra.mxu0 0.0
      %1117 = vmatprep.subr.mxu0 0.0
      %1118 = vmatpush1.msra.mxu0 0.0
      %1119 = vmatprep.subr.mxu0 0.0
      %1120 = vmatpush1.msra.mxu0 0.0
      %1121 = vmatprep.subr.mxu0 0.0
      %1122 = vmatpush1.msra.mxu0 0.0
      %1123 = vmatprep.subr.mxu0 0.0
      %1124 = vmatpush1.msra.mxu0 0.0
      %1125 = vmatprep.subr.mxu0 0.0
      %1126 = vmatpush1.msra.mxu0 0.0
      %1127 = vmatprep.subr.mxu0 0.0
      %1128 = vmatpush1.msra.mxu0 0.0
      %1129 = vmatprep.subr.mxu0 0.0
      %1130 = vmatpush1.msra.mxu0 0.0
      %1131 = vmatprep.subr.mxu0 0.0
      %1132 = vmatpush1.msra.mxu0 0.0
      %1133 = vmatprep.subr.mxu0 0.0
      %1134 = vmatpush1.msra.mxu0 0.0
      %1135 = vmatprep.subr.mxu0 0.0
      %1136 = vmatpush1.msra.mxu0 0.0
      %1137 = vmatprep.subr.mxu0 0.0
      %1138 = vmatpush1.msra.mxu0 0.0
      %1139 = vmatprep.subr.mxu0 0.0
      %1140 = vmatpush1.msra.mxu0 0.0
      %1141 = vmatprep.subr.mxu0 0.0
      %1142 = vmatpush1.msra.mxu0 0.0
      %1143 = vmatprep.subr.mxu0 0.0
      %1144 = vmatpush1.msra.mxu0 0.0
      %1145 = vmatprep.subr.mxu0 0.0
      %1146 = vmatpush1.msra.mxu0 0.0
      %1147 = vmatprep.subr.mxu0 0.0
      %1148 = vmatpush1.msra.mxu0 0.0
      %1149 = vmatprep.subr.mxu0 0.0
      %1150 = vmatpush1.msra.mxu0 0.0
      %1151 = vmatprep.subr.mxu0 0.0
      %1152 = vmatpush1.msra.mxu0 0.0
      %1153 = vmatprep.subr.mxu0 0.0
      %1154 = vmatpush1.msra.mxu0 0.0
      %1155 = vmatprep.subr.mxu0 0.0
      %1156 = vmatpush1.msra.mxu0 0.0
      %1157 = vmatprep.subr.mxu0 0.0
      %1158 = vmatpush1.msra.mxu0 0.0
      %1159 = vmatprep.subr.mxu0 0.0
      %1160 = vmatpush1.msra.mxu0 0.0
      %1161 = vmatprep.subr.mxu0 0.0
      %1162 = vmatpush1.msra.mxu0 0.0
      %1163 = vmatprep.subr.mxu0 0.0
      %1164 = vmatpush1.msra.mxu0 0.0
      %1165 = vmatprep.subr.mxu0 0.0
      %1166 = vmatpush1.msra.mxu0 0.0
      %1167 = vmatprep.subr.mxu0 0.0
      %1168 = vmatpush1.msra.mxu0 0.0
      %1169 = vmatprep.subr.mxu0 0.0
      %1170 = vmatpush1.msra.mxu0 0.0
      %1171 = vmatprep.subr.mxu0 0.0
      %1172 = vmatpush1.msra.mxu0 0.0
      %1173 = vmatprep.subr.mxu0 0.0
      %1174 = vmatpush1.msra.mxu0 0.0
      %1175 = vmatprep.subr.mxu0 0.0
      %1176 = vmatpush1.msra.mxu0 0.0
      %1177 = vmatprep.mubr.f32.mxu0 0.0
      %1178 = vmatmul.mubr.f32.gmra.mrb[0].mxu0 %v1111
      %v1179 = vpop.f32.mrb[0].mxu0
      %v1180 = vadd.f32 0.0, %v1179
      %v1181 = vpop.f32.mrb[0].mxu0
      %1182 = vdwg.mxu0
      %v1184 = vsel %vm453, %v1180, 0
      %1186 = vmatprep.subr.mxu0 0.0
      %1187 = vmatpush1.msra.mxu0 %v190
      %1188 = vmatprep.subr.mxu0 0.0
      %1189 = vmatpush1.msra.mxu0 0.0
      %1190 = vmatprep.subr.mxu0 0.0
      %1191 = vmatpush1.msra.mxu0 0.0
      %1192 = vmatprep.subr.mxu0 0.0
      %1193 = vmatpush1.msra.mxu0 0.0
      %1194 = vmatprep.subr.mxu0 0.0
      %1195 = vmatpush1.msra.mxu0 0.0
      %1196 = vmatprep.subr.mxu0 0.0
      %1197 = vmatpush1.msra.mxu0 0.0
      %1198 = vmatprep.subr.mxu0 0.0
      %1199 = vmatpush1.msra.mxu0 0.0
      %1200 = vmatprep.subr.mxu0 0.0
      %1201 = vmatpush1.msra.mxu0 0.0
      %1202 = vmatprep.subr.mxu0 0.0
      %1203 = vmatpush1.msra.mxu0 0.0
      %1204 = vmatprep.subr.mxu0 0.0
      %1205 = vmatpush1.msra.mxu0 0.0
      %1206 = vmatprep.subr.mxu0 0.0
      %1207 = vmatpush1.msra.mxu0 0.0
      %1208 = vmatprep.subr.mxu0 0.0
      %1209 = vmatpush1.msra.mxu0 0.0
      %1210 = vmatprep.subr.mxu0 0.0
      %1211 = vmatpush1.msra.mxu0 0.0
      %1212 = vmatprep.subr.mxu0 0.0
      %1213 = vmatpush1.msra.mxu0 0.0
      %1214 = vmatprep.subr.mxu0 0.0
      %1215 = vmatpush1.msra.mxu0 0.0
      %1216 = vmatprep.subr.mxu0 0.0
      %1217 = vmatpush1.msra.mxu0 0.0
      %1218 = vmatprep.subr.mxu0 0.0
      %1219 = vmatpush1.msra.mxu0 0.0
      %1220 = vmatprep.subr.mxu0 0.0
      %1221 = vmatpush1.msra.mxu0 0.0
      %1222 = vmatprep.subr.mxu0 0.0
      %1223 = vmatpush1.msra.mxu0 0.0
      %1224 = vmatprep.subr.mxu0 0.0
      %1225 = vmatpush1.msra.mxu0 0.0
      %1226 = vmatprep.subr.mxu0 0.0
      %1227 = vmatpush1.msra.mxu0 0.0
      %1228 = vmatprep.subr.mxu0 0.0
      %1229 = vmatpush1.msra.mxu0 0.0
      %1230 = vmatprep.subr.mxu0 0.0
      %1231 = vmatpush1.msra.mxu0 0.0
      %1232 = vmatprep.subr.mxu0 0.0
      %1233 = vmatpush1.msra.mxu0 0.0
      %1234 = vmatprep.subr.mxu0 0.0
      %1235 = vmatpush1.msra.mxu0 0.0
      %1236 = vmatprep.subr.mxu0 0.0
      %1237 = vmatpush1.msra.mxu0 0.0
      %1238 = vmatprep.subr.mxu0 0.0
      %1239 = vmatpush1.msra.mxu0 0.0
      %1240 = vmatprep.subr.mxu0 0.0
      %1241 = vmatpush1.msra.mxu0 0.0
      %1242 = vmatprep.subr.mxu0 0.0
      %1243 = vmatpush1.msra.mxu0 0.0
      %1244 = vmatprep.subr.mxu0 0.0
      %1245 = vmatpush1.msra.mxu0 0.0
      %1246 = vmatprep.subr.mxu0 0.0
      %1247 = vmatpush1.msra.mxu0 0.0
      %1248 = vmatprep.subr.mxu0 0.0
      %1249 = vmatpush1.msra.mxu0 0.0
      %1250 = vmatprep.mubr.f32.mxu0 0.0
      %1251 = vmatmul.mubr.f32.gmra.mrb[0].mxu0 %v1184
      %v1252 = vpop.f32.mrb[0].mxu0
      %v1253 = vadd.f32 0.0, %v1252
      %v1254 = vpop.f32.mrb[0].mxu0
      %1255 = vdwg.mxu0
      %v1257 = vsel %vm453, %v611, 0
      %1259 = vmatprep.subr.mxu0 0.0
      %1260 = vmatpush1.msra.mxu0 %v187
      %1261 = vmatprep.subr.mxu0 0.0
      %1262 = vmatpush1.msra.mxu0 0.0
      %1263 = vmatprep.subr.mxu0 0.0
      %1264 = vmatpush1.msra.mxu0 0.0
      %1265 = vmatprep.subr.mxu0 0.0
      %1266 = vmatpush1.msra.mxu0 0.0
      %1267 = vmatprep.subr.mxu0 0.0
      %1268 = vmatpush1.msra.mxu0 0.0
      %1269 = vmatprep.subr.mxu0 0.0
      %1270 = vmatpush1.msra.mxu0 0.0
      %1271 = vmatprep.subr.mxu0 0.0
      %1272 = vmatpush1.msra.mxu0 0.0
      %1273 = vmatprep.subr.mxu0 0.0
      %1274 = vmatpush1.msra.mxu0 0.0
      %1275 = vmatprep.subr.mxu0 0.0
      %1276 = vmatpush1.msra.mxu0 0.0
      %1277 = vmatprep.subr.mxu0 0.0
      %1278 = vmatpush1.msra.mxu0 0.0
      %1279 = vmatprep.subr.mxu0 0.0
      %1280 = vmatpush1.msra.mxu0 0.0
      %1281 = vmatprep.subr.mxu0 0.0
      %1282 = vmatpush1.msra.mxu0 0.0
      %1283 = vmatprep.subr.mxu0 0.0
      %1284 = vmatpush1.msra.mxu0 0.0
      %1285 = vmatprep.subr.mxu0 0.0
      %1286 = vmatpush1.msra.mxu0 0.0
      %1287 = vmatprep.subr.mxu0 0.0
      %1288 = vmatpush1.msra.mxu0 0.0
      %1289 = vmatprep.subr.mxu0 0.0
      %1290 = vmatpush1.msra.mxu0 0.0
      %1291 = vmatprep.subr.mxu0 0.0
      %1292 = vmatpush1.msra.mxu0 0.0
      %1293 = vmatprep.subr.mxu0 0.0
      %1294 = vmatpush1.msra.mxu0 0.0
      %1295 = vmatprep.subr.mxu0 0.0
      %1296 = vmatpush1.msra.mxu0 0.0
      %1297 = vmatprep.subr.mxu0 0.0
      %1298 = vmatpush1.msra.mxu0 0.0
      %1299 = vmatprep.subr.mxu0 0.0
      %1300 = vmatpush1.msra.mxu0 0.0
      %1301 = vmatprep.subr.mxu0 0.0
      %1302 = vmatpush1.msra.mxu0 0.0
      %1303 = vmatprep.subr.mxu0 0.0
      %1304 = vmatpush1.msra.mxu0 0.0
      %1305 = vmatprep.subr.mxu0 0.0
      %1306 = vmatpush1.msra.mxu0 0.0
      %1307 = vmatprep.subr.mxu0 0.0
      %1308 = vmatpush1.msra.mxu0 0.0
      %1309 = vmatprep.subr.mxu0 0.0
      %1310 = vmatpush1.msra.mxu0 0.0
      %1311 = vmatprep.subr.mxu0 0.0
      %1312 = vmatpush1.msra.mxu0 0.0
      %1313 = vmatprep.subr.mxu0 0.0
      %1314 = vmatpush1.msra.mxu0 0.0
      %1315 = vmatprep.subr.mxu0 0.0
      %1316 = vmatpush1.msra.mxu0 0.0
      %1317 = vmatprep.subr.mxu0 0.0
      %1318 = vmatpush1.msra.mxu0 0.0
      %1319 = vmatprep.subr.mxu0 0.0
      %1320 = vmatpush1.msra.mxu0 0.0
      %1321 = vmatprep.subr.mxu0 0.0
      %1322 = vmatpush1.msra.mxu0 0.0
      %1323 = vmatprep.mubr.f32.mxu0 0.0
      %1324 = vmatmul.mubr.f32.gmra.mrb[0].mxu0 %v1257
      %v1325 = vpop.f32.mrb[0].mxu0
      %v1326 = vadd.f32 %v850, %v1325
      %v1327 = vpop.f32.mrb[0].mxu0
      %1328 = vdwg.mxu0
      %v1330 = vsel %vm453, %v1015, 0
      %1332 = vmatprep.subr.mxu0 0.0
      %1333 = vmatpush1.msra.mxu0 %v189
      %1334 = vmatprep.subr.mxu0 0.0
      %1335 = vmatpush1.msra.mxu0 0.0
      %1336 = vmatprep.subr.mxu0 0.0
      %1337 = vmatpush1.msra.mxu0 0.0
      %1338 = vmatprep.subr.mxu0 0.0
      %1339 = vmatpush1.msra.mxu0 0.0
      %1340 = vmatprep.subr.mxu0 0.0
      %1341 = vmatpush1.msra.mxu0 0.0
      %1342 = vmatprep.subr.mxu0 0.0
      %1343 = vmatpush1.msra.mxu0 0.0
      %1344 = vmatprep.subr.mxu0 0.0
      %1345 = vmatpush1.msra.mxu0 0.0
      %1346 = vmatprep.subr.mxu0 0.0
      %1347 = vmatpush1.msra.mxu0 0.0
      %1348 = vmatprep.subr.mxu0 0.0
      %1349 = vmatpush1.msra.mxu0 0.0
      %1350 = vmatprep.subr.mxu0 0.0
      %1351 = vmatpush1.msra.mxu0 0.0
      %1352 = vmatprep.subr.mxu0 0.0
      %1353 = vmatpush1.msra.mxu0 0.0
      %1354 = vmatprep.subr.mxu0 0.0
      %1355 = vmatpush1.msra.mxu0 0.0
      %1356 = vmatprep.subr.mxu0 0.0
      %1357 = vmatpush1.msra.mxu0 0.0
      %1358 = vmatprep.subr.mxu0 0.0
      %1359 = vmatpush1.msra.mxu0 0.0
      %1360 = vmatprep.subr.mxu0 0.0
      %1361 = vmatpush1.msra.mxu0 0.0
      %1362 = vmatprep.subr.mxu0 0.0
      %1363 = vmatpush1.msra.mxu0 0.0
      %1364 = vmatprep.subr.mxu0 0.0
      %1365 = vmatpush1.msra.mxu0 0.0
      %1366 = vmatprep.subr.mxu0 0.0
      %1367 = vmatpush1.msra.mxu0 0.0
      %1368 = vmatprep.subr.mxu0 0.0
      %1369 = vmatpush1.msra.mxu0 0.0
      %1370 = vmatprep.subr.mxu0 0.0
      %1371 = vmatpush1.msra.mxu0 0.0
      %1372 = vmatprep.subr.mxu0 0.0
      %1373 = vmatpush1.msra.mxu0 0.0
      %1374 = vmatprep.subr.mxu0 0.0
      %1375 = vmatpush1.msra.mxu0 0.0
      %1376 = vmatprep.subr.mxu0 0.0
      %1377 = vmatpush1.msra.mxu0 0.0
      %1378 = vmatprep.subr.mxu0 0.0
      %1379 = vmatpush1.msra.mxu0 0.0
      %1380 = vmatprep.subr.mxu0 0.0
      %1381 = vmatpush1.msra.mxu0 0.0
      %1382 = vmatprep.subr.mxu0 0.0
      %1383 = vmatpush1.msra.mxu0 0.0
      %1384 = vmatprep.subr.mxu0 0.0
      %1385 = vmatpush1.msra.mxu0 0.0
      %1386 = vmatprep.subr.mxu0 0.0
      %1387 = vmatpush1.msra.mxu0 0.0
      %1388 = vmatprep.subr.mxu0 0.0
      %1389 = vmatpush1.msra.mxu0 0.0
      %1390 = vmatprep.subr.mxu0 0.0
      %1391 = vmatpush1.msra.mxu0 0.0
      %1392 = vmatprep.subr.mxu0 0.0
      %1393 = vmatpush1.msra.mxu0 0.0
      %1394 = vmatprep.subr.mxu0 0.0
      %1395 = vmatpush1.msra.mxu0 0.0
      %1396 = vmatprep.mubr.f32.mxu0 0.0
      %1397 = vmatmul.mubr.f32.gmra.mrb[0].mxu0 %v1330
      %v1398 = vpop.f32.mrb[0].mxu0
      %v1399 = vadd.f32 %v1253, %v1398
      %v1400 = vpop.f32.mrb[0].mxu0
      %1401 = vdwg.mxu0
      %v1402 = vadd.f32 %v1326, %v1399
      %v1403 = vlaneseq
      %v1404 = vshrl.u32 %v1403, 7
      %v1405 = vsub.s32 3, %v1404
      %v1406 = vrot.slane %v215, %v1405
      %v1407 = vadd.f32 %v1402, %v1406
      %v1408 = vadd.f32 %v169, %v1407
      %v1409 = vsel %vm227, %v1408, 0.0
      %1410 = vadd.xlane.f32.xlu0 %v1409
      %v1411 = vpop.xlane.xlu0 %1410
      %v1412 = vrcp.pop 32.0
      %v1413 = vmul.f32 %v1411, %v1412
      %v1414 = vsub.f32 %v1408, %v1413
      %v1415 = vmul.f32 %v1414, %v1414
      %v1416 = vsel %vm227, %v1415, 0.0
      %1417 = vadd.xlane.f32.xlu0 %v1416
      %v1418 = vpop.xlane.xlu0 %1417
      %v1419 = vmul.f32 %v1418, %v1412
      %v1420 = vadd.f32 %v1419, 1e-05
      %v1421 = vrsqrt.pop %v1420
      %v1422 = vmul.f32 %v1414, %v1421
      %v1423 = vlaneseq
      %v1424 = vshrl.u32 %v1423, 7
      %v1425 = vsub.s32 1, %v1424
      %v1426 = vrot.slane %v216, %v1425
      %v1427 = vmul.f32 %v1422, %v1426
      %v1428 = vlaneseq
      %v1429 = vshrl.u32 %v1428, 7
      %v1430 = vsub.s32 2, %v1429
      %v1431 = vrot.slane %v216, %v1430
      %v1432 = vadd.f32 %v1427, %v1431
      %v1433 = vadd.f32 %v1432, %v170
      %v1434 = vlaneseq
      %v1435 = vshrl.u32 %v1434, 7
      %v1436 = vsub.s32 4, %v1435
      %v1437 = vrot.slane %v215, %v1436
      %v1439 = vsel %vm227, %v1433, 0
      %1441 = vmatprep.subr.mxu0 0.0
      %1442 = vmatpush1.msra.mxu0 %v191
      %1443 = vmatprep.subr.mxu0 0.0
      %1444 = vmatpush1.msra.mxu0 %v192
      %1445 = vmatprep.subr.mxu0 0.0
      %1446 = vmatpush1.msra.mxu0 %v193
      %1447 = vmatprep.subr.mxu0 0.0
      %1448 = vmatpush1.msra.mxu0 %v194
      %1449 = vmatprep.subr.mxu0 0.0
      %1450 = vmatpush1.msra.mxu0 0.0
      %1451 = vmatprep.subr.mxu0 0.0
      %1452 = vmatpush1.msra.mxu0 0.0
      %1453 = vmatprep.subr.mxu0 0.0
      %1454 = vmatpush1.msra.mxu0 0.0
      %1455 = vmatprep.subr.mxu0 0.0
      %1456 = vmatpush1.msra.mxu0 0.0
      %1457 = vmatprep.subr.mxu0 0.0
      %1458 = vmatpush1.msra.mxu0 0.0
      %1459 = vmatprep.subr.mxu0 0.0
      %1460 = vmatpush1.msra.mxu0 0.0
      %1461 = vmatprep.subr.mxu0 0.0
      %1462 = vmatpush1.msra.mxu0 0.0
      %1463 = vmatprep.subr.mxu0 0.0
      %1464 = vmatpush1.msra.mxu0 0.0
      %1465 = vmatprep.subr.mxu0 0.0
      %1466 = vmatpush1.msra.mxu0 0.0
      %1467 = vmatprep.subr.mxu0 0.0
      %1468 = vmatpush1.msra.mxu0 0.0
      %1469 = vmatprep.subr.mxu0 0.0
      %1470 = vmatpush1.msra.mxu0 0.0
      %1471 = vmatprep.subr.mxu0 0.0
      %1472 = vmatpush1.msra.mxu0 0.0
      %1473 = vmatprep.subr.mxu0 0.0
      %1474 = vmatpush1.msra.mxu0 0.0
      %1475 = vmatprep.subr.mxu0 0.0
      %1476 = vmatpush1.msra.mxu0 0.0
      %1477 = vmatprep.subr.mxu0 0.0
      %1478 = vmatpush1.msra.mxu0 0.0
      %1479 = vmatprep.subr.mxu0 0.0
      %1480 = vmatpush1.msra.mxu0 0.0
      %1481 = vmatprep.subr.mxu0 0.0
      %1482 = vmatpush1.msra.mxu0 0.0
      %1483 = vmatprep.subr.mxu0 0.0
      %1484 = vmatpush1.msra.mxu0 0.0
      %1485 = vmatprep.subr.mxu0 0.0
      %1486 = vmatpush1.msra.mxu0 0.0
      %1487 = vmatprep.subr.mxu0 0.0
      %1488 = vmatpush1.msra.mxu0 0.0
      %1489 = vmatprep.subr.mxu0 0.0
      %1490 = vmatpush1.msra.mxu0 0.0
      %1491 = vmatprep.subr.mxu0 0.0
      %1492 = vmatpush1.msra.mxu0 0.0
      %1493 = vmatprep.subr.mxu0 0.0
      %1494 = vmatpush1.msra.mxu0 0.0
      %1495 = vmatprep.subr.mxu0 0.0
      %1496 = vmatpush1.msra.mxu0 0.0
      %1497 = vmatprep.subr.mxu0 0.0
      %1498 = vmatpush1.msra.mxu0 0.0
      %1499 = vmatprep.subr.mxu0 0.0
      %1500 = vmatpush1.msra.mxu0 0.0
      %1501 = vmatprep.subr.mxu0 0.0
      %1502 = vmatpush1.msra.mxu0 0.0
      %1503 = vmatprep.subr.mxu0 0.0
      %1504 = vmatpush1.msra.mxu0 0.0
      %1505 = vmatprep.mubr.f32.mxu0 0.0
      %1506 = vmatmul.mubr.f32.gmra.mrb[0].mxu0 %v1439
      %v1507 = vpop.f32.mrb[0].mxu0
      %v1508 = vadd.f32 %v1437, %v1507
      %v1509 = vpop.f32.mrb[0].mxu0
      %1510 = vdwg.mxu0
      %v1511 = vadd.f32 %v171, %v173
      %v1512 = vadd.f32 %v172, %v174
      %v1513 = vlaneseq
      %v1514 = vshrl.u32 %v1513, 7
      %v1515 = vsub.s32 5, %v1514
      %v1516 = vrot.slane %v215, %v1515
      %v1518 = vsel %vm227, %v1511, 0
      %v1521 = vsel %vm227, %v1512, 0
      %1523 = vmatprep.subr.mxu0 0.0
      %1524 = vmatpush1.msra.mxu0 %v195
      %1525 = vmatprep.subr.mxu0 0.0
      %1526 = vmatpush1.msra.mxu0 %v196
      %1527 = vmatprep.subr.mxu0 0.0
      %1528 = vmatpush1.msra.mxu0 %v197
      %1529 = vmatprep.subr.mxu0 0.0
      %1530 = vmatpush1.msra.mxu0 %v198
      %1531 = vmatprep.subr.mxu0 0.0
      %1532 = vmatpush1.msra.mxu0 0.0
      %1533 = vmatprep.subr.mxu0 0.0
      %1534 = vmatpush1.msra.mxu0 0.0
      %1535 = vmatprep.subr.mxu0 0.0
      %1536 = vmatpush1.msra.mxu0 0.0
      %1537 = vmatprep.subr.mxu0 0.0
      %1538 = vmatpush1.msra.mxu0 0.0
      %1539 = vmatprep.subr.mxu0 0.0
      %1540 = vmatpush1.msra.mxu0 0.0
      %1541 = vmatprep.subr.mxu0 0.0
      %1542 = vmatpush1.msra.mxu0 0.0
      %1543 = vmatprep.subr.mxu0 0.0
      %1544 = vmatpush1.msra.mxu0 0.0
      %1545 = vmatprep.subr.mxu0 0.0
      %1546 = vmatpush1.msra.mxu0 0.0
      %1547 = vmatprep.subr.mxu0 0.0
      %1548 = vmatpush1.msra.mxu0 0.0
      %1549 = vmatprep.subr.mxu0 0.0
      %1550 = vmatpush1.msra.mxu0 0.0
      %1551 = vmatprep.subr.mxu0 0.0
      %1552 = vmatpush1.msra.mxu0 0.0
      %1553 = vmatprep.subr.mxu0 0.0
      %1554 = vmatpush1.msra.mxu0 0.0
      %1555 = vmatprep.subr.mxu0 0.0
      %1556 = vmatpush1.msra.mxu0 0.0
      %1557 = vmatprep.subr.mxu0 0.0
      %1558 = vmatpush1.msra.mxu0 0.0
      %1559 = vmatprep.subr.mxu0 0.0
      %1560 = vmatpush1.msra.mxu0 0.0
      %1561 = vmatprep.subr.mxu0 0.0
      %1562 = vmatpush1.msra.mxu0 0.0
      %1563 = vmatprep.subr.mxu0 0.0
      %1564 = vmatpush1.msra.mxu0 0.0
      %1565 = vmatprep.subr.mxu0 0.0
      %1566 = vmatpush1.msra.mxu0 0.0
      %1567 = vmatprep.subr.mxu0 0.0
      %1568 = vmatpush1.msra.mxu0 0.0
      %1569 = vmatprep.subr.mxu0 0.0
      %1570 = vmatpush1.msra.mxu0 0.0
      %1571 = vmatprep.subr.mxu0 0.0
      %1572 = vmatpush1.msra.mxu0 0.0
      %1573 = vmatprep.subr.mxu0 0.0
      %1574 = vmatpush1.msra.mxu0 0.0
      %1575 = vmatprep.subr.mxu0 0.0
      %1576 = vmatpush1.msra.mxu0 0.0
      %1577 = vmatprep.subr.mxu0 0.0
      %1578 = vmatpush1.msra.mxu0 0.0
      %1579 = vmatprep.subr.mxu0 0.0
      %1580 = vmatpush1.msra.mxu0 0.0
      %1581 = vmatprep.subr.mxu0 0.0
      %1582 = vmatpush1.msra.mxu0 0.0
      %1583 = vmatprep.subr.mxu0 0.0
      %1584 = vmatpush1.msra.mxu0 0.0
      %1585 = vmatprep.subr.mxu0 0.0
      %1586 = vmatpush1.msra.mxu0 0.0
      %1587 = vmatprep.mubr.f32.mxu0 0.0
      %1588 = vmatmul.mubr.f32.gmra.mrb[0].mxu0 %v1518
      %v1589 = vpop.f32.mrb[0].mxu0
      %v1590 = vadd.f32 %v1516, %v1589
      %v1591 = vpop.f32.mrb[0].mxu0
      %1592 = vmatprep.mubr.f32.mxu0 0.0
      %1593 = vmatmul.mubr.f32.gmra.mrb[0].mxu0 %v1521
      %v1594 = vpop.f32.mrb[0].mxu0
      %v1595 = vadd.f32 %v1516, %v1594
      %v1596 = vpop.f32.mrb[0].mxu0
      %1597 = vdwg.mxu0
      %v1598 = vlaneseq
      %v1599 = vshrl.u32 %v1598, 7
      %v1600 = vsub.s32 6, %v1599
      %v1601 = vrot.slane %v215, %v1600
      %v1603 = vsel %vm227, %v171, 0
      %v1606 = vsel %vm227, %v172, 0
      %1608 = vmatprep.subr.mxu0 0.0
      %1609 = vmatpush1.msra.mxu0 %v199
      %1610 = vmatprep.subr.mxu0 0.0
      %1611 = vmatpush1.msra.mxu0 %v200
      %1612 = vmatprep.subr.mxu0 0.0
      %1613 = vmatpush1.msra.mxu0 %v201
      %1614 = vmatprep.subr.mxu0 0.0
      %1615 = vmatpush1.msra.mxu0 %v202
      %1616 = vmatprep.subr.mxu0 0.0
      %1617 = vmatpush1.msra.mxu0 0.0
      %1618 = vmatprep.subr.mxu0 0.0
      %1619 = vmatpush1.msra.mxu0 0.0
      %1620 = vmatprep.subr.mxu0 0.0
      %1621 = vmatpush1.msra.mxu0 0.0
      %1622 = vmatprep.subr.mxu0 0.0
      %1623 = vmatpush1.msra.mxu0 0.0
      %1624 = vmatprep.subr.mxu0 0.0
      %1625 = vmatpush1.msra.mxu0 0.0
      %1626 = vmatprep.subr.mxu0 0.0
      %1627 = vmatpush1.msra.mxu0 0.0
      %1628 = vmatprep.subr.mxu0 0.0
      %1629 = vmatpush1.msra.mxu0 0.0
      %1630 = vmatprep.subr.mxu0 0.0
      %1631 = vmatpush1.msra.mxu0 0.0
      %1632 = vmatprep.subr.mxu0 0.0
      %1633 = vmatpush1.msra.mxu0 0.0
      %1634 = vmatprep.subr.mxu0 0.0
      %1635 = vmatpush1.msra.mxu0 0.0
      %1636 = vmatprep.subr.mxu0 0.0
      %1637 = vmatpush1.msra.mxu0 0.0
      %1638 = vmatprep.subr.mxu0 0.0
      %1639 = vmatpush1.msra.mxu0 0.0
      %1640 = vmatprep.subr.mxu0 0.0
      %1641 = vmatpush1.msra.mxu0 0.0
      %1642 = vmatprep.subr.mxu0 0.0
      %1643 = vmatpush1.msra.mxu0 0.0
      %1644 = vmatprep.subr.mxu0 0.0
      %1645 = vmatpush1.msra.mxu0 0.0
      %1646 = vmatprep.subr.mxu0 0.0
      %1647 = vmatpush1.msra.mxu0 0.0
      %1648 = vmatprep.subr.mxu0 0.0
      %1649 = vmatpush1.msra.mxu0 0.0
      %1650 = vmatprep.subr.mxu0 0.0
      %1651 = vmatpush1.msra.mxu0 0.0
      %1652 = vmatprep.subr.mxu0 0.0
      %1653 = vmatpush1.msra.mxu0 0.0
      %1654 = vmatprep.subr.mxu0 0.0
      %1655 = vmatpush1.msra.mxu0 0.0
      %1656 = vmatprep.subr.mxu0 0.0
      %1657 = vmatpush1.msra.mxu0 0.0
      %1658 = vmatprep.subr.mxu0 0.0
      %1659 = vmatpush1.msra.mxu0 0.0
      %1660 = vmatprep.subr.mxu0 0.0
      %1661 = vmatpush1.msra.mxu0 0.0
      %1662 = vmatprep.subr.mxu0 0.0
      %1663 = vmatpush1.msra.mxu0 0.0
      %1664 = vmatprep.subr.mxu0 0.0
      %1665 = vmatpush1.msra.mxu0 0.0
      %1666 = vmatprep.subr.mxu0 0.0
      %1667 = vmatpush1.msra.mxu0 0.0
      %1668 = vmatprep.subr.mxu0 0.0
      %1669 = vmatpush1.msra.mxu0 0.0
      %1670 = vmatprep.subr.mxu0 0.0
      %1671 = vmatpush1.msra.mxu0 0.0
      %1672 = vmatprep.mubr.f32.mxu0 0.0
      %1673 = vmatmul.mubr.f32.gmra.mrb[0].mxu0 %v1603
      %v1674 = vpop.f32.mrb[0].mxu0
      %v1675 = vadd.f32 %v1601, %v1674
      %v1676 = vpop.f32.mrb[0].mxu0
      %1677 = vmatprep.mubr.f32.mxu0 0.0
      %1678 = vmatmul.mubr.f32.gmra.mrb[0].mxu0 %v1606
      %v1679 = vpop.f32.mrb[0].mxu0
      %v1680 = vadd.f32 %v1601, %v1679
      %v1681 = vpop.f32.mrb[0].mxu0
      %1682 = vdwg.mxu0
      %v1683 = vmul.f32 %v1508, 0.35355338
      %v1685 = vsel %vm453, %v1683, 0
      %v1688 = vsel %vm453, %v1590, 0
      %v1691 = vsel %vm453, %v1595, 0
      %1693 = vmatprep.subr.mxu0 0.0
      %1694 = vmatpush1.xpose.msra.mxu0 %v1688
      %1695 = vmatprep.subr.mxu0 0.0
      %1696 = vmatpush1.xpose.msra.mxu0 %v1691
      %1697 = vmatprep.subr.mxu0 0.0
      %1698 = vmatpush1.xpose.msra.mxu0 0.0
      %1699 = vmatprep.subr.mxu0 0.0
      %1700 = vmatpush1.xpose.msra.mxu0 0.0
      %1701 = vmatprep.subr.mxu0 0.0
      %1702 = vmatpush1.xpose.msra.mxu0 0.0
      %1703 = vmatprep.subr.mxu0 0.0
      %1704 = vmatpush1.xpose.msra.mxu0 0.0
      %1705 = vmatprep.subr.mxu0 0.0
      %1706 = vmatpush1.xpose.msra.mxu0 0.0
      %1707 = vmatprep.subr.mxu0 0.0
      %1708 = vmatpush1.xpose.msra.mxu0 0.0
      %1709 = vmatprep.subr.mxu0 0.0
      %1710 = vmatpush1.xpose.msra.mxu0 0.0
      %1711 = vmatprep.subr.mxu0 0.0
      %1712 = vmatpush1.xpose.msra.mxu0 0.0
      %1713 = vmatprep.subr.mxu0 0.0
      %1714 = vmatpush1.xpose.msra.mxu0 0.0
      %1715 = vmatprep.subr.mxu0 0.0
      %1716 = vmatpush1.xpose.msra.mxu0 0.0
      %1717 = vmatprep.subr.mxu0 0.0
      %1718 = vmatpush1.xpose.msra.mxu0 0.0
      %1719 = vmatprep.subr.mxu0 0.0
      %1720 = vmatpush1.xpose.msra.mxu0 0.0
      %1721 = vmatprep.subr.mxu0 0.0
      %1722 = vmatpush1.xpose.msra.mxu0 0.0
      %1723 = vmatprep.subr.mxu0 0.0
      %1724 = vmatpush1.xpose.msra.mxu0 0.0
      %1725 = vmatprep.subr.mxu0 0.0
      %1726 = vmatpush1.xpose.msra.mxu0 0.0
      %1727 = vmatprep.subr.mxu0 0.0
      %1728 = vmatpush1.xpose.msra.mxu0 0.0
      %1729 = vmatprep.subr.mxu0 0.0
      %1730 = vmatpush1.xpose.msra.mxu0 0.0
      %1731 = vmatprep.subr.mxu0 0.0
      %1732 = vmatpush1.xpose.msra.mxu0 0.0
      %1733 = vmatprep.subr.mxu0 0.0
      %1734 = vmatpush1.xpose.msra.mxu0 0.0
      %1735 = vmatprep.subr.mxu0 0.0
      %1736 = vmatpush1.xpose.msra.mxu0 0.0
      %1737 = vmatprep.subr.mxu0 0.0
      %1738 = vmatpush1.xpose.msra.mxu0 0.0
      %1739 = vmatprep.subr.mxu0 0.0
      %1740 = vmatpush1.xpose.msra.mxu0 0.0
      %1741 = vmatprep.subr.mxu0 0.0
      %1742 = vmatpush1.xpose.msra.mxu0 0.0
      %1743 = vmatprep.subr.mxu0 0.0
      %1744 = vmatpush1.xpose.msra.mxu0 0.0
      %1745 = vmatprep.subr.mxu0 0.0
      %1746 = vmatpush1.xpose.msra.mxu0 0.0
      %1747 = vmatprep.subr.mxu0 0.0
      %1748 = vmatpush1.xpose.msra.mxu0 0.0
      %1749 = vmatprep.subr.mxu0 0.0
      %1750 = vmatpush1.xpose.msra.mxu0 0.0
      %1751 = vmatprep.subr.mxu0 0.0
      %1752 = vmatpush1.xpose.msra.mxu0 0.0
      %1753 = vmatprep.subr.mxu0 0.0
      %1754 = vmatpush1.xpose.msra.mxu0 0.0
      %1755 = vmatprep.subr.mxu0 0.0
      %1756 = vmatpush1.xpose.msra.mxu0 0.0
      %1757 = vmatprep.mubr.f32.mxu0 0.0
      %1758 = vmatmul.mubr.f32.gmra.mrb[0].mxu0 %v1685
      %v1759 = vpop.f32.mrb[0].mxu0
      %v1760 = vadd.f32 0.0, %v1759
      %v1761 = vpop.f32.mrb[0].mxu0
      %1762 = vdwg.mxu0
      %vm1763 = vcmask 130048
      %v1764 = vsel %vm1763, %v1760, -inf
      %1765 = vmax.xlane.f32.xlu0 %v1764
      %v1766 = vpop.xlane.xlu0 %1765
      %v1767 = vsub.f32 %v1760, %v1766
      %v1768 = vmul.f32 %v1767, 1.442695
      %v1769 = vpow.pop %v1768
      %v1770 = vsel %vm1763, %v1769, 0.0
      %1771 = vadd.xlane.f32.xlu0 %v1770
      %v1772 = vpop.xlane.xlu0 %1771
      %v1773 = vrcp.pop %v1772
      %v1774 = vmul.f32 %v1769, %v1773
      %v1776 = vsel %vm1763, %v1774, 0
      %1778 = vmatprep.subr.mxu0 0.0
      %1779 = vmatpush1.msra.mxu0 %v1675
      %1780 = vmatprep.subr.mxu0 0.0
      %1781 = vmatpush1.msra.mxu0 %v1680
      %1782 = vmatprep.subr.mxu0 0.0
      %1783 = vmatpush1.msra.mxu0 0.0
      %1784 = vmatprep.subr.mxu0 0.0
      %1785 = vmatpush1.msra.mxu0 0.0
      %1786 = vmatprep.subr.mxu0 0.0
      %1787 = vmatpush1.msra.mxu0 0.0
      %1788 = vmatprep.subr.mxu0 0.0
      %1789 = vmatpush1.msra.mxu0 0.0
      %1790 = vmatprep.subr.mxu0 0.0
      %1791 = vmatpush1.msra.mxu0 0.0
      %1792 = vmatprep.subr.mxu0 0.0
      %1793 = vmatpush1.msra.mxu0 0.0
      %1794 = vmatprep.subr.mxu0 0.0
      %1795 = vmatpush1.msra.mxu0 0.0
      %1796 = vmatprep.subr.mxu0 0.0
      %1797 = vmatpush1.msra.mxu0 0.0
      %1798 = vmatprep.subr.mxu0 0.0
      %1799 = vmatpush1.msra.mxu0 0.0
      %1800 = vmatprep.subr.mxu0 0.0
      %1801 = vmatpush1.msra.mxu0 0.0
      %1802 = vmatprep.subr.mxu0 0.0
      %1803 = vmatpush1.msra.mxu0 0.0
      %1804 = vmatprep.subr.mxu0 0.0
      %1805 = vmatpush1.msra.mxu0 0.0
      %1806 = vmatprep.subr.mxu0 0.0
      %1807 = vmatpush1.msra.mxu0 0.0
      %1808 = vmatprep.subr.mxu0 0.0
      %1809 = vmatpush1.msra.mxu0 0.0
      %1810 = vmatprep.subr.mxu0 0.0
      %1811 = vmatpush1.msra.mxu0 0.0
      %1812 = vmatprep.subr.mxu0 0.0
      %1813 = vmatpush1.msra.mxu0 0.0
      %1814 = vmatprep.subr.mxu0 0.0
      %1815 = vmatpush1.msra.mxu0 0.0
      %1816 = vmatprep.subr.mxu0 0.0
      %1817 = vmatpush1.msra.mxu0 0.0
      %1818 = vmatprep.subr.mxu0 0.0
      %1819 = vmatpush1.msra.mxu0 0.0
      %1820 = vmatprep.subr.mxu0 0.0
      %1821 = vmatpush1.msra.mxu0 0.0
      %1822 = vmatprep.subr.mxu0 0.0
      %1823 = vmatpush1.msra.mxu0 0.0
      %1824 = vmatprep.subr.mxu0 0.0
      %1825 = vmatpush1.msra.mxu0 0.0
      %1826 = vmatprep.subr.mxu0 0.0
      %1827 = vmatpush1.msra.mxu0 0.0
      %1828 = vmatprep.subr.mxu0 0.0
      %1829 = vmatpush1.msra.mxu0 0.0
      %1830 = vmatprep.subr.mxu0 0.0
      %1831 = vmatpush1.msra.mxu0 0.0
      %1832 = vmatprep.subr.mxu0 0.0
      %1833 = vmatpush1.msra.mxu0 0.0
      %1834 = vmatprep.subr.mxu0 0.0
      %1835 = vmatpush1.msra.mxu0 0.0
      %1836 = vmatprep.subr.mxu0 0.0
      %1837 = vmatpush1.msra.mxu0 0.0
      %1838 = vmatprep.subr.mxu0 0.0
      %1839 = vmatpush1.msra.mxu0 0.0
      %1840 = vmatprep.subr.mxu0 0.0
      %1841 = vmatpush1.msra.mxu0 0.0
      %1842 = vmatprep.mubr.f32.mxu0 0.0
      %1843 = vmatmul.mubr.f32.gmra.mrb[0].mxu0 %v1776
      %v1844 = vpop.f32.mrb[0].mxu0
      %v1845 = vadd.f32 0.0, %v1844
      %v1846 = vpop.f32.mrb[0].mxu0
      %1847 = vdwg.mxu0
      %1848 = vrot.lane.b32.xlu0 %v1683, 120
      %v1849 = vpop.permute.xlu0 %1848
      %1850 = vrot.lane.b32.xlu0 %v1590, 120
      %v1851 = vpop.permute.xlu0 %1850
      %1852 = vrot.lane.b32.xlu0 %v1595, 120
      %v1853 = vpop.permute.xlu0 %1852
      %v1854 = vsel %vm453, %v1849, 0
      %v1856 = vsel %vm453, %v1851, 0
      %v1858 = vsel %vm453, %v1853, 0
      %1860 = vmatprep.subr.mxu0 0.0
      %1861 = vmatpush1.xpose.msra.mxu0 %v1856
      %1862 = vmatprep.subr.mxu0 0.0
      %1863 = vmatpush1.xpose.msra.mxu0 %v1858
      %1864 = vmatprep.subr.mxu0 0.0
      %1865 = vmatpush1.xpose.msra.mxu0 0.0
      %1866 = vmatprep.subr.mxu0 0.0
      %1867 = vmatpush1.xpose.msra.mxu0 0.0
      %1868 = vmatprep.subr.mxu0 0.0
      %1869 = vmatpush1.xpose.msra.mxu0 0.0
      %1870 = vmatprep.subr.mxu0 0.0
      %1871 = vmatpush1.xpose.msra.mxu0 0.0
      %1872 = vmatprep.subr.mxu0 0.0
      %1873 = vmatpush1.xpose.msra.mxu0 0.0
      %1874 = vmatprep.subr.mxu0 0.0
      %1875 = vmatpush1.xpose.msra.mxu0 0.0
      %1876 = vmatprep.subr.mxu0 0.0
      %1877 = vmatpush1.xpose.msra.mxu0 0.0
      %1878 = vmatprep.subr.mxu0 0.0
      %1879 = vmatpush1.xpose.msra.mxu0 0.0
      %1880 = vmatprep.subr.mxu0 0.0
      %1881 = vmatpush1.xpose.msra.mxu0 0.0
      %1882 = vmatprep.subr.mxu0 0.0
      %1883 = vmatpush1.xpose.msra.mxu0 0.0
      %1884 = vmatprep.subr.mxu0 0.0
      %1885 = vmatpush1.xpose.msra.mxu0 0.0
      %1886 = vmatprep.subr.mxu0 0.0
      %1887 = vmatpush1.xpose.msra.mxu0 0.0
      %1888 = vmatprep.subr.mxu0 0.0
      %1889 = vmatpush1.xpose.msra.mxu0 0.0
      %1890 = vmatprep.subr.mxu0 0.0
      %1891 = vmatpush1.xpose.msra.mxu0 0.0
      %1892 = vmatprep.subr.mxu0 0.0
      %1893 = vmatpush1.xpose.msra.mxu0 0.0
      %1894 = vmatprep.subr.mxu0 0.0
      %1895 = vmatpush1.xpose.msra.mxu0 0.0
      %1896 = vmatprep.subr.mxu0 0.0
      %1897 = vmatpush1.xpose.msra.mxu0 0.0
      %1898 = vmatprep.subr.mxu0 0.0
      %1899 = vmatpush1.xpose.msra.mxu0 0.0
      %1900 = vmatprep.subr.mxu0 0.0
      %1901 = vmatpush1.xpose.msra.mxu0 0.0
      %1902 = vmatprep.subr.mxu0 0.0
      %1903 = vmatpush1.xpose.msra.mxu0 0.0
      %1904 = vmatprep.subr.mxu0 0.0
      %1905 = vmatpush1.xpose.msra.mxu0 0.0
      %1906 = vmatprep.subr.mxu0 0.0
      %1907 = vmatpush1.xpose.msra.mxu0 0.0
      %1908 = vmatprep.subr.mxu0 0.0
      %1909 = vmatpush1.xpose.msra.mxu0 0.0
      %1910 = vmatprep.subr.mxu0 0.0
      %1911 = vmatpush1.xpose.msra.mxu0 0.0
      %1912 = vmatprep.subr.mxu0 0.0
      %1913 = vmatpush1.xpose.msra.mxu0 0.0
      %1914 = vmatprep.subr.mxu0 0.0
      %1915 = vmatpush1.xpose.msra.mxu0 0.0
      %1916 = vmatprep.subr.mxu0 0.0
      %1917 = vmatpush1.xpose.msra.mxu0 0.0
      %1918 = vmatprep.subr.mxu0 0.0
      %1919 = vmatpush1.xpose.msra.mxu0 0.0
      %1920 = vmatprep.subr.mxu0 0.0
      %1921 = vmatpush1.xpose.msra.mxu0 0.0
      %1922 = vmatprep.subr.mxu0 0.0
      %1923 = vmatpush1.xpose.msra.mxu0 0.0
      %1924 = vmatprep.mubr.f32.mxu0 0.0
      %1925 = vmatmul.mubr.f32.gmra.mrb[0].mxu0 %v1854
      %v1926 = vpop.f32.mrb[0].mxu0
      %v1927 = vadd.f32 0.0, %v1926
      %v1928 = vpop.f32.mrb[0].mxu0
      %1929 = vdwg.mxu0
      %v1930 = vsel %vm1763, %v1927, -inf
      %1931 = vmax.xlane.f32.xlu0 %v1930
      %v1932 = vpop.xlane.xlu0 %1931
      %v1933 = vsub.f32 %v1927, %v1932
      %v1934 = vmul.f32 %v1933, 1.442695
      %v1935 = vpow.pop %v1934
      %v1936 = vsel %vm1763, %v1935, 0.0
      %1937 = vadd.xlane.f32.xlu0 %v1936
      %v1938 = vpop.xlane.xlu0 %1937
      %v1939 = vrcp.pop %v1938
      %v1940 = vmul.f32 %v1935, %v1939
      %1943 = vrot.lane.b32.xlu0 %v1675, 120
      %v1944 = vpop.permute.xlu0 %1943
      %1945 = vrot.lane.b32.xlu0 %v1680, 120
      %v1946 = vpop.permute.xlu0 %1945
      %v1950 = vsel %vm1763, %v1940, 0
      %1952 = vmatprep.subr.mxu0 0.0
      %1953 = vmatpush1.msra.mxu0 %v1944
      %1954 = vmatprep.subr.mxu0 0.0
      %1955 = vmatpush1.msra.mxu0 %v1946
      %1956 = vmatprep.subr.mxu0 0.0
      %1957 = vmatpush1.msra.mxu0 0.0
      %1958 = vmatprep.subr.mxu0 0.0
      %1959 = vmatpush1.msra.mxu0 0.0
      %1960 = vmatprep.subr.mxu0 0.0
      %1961 = vmatpush1.msra.mxu0 0.0
      %1962 = vmatprep.subr.mxu0 0.0
      %1963 = vmatpush1.msra.mxu0 0.0
      %1964 = vmatprep.subr.mxu0 0.0
      %1965 = vmatpush1.msra.mxu0 0.0
      %1966 = vmatprep.subr.mxu0 0.0
      %1967 = vmatpush1.msra.mxu0 0.0
      %1968 = vmatprep.subr.mxu0 0.0
      %1969 = vmatpush1.msra.mxu0 0.0
      %1970 = vmatprep.subr.mxu0 0.0
      %1971 = vmatpush1.msra.mxu0 0.0
      %1972 = vmatprep.subr.mxu0 0.0
      %1973 = vmatpush1.msra.mxu0 0.0
      %1974 = vmatprep.subr.mxu0 0.0
      %1975 = vmatpush1.msra.mxu0 0.0
      %1976 = vmatprep.subr.mxu0 0.0
      %1977 = vmatpush1.msra.mxu0 0.0
      %1978 = vmatprep.subr.mxu0 0.0
      %1979 = vmatpush1.msra.mxu0 0.0
      %1980 = vmatprep.subr.mxu0 0.0
      %1981 = vmatpush1.msra.mxu0 0.0
      %1982 = vmatprep.subr.mxu0 0.0
      %1983 = vmatpush1.msra.mxu0 0.0
      %1984 = vmatprep.subr.mxu0 0.0
      %1985 = vmatpush1.msra.mxu0 0.0
      %1986 = vmatprep.subr.mxu0 0.0
      %1987 = vmatpush1.msra.mxu0 0.0
      %1988 = vmatprep.subr.mxu0 0.0
      %1989 = vmatpush1.msra.mxu0 0.0
      %1990 = vmatprep.subr.mxu0 0.0
      %1991 = vmatpush1.msra.mxu0 0.0
      %1992 = vmatprep.subr.mxu0 0.0
      %1993 = vmatpush1.msra.mxu0 0.0
      %1994 = vmatprep.subr.mxu0 0.0
      %1995 = vmatpush1.msra.mxu0 0.0
      %1996 = vmatprep.subr.mxu0 0.0
      %1997 = vmatpush1.msra.mxu0 0.0
      %1998 = vmatprep.subr.mxu0 0.0
      %1999 = vmatpush1.msra.mxu0 0.0
      %2000 = vmatprep.subr.mxu0 0.0
      %2001 = vmatpush1.msra.mxu0 0.0
      %2002 = vmatprep.subr.mxu0 0.0
      %2003 = vmatpush1.msra.mxu0 0.0
      %2004 = vmatprep.subr.mxu0 0.0
      %2005 = vmatpush1.msra.mxu0 0.0
      %2006 = vmatprep.subr.mxu0 0.0
      %2007 = vmatpush1.msra.mxu0 0.0
      %2008 = vmatprep.subr.mxu0 0.0
      %2009 = vmatpush1.msra.mxu0 0.0
      %2010 = vmatprep.subr.mxu0 0.0
      %2011 = vmatpush1.msra.mxu0 0.0
      %2012 = vmatprep.subr.mxu0 0.0
      %2013 = vmatpush1.msra.mxu0 0.0
      %2014 = vmatprep.subr.mxu0 0.0
      %2015 = vmatpush1.msra.mxu0 0.0
      %2016 = vmatprep.mubr.f32.mxu0 0.0
      %2017 = vmatmul.mubr.f32.gmra.mrb[0].mxu0 %v1950
      %v2018 = vpop.f32.mrb[0].mxu0
      %v2019 = vadd.f32 0.0, %v2018
      %v2020 = vpop.f32.mrb[0].mxu0
      %2021 = vdwg.mxu0
      %v2023 = vsel %vm453, %v2019, 0
      %2025 = vmatprep.subr.mxu0 0.0
      %2026 = vmatpush1.msra.mxu0 %v204
      %2027 = vmatprep.subr.mxu0 0.0
      %2028 = vmatpush1.msra.mxu0 0.0
      %2029 = vmatprep.subr.mxu0 0.0
      %2030 = vmatpush1.msra.mxu0 0.0
      %2031 = vmatprep.subr.mxu0 0.0
      %2032 = vmatpush1.msra.mxu0 0.0
      %2033 = vmatprep.subr.mxu0 0.0
      %2034 = vmatpush1.msra.mxu0 0.0
      %2035 = vmatprep.subr.mxu0 0.0
      %2036 = vmatpush1.msra.mxu0 0.0
      %2037 = vmatprep.subr.mxu0 0.0
      %2038 = vmatpush1.msra.mxu0 0.0
      %2039 = vmatprep.subr.mxu0 0.0
      %2040 = vmatpush1.msra.mxu0 0.0
      %2041 = vmatprep.subr.mxu0 0.0
      %2042 = vmatpush1.msra.mxu0 0.0
      %2043 = vmatprep.subr.mxu0 0.0
      %2044 = vmatpush1.msra.mxu0 0.0
      %2045 = vmatprep.subr.mxu0 0.0
      %2046 = vmatpush1.msra.mxu0 0.0
      %2047 = vmatprep.subr.mxu0 0.0
      %2048 = vmatpush1.msra.mxu0 0.0
      %2049 = vmatprep.subr.mxu0 0.0
      %2050 = vmatpush1.msra.mxu0 0.0
      %2051 = vmatprep.subr.mxu0 0.0
      %2052 = vmatpush1.msra.mxu0 0.0
      %2053 = vmatprep.subr.mxu0 0.0
      %2054 = vmatpush1.msra.mxu0 0.0
      %2055 = vmatprep.subr.mxu0 0.0
      %2056 = vmatpush1.msra.mxu0 0.0
      %2057 = vmatprep.subr.mxu0 0.0
      %2058 = vmatpush1.msra.mxu0 0.0
      %2059 = vmatprep.subr.mxu0 0.0
      %2060 = vmatpush1.msra.mxu0 0.0
      %2061 = vmatprep.subr.mxu0 0.0
      %2062 = vmatpush1.msra.mxu0 0.0
      %2063 = vmatprep.subr.mxu0 0.0
      %2064 = vmatpush1.msra.mxu0 0.0
      %2065 = vmatprep.subr.mxu0 0.0
      %2066 = vmatpush1.msra.mxu0 0.0
      %2067 = vmatprep.subr.mxu0 0.0
      %2068 = vmatpush1.msra.mxu0 0.0
      %2069 = vmatprep.subr.mxu0 0.0
      %2070 = vmatpush1.msra.mxu0 0.0
      %2071 = vmatprep.subr.mxu0 0.0
      %2072 = vmatpush1.msra.mxu0 0.0
      %2073 = vmatprep.subr.mxu0 0.0
      %2074 = vmatpush1.msra.mxu0 0.0
      %2075 = vmatprep.subr.mxu0 0.0
      %2076 = vmatpush1.msra.mxu0 0.0
      %2077 = vmatprep.subr.mxu0 0.0
      %2078 = vmatpush1.msra.mxu0 0.0
      %2079 = vmatprep.subr.mxu0 0.0
      %2080 = vmatpush1.msra.mxu0 0.0
      %2081 = vmatprep.subr.mxu0 0.0
      %2082 = vmatpush1.msra.mxu0 0.0
      %2083 = vmatprep.subr.mxu0 0.0
      %2084 = vmatpush1.msra.mxu0 0.0
      %2085 = vmatprep.subr.mxu0 0.0
      %2086 = vmatpush1.msra.mxu0 0.0
      %2087 = vmatprep.subr.mxu0 0.0
      %2088 = vmatpush1.msra.mxu0 0.0
      %2089 = vmatprep.mubr.f32.mxu0 0.0
      %2090 = vmatmul.mubr.f32.gmra.mrb[0].mxu0 %v2023
      %v2091 = vpop.f32.mrb[0].mxu0
      %v2092 = vadd.f32 0.0, %v2091
      %v2093 = vpop.f32.mrb[0].mxu0
      %2094 = vdwg.mxu0
      %2095 = vrot.lane.b32.xlu0 %v1683, 112
      %v2096 = vpop.permute.xlu0 %2095
      %2097 = vrot.lane.b32.xlu0 %v1590, 112
      %v2098 = vpop.permute.xlu0 %2097
      %2099 = vrot.lane.b32.xlu0 %v1595, 112
      %v2100 = vpop.permute.xlu0 %2099
      %v2101 = vsel %vm453, %v2096, 0
      %v2103 = vsel %vm453, %v2098, 0
      %v2105 = vsel %vm453, %v2100, 0
      %2107 = vmatprep.subr.mxu0 0.0
      %2108 = vmatpush1.xpose.msra.mxu0 %v2103
      %2109 = vmatprep.subr.mxu0 0.0
      %2110 = vmatpush1.xpose.msra.mxu0 %v2105
      %2111 = vmatprep.subr.mxu0 0.0
      %2112 = vmatpush1.xpose.msra.mxu0 0.0
      %2113 = vmatprep.subr.mxu0 0.0
      %2114 = vmatpush1.xpose.msra.mxu0 0.0
      %2115 = vmatprep.subr.mxu0 0.0
      %2116 = vmatpush1.xpose.msra.mxu0 0.0
      %2117 = vmatprep.subr.mxu0 0.0
      %2118 = vmatpush1.xpose.msra.mxu0 0.0
      %2119 = vmatprep.subr.mxu0 0.0
      %2120 = vmatpush1.xpose.msra.mxu0 0.0
      %2121 = vmatprep.subr.mxu0 0.0
      %2122 = vmatpush1.xpose.msra.mxu0 0.0
      %2123 = vmatprep.subr.mxu0 0.0
      %2124 = vmatpush1.xpose.msra.mxu0 0.0
      %2125 = vmatprep.subr.mxu0 0.0
      %2126 = vmatpush1.xpose.msra.mxu0 0.0
      %2127 = vmatprep.subr.mxu0 0.0
      %2128 = vmatpush1.xpose.msra.mxu0 0.0
      %2129 = vmatprep.subr.mxu0 0.0
      %2130 = vmatpush1.xpose.msra.mxu0 0.0
      %2131 = vmatprep.subr.mxu0 0.0
      %2132 = vmatpush1.xpose.msra.mxu0 0.0
      %2133 = vmatprep.subr.mxu0 0.0
      %2134 = vmatpush1.xpose.msra.mxu0 0.0
      %2135 = vmatprep.subr.mxu0 0.0
      %2136 = vmatpush1.xpose.msra.mxu0 0.0
      %2137 = vmatprep.subr.mxu0 0.0
      %2138 = vmatpush1.xpose.msra.mxu0 0.0
      %2139 = vmatprep.subr.mxu0 0.0
      %2140 = vmatpush1.xpose.msra.mxu0 0.0
      %2141 = vmatprep.subr.mxu0 0.0
      %2142 = vmatpush1.xpose.msra.mxu0 0.0
      %2143 = vmatprep.subr.mxu0 0.0
      %2144 = vmatpush1.xpose.msra.mxu0 0.0
      %2145 = vmatprep.subr.mxu0 0.0
      %2146 = vmatpush1.xpose.msra.mxu0 0.0
      %2147 = vmatprep.subr.mxu0 0.0
      %2148 = vmatpush1.xpose.msra.mxu0 0.0
      %2149 = vmatprep.subr.mxu0 0.0
      %2150 = vmatpush1.xpose.msra.mxu0 0.0
      %2151 = vmatprep.subr.mxu0 0.0
      %2152 = vmatpush1.xpose.msra.mxu0 0.0
      %2153 = vmatprep.subr.mxu0 0.0
      %2154 = vmatpush1.xpose.msra.mxu0 0.0
      %2155 = vmatprep.subr.mxu0 0.0
      %2156 = vmatpush1.xpose.msra.mxu0 0.0
      %2157 = vmatprep.subr.mxu0 0.0
      %2158 = vmatpush1.xpose.msra.mxu0 0.0
      %2159 = vmatprep.subr.mxu0 0.0
      %2160 = vmatpush1.xpose.msra.mxu0 0.0
      %2161 = vmatprep.subr.mxu0 0.0
      %2162 = vmatpush1.xpose.msra.mxu0 0.0
      %2163 = vmatprep.subr.mxu0 0.0
      %2164 = vmatpush1.xpose.msra.mxu0 0.0
      %2165 = vmatprep.subr.mxu0 0.0
      %2166 = vmatpush1.xpose.msra.mxu0 0.0
      %2167 = vmatprep.subr.mxu0 0.0
      %2168 = vmatpush1.xpose.msra.mxu0 0.0
      %2169 = vmatprep.subr.mxu0 0.0
      %2170 = vmatpush1.xpose.msra.mxu0 0.0
      %2171 = vmatprep.mubr.f32.mxu0 0.0
      %2172 = vmatmul.mubr.f32.gmra.mrb[0].mxu0 %v2101
      %v2173 = vpop.f32.mrb[0].mxu0
      %v2174 = vadd.f32 0.0, %v2173
      %v2175 = vpop.f32.mrb[0].mxu0
      %2176 = vdwg.mxu0
      %v2177 = vsel %vm1763, %v2174, -inf
      %2178 = vmax.xlane.f32.xlu0 %v2177
      %v2179 = vpop.xlane.xlu0 %2178
      %v2180 = vsub.f32 %v2174, %v2179
      %v2181 = vmul.f32 %v2180, 1.442695
      %v2182 = vpow.pop %v2181
      %v2183 = vsel %vm1763, %v2182, 0.0
      %2184 = vadd.xlane.f32.xlu0 %v2183
      %v2185 = vpop.xlane.xlu0 %2184
      %v2186 = vrcp.pop %v2185
      %v2187 = vmul.f32 %v2182, %v2186
      %2188 = vrot.lane.b32.xlu0 %v1675, 112
      %v2189 = vpop.permute.xlu0 %2188
      %2190 = vrot.lane.b32.xlu0 %v1680, 112
      %v2191 = vpop.permute.xlu0 %2190
      %v2195 = vsel %vm1763, %v2187, 0
      %2197 = vmatprep.subr.mxu0 0.0
      %2198 = vmatpush1.msra.mxu0 %v2189
      %2199 = vmatprep.subr.mxu0 0.0
      %2200 = vmatpush1.msra.mxu0 %v2191
      %2201 = vmatprep.subr.mxu0 0.0
      %2202 = vmatpush1.msra.mxu0 0.0
      %2203 = vmatprep.subr.mxu0 0.0
      %2204 = vmatpush1.msra.mxu0 0.0
      %2205 = vmatprep.subr.mxu0 0.0
      %2206 = vmatpush1.msra.mxu0 0.0
      %2207 = vmatprep.subr.mxu0 0.0
      %2208 = vmatpush1.msra.mxu0 0.0
      %2209 = vmatprep.subr.mxu0 0.0
      %2210 = vmatpush1.msra.mxu0 0.0
      %2211 = vmatprep.subr.mxu0 0.0
      %2212 = vmatpush1.msra.mxu0 0.0
      %2213 = vmatprep.subr.mxu0 0.0
      %2214 = vmatpush1.msra.mxu0 0.0
      %2215 = vmatprep.subr.mxu0 0.0
      %2216 = vmatpush1.msra.mxu0 0.0
      %2217 = vmatprep.subr.mxu0 0.0
      %2218 = vmatpush1.msra.mxu0 0.0
      %2219 = vmatprep.subr.mxu0 0.0
      %2220 = vmatpush1.msra.mxu0 0.0
      %2221 = vmatprep.subr.mxu0 0.0
      %2222 = vmatpush1.msra.mxu0 0.0
      %2223 = vmatprep.subr.mxu0 0.0
      %2224 = vmatpush1.msra.mxu0 0.0
      %2225 = vmatprep.subr.mxu0 0.0
      %2226 = vmatpush1.msra.mxu0 0.0
      %2227 = vmatprep.subr.mxu0 0.0
      %2228 = vmatpush1.msra.mxu0 0.0
      %2229 = vmatprep.subr.mxu0 0.0
      %2230 = vmatpush1.msra.mxu0 0.0
      %2231 = vmatprep.subr.mxu0 0.0
      %2232 = vmatpush1.msra.mxu0 0.0
      %2233 = vmatprep.subr.mxu0 0.0
      %2234 = vmatpush1.msra.mxu0 0.0
      %2235 = vmatprep.subr.mxu0 0.0
      %2236 = vmatpush1.msra.mxu0 0.0
      %2237 = vmatprep.subr.mxu0 0.0
      %2238 = vmatpush1.msra.mxu0 0.0
      %2239 = vmatprep.subr.mxu0 0.0
      %2240 = vmatpush1.msra.mxu0 0.0
      %2241 = vmatprep.subr.mxu0 0.0
      %2242 = vmatpush1.msra.mxu0 0.0
      %2243 = vmatprep.subr.mxu0 0.0
      %2244 = vmatpush1.msra.mxu0 0.0
      %2245 = vmatprep.subr.mxu0 0.0
      %2246 = vmatpush1.msra.mxu0 0.0
      %2247 = vmatprep.subr.mxu0 0.0
      %2248 = vmatpush1.msra.mxu0 0.0
      %2249 = vmatprep.subr.mxu0 0.0
      %2250 = vmatpush1.msra.mxu0 0.0
      %2251 = vmatprep.subr.mxu0 0.0
      %2252 = vmatpush1.msra.mxu0 0.0
      %2253 = vmatprep.subr.mxu0 0.0
      %2254 = vmatpush1.msra.mxu0 0.0
      %2255 = vmatprep.subr.mxu0 0.0
      %2256 = vmatpush1.msra.mxu0 0.0
      %2257 = vmatprep.subr.mxu0 0.0
      %2258 = vmatpush1.msra.mxu0 0.0
      %2259 = vmatprep.subr.mxu0 0.0
      %2260 = vmatpush1.msra.mxu0 0.0
      %2261 = vmatprep.mubr.f32.mxu0 0.0
      %2262 = vmatmul.mubr.f32.gmra.mrb[0].mxu0 %v2195
      %v2263 = vpop.f32.mrb[0].mxu0
      %v2264 = vadd.f32 0.0, %v2263
      %v2265 = vpop.f32.mrb[0].mxu0
      %2266 = vdwg.mxu0
      %2267 = vrot.lane.b32.xlu0 %v1683, 104
      %v2268 = vpop.permute.xlu0 %2267
      %2269 = vrot.lane.b32.xlu0 %v1590, 104
      %v2270 = vpop.permute.xlu0 %2269
      %2271 = vrot.lane.b32.xlu0 %v1595, 104
      %v2272 = vpop.permute.xlu0 %2271
      %v2273 = vsel %vm453, %v2268, 0
      %v2275 = vsel %vm453, %v2270, 0
      %v2277 = vsel %vm453, %v2272, 0
      %2279 = vmatprep.subr.mxu0 0.0
      %2280 = vmatpush1.xpose.msra.mxu0 %v2275
      %2281 = vmatprep.subr.mxu0 0.0
      %2282 = vmatpush1.xpose.msra.mxu0 %v2277
      %2283 = vmatprep.subr.mxu0 0.0
      %2284 = vmatpush1.xpose.msra.mxu0 0.0
      %2285 = vmatprep.subr.mxu0 0.0
      %2286 = vmatpush1.xpose.msra.mxu0 0.0
      %2287 = vmatprep.subr.mxu0 0.0
      %2288 = vmatpush1.xpose.msra.mxu0 0.0
      %2289 = vmatprep.subr.mxu0 0.0
      %2290 = vmatpush1.xpose.msra.mxu0 0.0
      %2291 = vmatprep.subr.mxu0 0.0
      %2292 = vmatpush1.xpose.msra.mxu0 0.0
      %2293 = vmatprep.subr.mxu0 0.0
      %2294 = vmatpush1.xpose.msra.mxu0 0.0
      %2295 = vmatprep.subr.mxu0 0.0
      %2296 = vmatpush1.xpose.msra.mxu0 0.0
      %2297 = vmatprep.subr.mxu0 0.0
      %2298 = vmatpush1.xpose.msra.mxu0 0.0
      %2299 = vmatprep.subr.mxu0 0.0
      %2300 = vmatpush1.xpose.msra.mxu0 0.0
      %2301 = vmatprep.subr.mxu0 0.0
      %2302 = vmatpush1.xpose.msra.mxu0 0.0
      %2303 = vmatprep.subr.mxu0 0.0
      %2304 = vmatpush1.xpose.msra.mxu0 0.0
      %2305 = vmatprep.subr.mxu0 0.0
      %2306 = vmatpush1.xpose.msra.mxu0 0.0
      %2307 = vmatprep.subr.mxu0 0.0
      %2308 = vmatpush1.xpose.msra.mxu0 0.0
      %2309 = vmatprep.subr.mxu0 0.0
      %2310 = vmatpush1.xpose.msra.mxu0 0.0
      %2311 = vmatprep.subr.mxu0 0.0
      %2312 = vmatpush1.xpose.msra.mxu0 0.0
      %2313 = vmatprep.subr.mxu0 0.0
      %2314 = vmatpush1.xpose.msra.mxu0 0.0
      %2315 = vmatprep.subr.mxu0 0.0
      %2316 = vmatpush1.xpose.msra.mxu0 0.0
      %2317 = vmatprep.subr.mxu0 0.0
      %2318 = vmatpush1.xpose.msra.mxu0 0.0
      %2319 = vmatprep.subr.mxu0 0.0
      %2320 = vmatpush1.xpose.msra.mxu0 0.0
      %2321 = vmatprep.subr.mxu0 0.0
      %2322 = vmatpush1.xpose.msra.mxu0 0.0
      %2323 = vmatprep.subr.mxu0 0.0
      %2324 = vmatpush1.xpose.msra.mxu0 0.0
      %2325 = vmatprep.subr.mxu0 0.0
      %2326 = vmatpush1.xpose.msra.mxu0 0.0
      %2327 = vmatprep.subr.mxu0 0.0
      %2328 = vmatpush1.xpose.msra.mxu0 0.0
      %2329 = vmatprep.subr.mxu0 0.0
      %2330 = vmatpush1.xpose.msra.mxu0 0.0
      %2331 = vmatprep.subr.mxu0 0.0
      %2332 = vmatpush1.xpose.msra.mxu0 0.0
      %2333 = vmatprep.subr.mxu0 0.0
      %2334 = vmatpush1.xpose.msra.mxu0 0.0
      %2335 = vmatprep.subr.mxu0 0.0
      %2336 = vmatpush1.xpose.msra.mxu0 0.0
      %2337 = vmatprep.subr.mxu0 0.0
      %2338 = vmatpush1.xpose.msra.mxu0 0.0
      %2339 = vmatprep.subr.mxu0 0.0
      %2340 = vmatpush1.xpose.msra.mxu0 0.0
      %2341 = vmatprep.subr.mxu0 0.0
      %2342 = vmatpush1.xpose.msra.mxu0 0.0
      %2343 = vmatprep.mubr.f32.mxu0 0.0
      %2344 = vmatmul.mubr.f32.gmra.mrb[0].mxu0 %v2273
      %v2345 = vpop.f32.mrb[0].mxu0
      %v2346 = vadd.f32 0.0, %v2345
      %v2347 = vpop.f32.mrb[0].mxu0
      %2348 = vdwg.mxu0
      %v2349 = vsel %vm1763, %v2346, -inf
      %2350 = vmax.xlane.f32.xlu0 %v2349
      %v2351 = vpop.xlane.xlu0 %2350
      %v2352 = vsub.f32 %v2346, %v2351
      %v2353 = vmul.f32 %v2352, 1.442695
      %v2354 = vpow.pop %v2353
      %v2355 = vsel %vm1763, %v2354, 0.0
      %2356 = vadd.xlane.f32.xlu0 %v2355
      %v2357 = vpop.xlane.xlu0 %2356
      %v2358 = vrcp.pop %v2357
      %v2359 = vmul.f32 %v2354, %v2358
      %2360 = vrot.lane.b32.xlu0 %v1675, 104
      %v2361 = vpop.permute.xlu0 %2360
      %2362 = vrot.lane.b32.xlu0 %v1680, 104
      %v2363 = vpop.permute.xlu0 %2362
      %v2367 = vsel %vm1763, %v2359, 0
      %2369 = vmatprep.subr.mxu0 0.0
      %2370 = vmatpush1.msra.mxu0 %v2361
      %2371 = vmatprep.subr.mxu0 0.0
      %2372 = vmatpush1.msra.mxu0 %v2363
      %2373 = vmatprep.subr.mxu0 0.0
      %2374 = vmatpush1.msra.mxu0 0.0
      %2375 = vmatprep.subr.mxu0 0.0
      %2376 = vmatpush1.msra.mxu0 0.0
      %2377 = vmatprep.subr.mxu0 0.0
      %2378 = vmatpush1.msra.mxu0 0.0
      %2379 = vmatprep.subr.mxu0 0.0
      %2380 = vmatpush1.msra.mxu0 0.0
      %2381 = vmatprep.subr.mxu0 0.0
      %2382 = vmatpush1.msra.mxu0 0.0
      %2383 = vmatprep.subr.mxu0 0.0
      %2384 = vmatpush1.msra.mxu0 0.0
      %2385 = vmatprep.subr.mxu0 0.0
      %2386 = vmatpush1.msra.mxu0 0.0
      %2387 = vmatprep.subr.mxu0 0.0
      %2388 = vmatpush1.msra.mxu0 0.0
      %2389 = vmatprep.subr.mxu0 0.0
      %2390 = vmatpush1.msra.mxu0 0.0
      %2391 = vmatprep.subr.mxu0 0.0
      %2392 = vmatpush1.msra.mxu0 0.0
      %2393 = vmatprep.subr.mxu0 0.0
      %2394 = vmatpush1.msra.mxu0 0.0
      %2395 = vmatprep.subr.mxu0 0.0
      %2396 = vmatpush1.msra.mxu0 0.0
      %2397 = vmatprep.subr.mxu0 0.0
      %2398 = vmatpush1.msra.mxu0 0.0
      %2399 = vmatprep.subr.mxu0 0.0
      %2400 = vmatpush1.msra.mxu0 0.0
      %2401 = vmatprep.subr.mxu0 0.0
      %2402 = vmatpush1.msra.mxu0 0.0
      %2403 = vmatprep.subr.mxu0 0.0
      %2404 = vmatpush1.msra.mxu0 0.0
      %2405 = vmatprep.subr.mxu0 0.0
      %2406 = vmatpush1.msra.mxu0 0.0
      %2407 = vmatprep.subr.mxu0 0.0
      %2408 = vmatpush1.msra.mxu0 0.0
      %2409 = vmatprep.subr.mxu0 0.0
      %2410 = vmatpush1.msra.mxu0 0.0
      %2411 = vmatprep.subr.mxu0 0.0
      %2412 = vmatpush1.msra.mxu0 0.0
      %2413 = vmatprep.subr.mxu0 0.0
      %2414 = vmatpush1.msra.mxu0 0.0
      %2415 = vmatprep.subr.mxu0 0.0
      %2416 = vmatpush1.msra.mxu0 0.0
      %2417 = vmatprep.subr.mxu0 0.0
      %2418 = vmatpush1.msra.mxu0 0.0
      %2419 = vmatprep.subr.mxu0 0.0
      %2420 = vmatpush1.msra.mxu0 0.0
      %2421 = vmatprep.subr.mxu0 0.0
      %2422 = vmatpush1.msra.mxu0 0.0
      %2423 = vmatprep.subr.mxu0 0.0
      %2424 = vmatpush1.msra.mxu0 0.0
      %2425 = vmatprep.subr.mxu0 0.0
      %2426 = vmatpush1.msra.mxu0 0.0
      %2427 = vmatprep.subr.mxu0 0.0
      %2428 = vmatpush1.msra.mxu0 0.0
      %2429 = vmatprep.subr.mxu0 0.0
      %2430 = vmatpush1.msra.mxu0 0.0
      %2431 = vmatprep.subr.mxu0 0.0
      %2432 = vmatpush1.msra.mxu0 0.0
      %2433 = vmatprep.mubr.f32.mxu0 0.0
      %2434 = vmatmul.mubr.f32.gmra.mrb[0].mxu0 %v2367
      %v2435 = vpop.f32.mrb[0].mxu0
      %v2436 = vadd.f32 0.0, %v2435
      %v2437 = vpop.f32.mrb[0].mxu0
      %2438 = vdwg.mxu0
      %v2440 = vsel %vm453, %v2436, 0
      %2442 = vmatprep.subr.mxu0 0.0
      %2443 = vmatpush1.msra.mxu0 %v206
      %2444 = vmatprep.subr.mxu0 0.0
      %2445 = vmatpush1.msra.mxu0 0.0
      %2446 = vmatprep.subr.mxu0 0.0
      %2447 = vmatpush1.msra.mxu0 0.0
      %2448 = vmatprep.subr.mxu0 0.0
      %2449 = vmatpush1.msra.mxu0 0.0
      %2450 = vmatprep.subr.mxu0 0.0
      %2451 = vmatpush1.msra.mxu0 0.0
      %2452 = vmatprep.subr.mxu0 0.0
      %2453 = vmatpush1.msra.mxu0 0.0
      %2454 = vmatprep.subr.mxu0 0.0
      %2455 = vmatpush1.msra.mxu0 0.0
      %2456 = vmatprep.subr.mxu0 0.0
      %2457 = vmatpush1.msra.mxu0 0.0
      %2458 = vmatprep.subr.mxu0 0.0
      %2459 = vmatpush1.msra.mxu0 0.0
      %2460 = vmatprep.subr.mxu0 0.0
      %2461 = vmatpush1.msra.mxu0 0.0
      %2462 = vmatprep.subr.mxu0 0.0
      %2463 = vmatpush1.msra.mxu0 0.0
      %2464 = vmatprep.subr.mxu0 0.0
      %2465 = vmatpush1.msra.mxu0 0.0
      %2466 = vmatprep.subr.mxu0 0.0
      %2467 = vmatpush1.msra.mxu0 0.0
      %2468 = vmatprep.subr.mxu0 0.0
      %2469 = vmatpush1.msra.mxu0 0.0
      %2470 = vmatprep.subr.mxu0 0.0
      %2471 = vmatpush1.msra.mxu0 0.0
      %2472 = vmatprep.subr.mxu0 0.0
      %2473 = vmatpush1.msra.mxu0 0.0
      %2474 = vmatprep.subr.mxu0 0.0
      %2475 = vmatpush1.msra.mxu0 0.0
      %2476 = vmatprep.subr.mxu0 0.0
      %2477 = vmatpush1.msra.mxu0 0.0
      %2478 = vmatprep.subr.mxu0 0.0
      %2479 = vmatpush1.msra.mxu0 0.0
      %2480 = vmatprep.subr.mxu0 0.0
      %2481 = vmatpush1.msra.mxu0 0.0
      %2482 = vmatprep.subr.mxu0 0.0
      %2483 = vmatpush1.msra.mxu0 0.0
      %2484 = vmatprep.subr.mxu0 0.0
      %2485 = vmatpush1.msra.mxu0 0.0
      %2486 = vmatprep.subr.mxu0 0.0
      %2487 = vmatpush1.msra.mxu0 0.0
      %2488 = vmatprep.subr.mxu0 0.0
      %2489 = vmatpush1.msra.mxu0 0.0
      %2490 = vmatprep.subr.mxu0 0.0
      %2491 = vmatpush1.msra.mxu0 0.0
      %2492 = vmatprep.subr.mxu0 0.0
      %2493 = vmatpush1.msra.mxu0 0.0
      %2494 = vmatprep.subr.mxu0 0.0
      %2495 = vmatpush1.msra.mxu0 0.0
      %2496 = vmatprep.subr.mxu0 0.0
      %2497 = vmatpush1.msra.mxu0 0.0
      %2498 = vmatprep.subr.mxu0 0.0
      %2499 = vmatpush1.msra.mxu0 0.0
      %2500 = vmatprep.subr.mxu0 0.0
      %2501 = vmatpush1.msra.mxu0 0.0
      %2502 = vmatprep.subr.mxu0 0.0
      %2503 = vmatpush1.msra.mxu0 0.0
      %2504 = vmatprep.subr.mxu0 0.0
      %2505 = vmatpush1.msra.mxu0 0.0
      %2506 = vmatprep.mubr.f32.mxu0 0.0
      %2507 = vmatmul.mubr.f32.gmra.mrb[0].mxu0 %v2440
      %v2508 = vpop.f32.mrb[0].mxu0
      %v2509 = vadd.f32 0.0, %v2508
      %v2510 = vpop.f32.mrb[0].mxu0
      %2511 = vdwg.mxu0
      %v2513 = vsel %vm453, %v1845, 0
      %2515 = vmatprep.subr.mxu0 0.0
      %2516 = vmatpush1.msra.mxu0 %v203
      %2517 = vmatprep.subr.mxu0 0.0
      %2518 = vmatpush1.msra.mxu0 0.0
      %2519 = vmatprep.subr.mxu0 0.0
      %2520 = vmatpush1.msra.mxu0 0.0
      %2521 = vmatprep.subr.mxu0 0.0
      %2522 = vmatpush1.msra.mxu0 0.0
      %2523 = vmatprep.subr.mxu0 0.0
      %2524 = vmatpush1.msra.mxu0 0.0
      %2525 = vmatprep.subr.mxu0 0.0
      %2526 = vmatpush1.msra.mxu0 0.0
      %2527 = vmatprep.subr.mxu0 0.0
      %2528 = vmatpush1.msra.mxu0 0.0
      %2529 = vmatprep.subr.mxu0 0.0
      %2530 = vmatpush1.msra.mxu0 0.0
      %2531 = vmatprep.subr.mxu0 0.0
      %2532 = vmatpush1.msra.mxu0 0.0
      %2533 = vmatprep.subr.mxu0 0.0
      %2534 = vmatpush1.msra.mxu0 0.0
      %2535 = vmatprep.subr.mxu0 0.0
      %2536 = vmatpush1.msra.mxu0 0.0
      %2537 = vmatprep.subr.mxu0 0.0
      %2538 = vmatpush1.msra.mxu0 0.0
      %2539 = vmatprep.subr.mxu0 0.0
      %2540 = vmatpush1.msra.mxu0 0.0
      %2541 = vmatprep.subr.mxu0 0.0
      %2542 = vmatpush1.msra.mxu0 0.0
      %2543 = vmatprep.subr.mxu0 0.0
      %2544 = vmatpush1.msra.mxu0 0.0
      %2545 = vmatprep.subr.mxu0 0.0
      %2546 = vmatpush1.msra.mxu0 0.0
      %2547 = vmatprep.subr.mxu0 0.0
      %2548 = vmatpush1.msra.mxu0 0.0
      %2549 = vmatprep.subr.mxu0 0.0
      %2550 = vmatpush1.msra.mxu0 0.0
      %2551 = vmatprep.subr.mxu0 0.0
      %2552 = vmatpush1.msra.mxu0 0.0
      %2553 = vmatprep.subr.mxu0 0.0
      %2554 = vmatpush1.msra.mxu0 0.0
      %2555 = vmatprep.subr.mxu0 0.0
      %2556 = vmatpush1.msra.mxu0 0.0
      %2557 = vmatprep.subr.mxu0 0.0
      %2558 = vmatpush1.msra.mxu0 0.0
      %2559 = vmatprep.subr.mxu0 0.0
      %2560 = vmatpush1.msra.mxu0 0.0
      %2561 = vmatprep.subr.mxu0 0.0
      %2562 = vmatpush1.msra.mxu0 0.0
      %2563 = vmatprep.subr.mxu0 0.0
      %2564 = vmatpush1.msra.mxu0 0.0
      %2565 = vmatprep.subr.mxu0 0.0
      %2566 = vmatpush1.msra.mxu0 0.0
      %2567 = vmatprep.subr.mxu0 0.0
      %2568 = vmatpush1.msra.mxu0 0.0
      %2569 = vmatprep.subr.mxu0 0.0
      %2570 = vmatpush1.msra.mxu0 0.0
      %2571 = vmatprep.subr.mxu0 0.0
      %2572 = vmatpush1.msra.mxu0 0.0
      %2573 = vmatprep.subr.mxu0 0.0
      %2574 = vmatpush1.msra.mxu0 0.0
      %2575 = vmatprep.subr.mxu0 0.0
      %2576 = vmatpush1.msra.mxu0 0.0
      %2577 = vmatprep.subr.mxu0 0.0
      %2578 = vmatpush1.msra.mxu0 0.0
      %2579 = vmatprep.mubr.f32.mxu0 0.0
      %2580 = vmatmul.mubr.f32.gmra.mrb[0].mxu0 %v2513
      %v2581 = vpop.f32.mrb[0].mxu0
      %v2582 = vadd.f32 %v2092, %v2581
      %v2583 = vpop.f32.mrb[0].mxu0
      %2584 = vdwg.mxu0
      %v2586 = vsel %vm453, %v2264, 0
      %2588 = vmatprep.subr.mxu0 0.0
      %2589 = vmatpush1.msra.mxu0 %v205
      %2590 = vmatprep.subr.mxu0 0.0
      %2591 = vmatpush1.msra.mxu0 0.0
      %2592 = vmatprep.subr.mxu0 0.0
      %2593 = vmatpush1.msra.mxu0 0.0
      %2594 = vmatprep.subr.mxu0 0.0
      %2595 = vmatpush1.msra.mxu0 0.0
      %2596 = vmatprep.subr.mxu0 0.0
      %2597 = vmatpush1.msra.mxu0 0.0
      %2598 = vmatprep.subr.mxu0 0.0
      %2599 = vmatpush1.msra.mxu0 0.0
      %2600 = vmatprep.subr.mxu0 0.0
      %2601 = vmatpush1.msra.mxu0 0.0
      %2602 = vmatprep.subr.mxu0 0.0
      %2603 = vmatpush1.msra.mxu0 0.0
      %2604 = vmatprep.subr.mxu0 0.0
      %2605 = vmatpush1.msra.mxu0 0.0
      %2606 = vmatprep.subr.mxu0 0.0
      %2607 = vmatpush1.msra.mxu0 0.0
      %2608 = vmatprep.subr.mxu0 0.0
      %2609 = vmatpush1.msra.mxu0 0.0
      %2610 = vmatprep.subr.mxu0 0.0
      %2611 = vmatpush1.msra.mxu0 0.0
      %2612 = vmatprep.subr.mxu0 0.0
      %2613 = vmatpush1.msra.mxu0 0.0
      %2614 = vmatprep.subr.mxu0 0.0
      %2615 = vmatpush1.msra.mxu0 0.0
      %2616 = vmatprep.subr.mxu0 0.0
      %2617 = vmatpush1.msra.mxu0 0.0
      %2618 = vmatprep.subr.mxu0 0.0
      %2619 = vmatpush1.msra.mxu0 0.0
      %2620 = vmatprep.subr.mxu0 0.0
      %2621 = vmatpush1.msra.mxu0 0.0
      %2622 = vmatprep.subr.mxu0 0.0
      %2623 = vmatpush1.msra.mxu0 0.0
      %2624 = vmatprep.subr.mxu0 0.0
      %2625 = vmatpush1.msra.mxu0 0.0
      %2626 = vmatprep.subr.mxu0 0.0
      %2627 = vmatpush1.msra.mxu0 0.0
      %2628 = vmatprep.subr.mxu0 0.0
      %2629 = vmatpush1.msra.mxu0 0.0
      %2630 = vmatprep.subr.mxu0 0.0
      %2631 = vmatpush1.msra.mxu0 0.0
      %2632 = vmatprep.subr.mxu0 0.0
      %2633 = vmatpush1.msra.mxu0 0.0
      %2634 = vmatprep.subr.mxu0 0.0
      %2635 = vmatpush1.msra.mxu0 0.0
      %2636 = vmatprep.subr.mxu0 0.0
      %2637 = vmatpush1.msra.mxu0 0.0
      %2638 = vmatprep.subr.mxu0 0.0
      %2639 = vmatpush1.msra.mxu0 0.0
      %2640 = vmatprep.subr.mxu0 0.0
      %2641 = vmatpush1.msra.mxu0 0.0
      %2642 = vmatprep.subr.mxu0 0.0
      %2643 = vmatpush1.msra.mxu0 0.0
      %2644 = vmatprep.subr.mxu0 0.0
      %2645 = vmatpush1.msra.mxu0 0.0
      %2646 = vmatprep.subr.mxu0 0.0
      %2647 = vmatpush1.msra.mxu0 0.0
      %2648 = vmatprep.subr.mxu0 0.0
      %2649 = vmatpush1.msra.mxu0 0.0
      %2650 = vmatprep.subr.mxu0 0.0
      %2651 = vmatpush1.msra.mxu0 0.0
      %2652 = vmatprep.mubr.f32.mxu0 0.0
      %2653 = vmatmul.mubr.f32.gmra.mrb[0].mxu0 %v2586
      %v2654 = vpop.f32.mrb[0].mxu0
      %v2655 = vadd.f32 %v2509, %v2654
      %v2656 = vpop.f32.mrb[0].mxu0
      %2657 = vdwg.mxu0
      %v2658 = vadd.f32 %v2582, %v2655
      %v2659 = vlaneseq
      %v2660 = vshrl.u32 %v2659, 7
      %v2661 = vsub.s32 7, %v2660
      %v2662 = vrot.slane %v215, %v2661
      %v2663 = vadd.f32 %v2658, %v2662
      %v2664 = vadd.f32 %v1432, %v2663
      %v2665 = vsel %vm227, %v2664, 0.0
      %2666 = vadd.xlane.f32.xlu0 %v2665
      %v2667 = vpop.xlane.xlu0 %2666
      %v2668 = vmul.f32 %v2667, %v1412
      %v2669 = vsub.f32 %v2664, %v2668
      %v2670 = vmul.f32 %v2669, %v2669
      %v2671 = vsel %vm227, %v2670, 0.0
      %2672 = vadd.xlane.f32.xlu0 %v2671
      %v2673 = vpop.xlane.xlu0 %2672
      %v2674 = vmul.f32 %v2673, %v1412
      %v2675 = vadd.f32 %v2674, 1e-05
      %v2676 = vrsqrt.pop %v2675
      %v2677 = vmul.f32 %v2669, %v2676
      %v2678 = vlaneseq
      %v2679 = vshrl.u32 %v2678, 7
      %v2680 = vsub.s32 3, %v2679
      %v2681 = vrot.slane %v216, %v2680
      %v2682 = vmul.f32 %v2677, %v2681
      %v2683 = vlaneseq
      %v2684 = vshrl.u32 %v2683, 7
      %v2685 = vsub.s32 4, %v2684
      %v2686 = vrot.slane %v216, %v2685
      %v2687 = vadd.f32 %v2682, %v2686
      %v2688 = vlaneseq
      %v2689 = vshrl.u32 %v2688, 7
      %v2690 = vsub.s32 0, %v2689
      %v2691 = vrot.slane %v221, %v2690
      %v2693 = vsel %vm227, %v2687, 0
      %2695 = vmatprep.subr.mxu0 0.0
      %2696 = vmatpush1.msra.mxu0 %v217
      %2697 = vmatprep.subr.mxu0 0.0
      %2698 = vmatpush1.msra.mxu0 %v218
      %2699 = vmatprep.subr.mxu0 0.0
      %2700 = vmatpush1.msra.mxu0 %v219
      %2701 = vmatprep.subr.mxu0 0.0
      %2702 = vmatpush1.msra.mxu0 %v220
      %2703 = vmatprep.subr.mxu0 0.0
      %2704 = vmatpush1.msra.mxu0 0.0
      %2705 = vmatprep.subr.mxu0 0.0
      %2706 = vmatpush1.msra.mxu0 0.0
      %2707 = vmatprep.subr.mxu0 0.0
      %2708 = vmatpush1.msra.mxu0 0.0
      %2709 = vmatprep.subr.mxu0 0.0
      %2710 = vmatpush1.msra.mxu0 0.0
      %2711 = vmatprep.subr.mxu0 0.0
      %2712 = vmatpush1.msra.mxu0 0.0
      %2713 = vmatprep.subr.mxu0 0.0
      %2714 = vmatpush1.msra.mxu0 0.0
      %2715 = vmatprep.subr.mxu0 0.0
      %2716 = vmatpush1.msra.mxu0 0.0
      %2717 = vmatprep.subr.mxu0 0.0
      %2718 = vmatpush1.msra.mxu0 0.0
      %2719 = vmatprep.subr.mxu0 0.0
      %2720 = vmatpush1.msra.mxu0 0.0
      %2721 = vmatprep.subr.mxu0 0.0
      %2722 = vmatpush1.msra.mxu0 0.0
      %2723 = vmatprep.subr.mxu0 0.0
      %2724 = vmatpush1.msra.mxu0 0.0
      %2725 = vmatprep.subr.mxu0 0.0
      %2726 = vmatpush1.msra.mxu0 0.0
      %2727 = vmatprep.subr.mxu0 0.0
      %2728 = vmatpush1.msra.mxu0 0.0
      %2729 = vmatprep.subr.mxu0 0.0
      %2730 = vmatpush1.msra.mxu0 0.0
      %2731 = vmatprep.subr.mxu0 0.0
      %2732 = vmatpush1.msra.mxu0 0.0
      %2733 = vmatprep.subr.mxu0 0.0
      %2734 = vmatpush1.msra.mxu0 0.0
      %2735 = vmatprep.subr.mxu0 0.0
      %2736 = vmatpush1.msra.mxu0 0.0
      %2737 = vmatprep.subr.mxu0 0.0
      %2738 = vmatpush1.msra.mxu0 0.0
      %2739 = vmatprep.subr.mxu0 0.0
      %2740 = vmatpush1.msra.mxu0 0.0
      %2741 = vmatprep.subr.mxu0 0.0
      %2742 = vmatpush1.msra.mxu0 0.0
      %2743 = vmatprep.subr.mxu0 0.0
      %2744 = vmatpush1.msra.mxu0 0.0
      %2745 = vmatprep.subr.mxu0 0.0
      %2746 = vmatpush1.msra.mxu0 0.0
      %2747 = vmatprep.subr.mxu0 0.0
      %2748 = vmatpush1.msra.mxu0 0.0
      %2749 = vmatprep.subr.mxu0 0.0
      %2750 = vmatpush1.msra.mxu0 0.0
      %2751 = vmatprep.subr.mxu0 0.0
      %2752 = vmatpush1.msra.mxu0 0.0
      %2753 = vmatprep.subr.mxu0 0.0
      %2754 = vmatpush1.msra.mxu0 0.0
      %2755 = vmatprep.subr.mxu0 0.0
      %2756 = vmatpush1.msra.mxu0 0.0
      %2757 = vmatprep.subr.mxu0 0.0
      %2758 = vmatpush1.msra.mxu0 0.0
      %2759 = vmatprep.mubr.f32.mxu0 0.0
      %2760 = vmatmul.mubr.f32.gmra.mrb[0].mxu0 %v2693
      %v2761 = vpop.f32.mrb[0].mxu0
      %v2762 = vadd.f32 %v2691, %v2761
      %v2763 = vpop.f32.mrb[0].mxu0
      %2764 = vdwg.mxu0
      %v2765 = vmax.f32 %v2762, 0.0
      %v2766 = vlaneseq
      %v2767 = vshrl.u32 %v2766, 7
      %v2768 = vsub.s32 0, %v2767
      %v2769 = vrot.slane %v216, %v2768
      %vm2770 = vcmask 523264
      %v2772 = vsel %vm2770, %v2765, 0
      %2774 = vmatprep.subr.mxu0 0.0
      %2775 = vmatpush1.msra.mxu0 %v207
      %2776 = vmatprep.subr.mxu0 0.0
      %2777 = vmatpush1.msra.mxu0 %v208
      %2778 = vmatprep.subr.mxu0 0.0
      %2779 = vmatpush1.msra.mxu0 %v209
      %2780 = vmatprep.subr.mxu0 0.0
      %2781 = vmatpush1.msra.mxu0 %v210
      %2782 = vmatprep.subr.mxu0 0.0
      %2783 = vmatpush1.msra.mxu0 %v211
      %2784 = vmatprep.subr.mxu0 0.0
      %2785 = vmatpush1.msra.mxu0 %v212
      %2786 = vmatprep.subr.mxu0 0.0
      %2787 = vmatpush1.msra.mxu0 %v213
      %2788 = vmatprep.subr.mxu0 0.0
      %2789 = vmatpush1.msra.mxu0 %v214
      %2790 = vmatprep.subr.mxu0 0.0
      %2791 = vmatpush1.msra.mxu0 0.0
      %2792 = vmatprep.subr.mxu0 0.0
      %2793 = vmatpush1.msra.mxu0 0.0
      %2794 = vmatprep.subr.mxu0 0.0
      %2795 = vmatpush1.msra.mxu0 0.0
      %2796 = vmatprep.subr.mxu0 0.0
      %2797 = vmatpush1.msra.mxu0 0.0
      %2798 = vmatprep.subr.mxu0 0.0
      %2799 = vmatpush1.msra.mxu0 0.0
      %2800 = vmatprep.subr.mxu0 0.0
      %2801 = vmatpush1.msra.mxu0 0.0
      %2802 = vmatprep.subr.mxu0 0.0
      %2803 = vmatpush1.msra.mxu0 0.0
      %2804 = vmatprep.subr.mxu0 0.0
      %2805 = vmatpush1.msra.mxu0 0.0
      %2806 = vmatprep.subr.mxu0 0.0
      %2807 = vmatpush1.msra.mxu0 0.0
      %2808 = vmatprep.subr.mxu0 0.0
      %2809 = vmatpush1.msra.mxu0 0.0
      %2810 = vmatprep.subr.mxu0 0.0
      %2811 = vmatpush1.msra.mxu0 0.0
      %2812 = vmatprep.subr.mxu0 0.0
      %2813 = vmatpush1.msra.mxu0 0.0
      %2814 = vmatprep.subr.mxu0 0.0
      %2815 = vmatpush1.msra.mxu0 0.0
      %2816 = vmatprep.subr.mxu0 0.0
      %2817 = vmatpush1.msra.mxu0 0.0
      %2818 = vmatprep.subr.mxu0 0.0
      %2819 = vmatpush1.msra.mxu0 0.0
      %2820 = vmatprep.subr.mxu0 0.0
      %2821 = vmatpush1.msra.mxu0 0.0
      %2822 = vmatprep.subr.mxu0 0.0
      %2823 = vmatpush1.msra.mxu0 0.0
      %2824 = vmatprep.subr.mxu0 0.0
      %2825 = vmatpush1.msra.mxu0 0.0
      %2826 = vmatprep.subr.mxu0 0.0
      %2827 = vmatpush1.msra.mxu0 0.0
      %2828 = vmatprep.subr.mxu0 0.0
      %2829 = vmatpush1.msra.mxu0 0.0
      %2830 = vmatprep.subr.mxu0 0.0
      %2831 = vmatpush1.msra.mxu0 0.0
      %2832 = vmatprep.subr.mxu0 0.0
      %2833 = vmatpush1.msra.mxu0 0.0
      %2834 = vmatprep.subr.mxu0 0.0
      %2835 = vmatpush1.msra.mxu0 0.0
      %2836 = vmatprep.subr.mxu0 0.0
      %2837 = vmatpush1.msra.mxu0 0.0
      %2838 = vmatprep.mubr.f32.mxu0 0.0
      %2839 = vmatmul.mubr.f32.gmra.mrb[0].mxu0 %v2772
      %v2840 = vpop.f32.mrb[0].mxu0
      %v2841 = vadd.f32 %v2769, %v2840
      %v2842 = vpop.f32.mrb[0].mxu0
      %2843 = vdwg.mxu0
      %v2844 = vadd.f32 %v2687, %v2841
      %v2845 = vsel %vm227, %v2844, 0.0
      %2846 = vadd.xlane.f32.xlu0 %v2845
      %v2847 = vpop.xlane.xlu0 %2846
      %v2848 = vmul.f32 %v2847, %v1412
      %v2849 = vsub.f32 %v2844, %v2848
      %v2850 = vmul.f32 %v2849, %v2849
      %v2851 = vsel %vm227, %v2850, 0.0
      %2852 = vadd.xlane.f32.xlu0 %v2851
      %v2853 = vpop.xlane.xlu0 %2852
      %v2854 = vmul.f32 %v2853, %v1412
      %v2855 = vadd.f32 %v2854, 1e-05
      %v2856 = vrsqrt.pop %v2855
      %v2857 = vmul.f32 %v2849, %v2856
      %v2858 = vlaneseq
      %v2859 = vshrl.u32 %v2858, 7
      %v2860 = vsub.s32 5, %v2859
      %v2861 = vrot.slane %v216, %v2860
      %v2862 = vmul.f32 %v2857, %v2861
      %v2863 = vlaneseq
      %v2864 = vshrl.u32 %v2863, 7
      %v2865 = vsub.s32 6, %v2864
      %v2866 = vrot.slane %v216, %v2865
      %v2867 = vadd.f32 %v2862, %v2866
      %2868 = vst.msk [vmem:[%s168] sm:$0xff] %vm227, %v2867
      %p2869 = scmp.lt.s32.totalorder %s14, 1
      %s2870 = scalar_select %p2869, %s14, 1
      %s2871 = smul.addr %s2870, 8
      %s2872 = scalar_lea.vmem %s3, %s2871
      // Predicated region
      $region33: #{decoder_layer_pallas.1} parent=31 // pred_check
        %p2873 = pneg %p100
      $region34: #{decoder_layer_pallas.1} parent=31 // pred_check_branch
        %2875 = sbr.rel (%p2873) target = $region36
      $region35: #{decoder_layer_pallas.1} parent=31 // pred_region
        _
      $region36: #{decoder_layer_pallas.1} parent=31 // pred_fallthru
        _
    $region32: #{decoder_layer_pallas.1} parent=5 // pred_fallthru
      _
    %p2876 = scmp.le.s32.totalorder 2, %s9
    // Predicated region
    $region37: #{decoder_layer_pallas.1} parent=5 // pred_check
      %p2877 = pneg %p2876
    $region38: #{decoder_layer_pallas.1} parent=5 // pred_check_branch
      %2879 = sbr.rel (%p2877) target = $region40
    $region39: #{decoder_layer_pallas.1} parent=5 // pred_region
      %s2880 = ssub.s32 %s9, 2
      // Predicated region
      $region41: #{decoder_layer_pallas.1} parent=39 // pred_check
        %p2881 = pneg %p106
      $region42: #{decoder_layer_pallas.1} parent=39 // pred_check_branch
        %2883 = sbr.rel (%p2881) target = $region44
      $region43: #{decoder_layer_pallas.1} parent=39 // pred_region
        %p2884 = scmp.lt.s32.totalorder %s15, 1
        %s2885 = scalar_select %p2884, %s15, 1
        %s2886 = smul.addr %s2885, 8
        %s2887 = scalar_lea.vmem %s3, %s2886
      $region44: #{decoder_layer_pallas.1} parent=39 // pred_fallthru
        _
    $region40: #{decoder_layer_pallas.1} parent=5 // pred_fallthru
      _
  $region6: #{decoder_layer_pallas.1} parent=0 // loop_footer
    %s13 = sadd.s32 1, %s9
  $region7: #{decoder_layer_pallas.1} parent=0 // loop_footer_branch
    %8 = sbr.rel target = $region3
  $region8: #{decoder_layer_pallas.1} parent=0 // loop_exit
    _

</llo_original>
